<compile_context>
chip_gen: v7x
topology: tpu7x:2x2x1
jax: 0.10.0
libtpu: 0.0.40
codegen_flags: <defaults>
</compile_context>

<pallas_src>
import jax
import jax.numpy as jnp
from jax.experimental import pallas as pl
from jax.experimental.pallas import tpu as pltpu

IN_FEATURES = 256 * 3 * 3   # 2304 = 18 * 128 -> lane aligned
OUT_FEATURES = 1
MAX_TB = 1024               # batch tile cap: ~18 MiB double-buffered x
LANE = 128


def _round_up(n, m):
    return ((n + m - 1) // m) * m


def clientdisc2_kernel(x_ref, w_ref, b_ref, o_ref):
    # x_ref: (TB, 2304) VMEM   w_ref: (1, 2304) VMEM (grid-resident)
    # b_ref: (1, 1) SMEM       o_ref: (1, TB) VMEM (lane-dense output row)
    prod = x_ref[...] * w_ref[...]                     # VPU broadcast multiply
    logits = jnp.sum(prod, axis=-1, keepdims=True)     # XLU lane reduce -> (TB, 1)
    probs = jax.nn.sigmoid(logits + b_ref[0, 0])       # EUP exp/recip, scalar bias
    # Relayout (TB, 1) -> (1, TB): XLU has ample slack under the x DMA bound.
    o_ref[...] = jnp.reshape(probs, o_ref.shape).astype(o_ref.dtype)


def clientdisc2_forward(x, w, b):
    """x: (B, 256, 3, 3) f32; w: (1, 2304) f32 (PyTorch layout); b: (1, 1) f32.

    Returns sigmoid(flatten(x) @ w.T + b) of shape (B, 1) float32.
    """
    B = x.shape[0]
    x2d = x.reshape(B, -1)            # == torch.nn.Flatten on NCHW (free reshape)
    assert x2d.shape[1] == IN_FEATURES

    # Batch tile: multiple of 128 (keeps the (1, TB) output block lane-legal
    # when grid > 1), aims for >= 2 tiles (v7x megacore), capped at MAX_TB.
    TB = min(MAX_TB, _round_up(pl.cdiv(B, 2), LANE))
    n_tiles = pl.cdiv(B, TB)
    grid = (n_tiles,)

    cost = pl.CostEstimate(
        flops=2 * B * IN_FEATURES,
        transcendentals=B,
        bytes_accessed=B * IN_FEATURES * 4 + IN_FEATURES * 4 + 4 + B * 4,
    )

    out = pl.pallas_call(
        clientdisc2_kernel,
        out_shape=jax.ShapeDtypeStruct((1, n_tiles * TB), jnp.float32),
        grid_spec=pltpu.PrefetchScalarGridSpec(
            num_scalar_prefetch=0,
            grid=grid,
            in_specs=[
                pl.BlockSpec((TB, IN_FEATURES), lambda i: (i, 0)),   # x stream
                pl.BlockSpec((1, IN_FEATURES), lambda i: (0, 0)),    # w resident
                pl.BlockSpec(memory_space=pltpu.MemorySpace.SMEM),   # bias scalar
            ],
            out_specs=pl.BlockSpec((1, TB), lambda i: (0, i)),       # lane-dense
        ),
        compiler_params=pltpu.CompilerParams(
            dimension_semantics=("parallel",),       # split tiles across v7x TCs
            vmem_limit_bytes=32 * 1024 * 1024,       # v5e scoped default is 16 MiB
        ),
        cost_estimate=cost,
    )(x2d, w, b)

    # (1, n_tiles*TB) -> (B, 1); lanes >= B come from unspecified OOB input
    # rows of the partial last tile and are dropped here.
    return out[0, :B].reshape(B, OUT_FEATURES)


def pure_jax_ref(x, w, b):
    x2d = x.reshape(x.shape[0], -1)
    return jax.nn.sigmoid(x2d @ w.T + b)


if __name__ == "__main__":
    key = jax.random.PRNGKey(0)
    k_x, k_w, k_b = jax.random.split(key, 3)

    # Input implied by Linear(256*3*3, 1): x of shape (B, 256, 3, 3)
    B = 2
    x = jax.random.normal(k_x, (B, 256, 3, 3), dtype=jnp.float32)

    # Deterministic params, PyTorch Linear layout: w (out, in) = (1, 2304)
    bound = 1.0 / (IN_FEATURES ** 0.5)
    w = jax.random.uniform(k_w, (OUT_FEATURES, IN_FEATURES),
                           minval=-bound, maxval=bound, dtype=jnp.float32)
    b = jax.random.uniform(k_b, (1, OUT_FEATURES),
                           minval=-bound, maxval=bound, dtype=jnp.float32)

    out = clientdisc2_forward(x, w, b)
    out = jax.block_until_ready(out)

    ref = pure_jax_ref(x, w, b)
    assert out.shape == (B, OUT_FEATURES), out.shape
    assert jnp.allclose(out, ref, atol=1e-5, rtol=1e-5), (out, ref)

    print("KERNEL_OK")
</pallas_src>

<mosaic_0001>
module attributes {stable_mosaic.version = 11 : i64} {
  func.func @clientdisc2_kernel(%arg0: i32, %arg1: memref<128x2304xf32, #tpu.memory_space<vmem>>, %arg2: memref<1x2304xf32, #tpu.memory_space<vmem>>, %arg3: memref<1x1xf32, #tpu.memory_space<smem>>, %arg4: memref<1x128xf32, #tpu.memory_space<vmem>>) attributes {dimension_semantics = [#tpu.dimension_semantics<parallel>], iteration_bounds = array<i64: 1>, scalar_prefetch = 0 : i64, scratch_operands = 0 : i64, tpu.core_type = #tpu.core_type<tc>, window_params = [{transform_indices = @transform_0, window_bounds = array<i64: 128, 2304>}, {pipeline_mode = #tpu.pipeline_mode<synchronous>, transform_indices = @transform_1, window_bounds = array<i64: 1, 2304>}, {transform_indices = @transform_2, window_bounds = array<i64: 1, 1>}, {transform_indices = @transform_3, window_bounds = array<i64: 1, 128>}]} {
    %c0 = arith.constant 0 : index
    %c0_0 = arith.constant 0 : index
    %0 = vector.load %arg1[%c0, %c0_0] : memref<128x2304xf32, #tpu.memory_space<vmem>>, vector<128x2304xf32>
    %c0_1 = arith.constant 0 : index
    %c0_2 = arith.constant 0 : index
    %1 = vector.load %arg2[%c0_1, %c0_2] : memref<1x2304xf32, #tpu.memory_space<vmem>>, vector<1x2304xf32>
    %2 = vector.broadcast %1 : vector<1x2304xf32> to vector<128x2304xf32>
    %3 = arith.mulf %0, %2 : vector<128x2304xf32>
    %cst = arith.constant dense<0.000000e+00> : vector<128xf32>
    %4 = vector.multi_reduction <add>, %3, %cst [1] : vector<128x2304xf32> to vector<128xf32>
    %5 = vector.shape_cast %4 : vector<128xf32> to vector<128x1xf32>
    %c0_3 = arith.constant 0 : index
    %c0_4 = arith.constant 0 : index
    %6 = memref.load %arg3[%c0_3, %c0_4] : memref<1x1xf32, #tpu.memory_space<smem>>
    %7 = vector.broadcast %6 : f32 to vector<128x1xf32>
    %8 = arith.addf %5, %7 : vector<128x1xf32>
    %9 = arith.negf %8 : vector<128x1xf32>
    %10 = math.exp %9 : vector<128x1xf32>
    %cst_5 = arith.constant 1.000000e+00 : f32
    %11 = vector.broadcast %cst_5 : f32 to vector<128x1xf32>
    %12 = arith.addf %11, %10 : vector<128x1xf32>
    %13 = arith.divf %11, %12 : vector<128x1xf32>
    %14 = vector.shape_cast %13 : vector<128x1xf32> to vector<1x128xf32>
    %c0_6 = arith.constant 0 : index
    %c0_7 = arith.constant 0 : index
    %15 = vector.load %arg4[%c0_6, %c0_7] : memref<1x128xf32, #tpu.memory_space<vmem>>, vector<1x128xf32>
    tpu.vector_store %arg4[%c0_6, %c0_7], %14 {strides = array<i32>} : memref<1x128xf32, #tpu.memory_space<vmem>>, vector<1x128xf32>,
    return
  }
  func.func @transform_0(%arg0: i32) -> (i32, i32) {
    %c0_i32 = arith.constant 0 : i32
    %c0_i32_0 = arith.constant 0 : i32
    return %arg0, %c0_i32 : i32, i32
  }
  func.func @transform_1(%arg0: i32) -> (i32, i32) {
    %c0_i32 = arith.constant 0 : i32
    %c0_i32_0 = arith.constant 0 : i32
    %c0_i32_1 = arith.constant 0 : i32
    return %c0_i32, %c0_i32_0 : i32, i32
  }
  func.func @transform_2(%arg0: i32) -> (i32, i32) {
    %c0_i32 = arith.constant 0 : i32
    %c0_i32_0 = arith.constant 0 : i32
    %c0_i32_1 = arith.constant 0 : i32
    return %c0_i32, %c0_i32_0 : i32, i32
  }
  func.func @transform_3(%arg0: i32) -> (i32, i32) {
    %c0_i32 = arith.constant 0 : i32
    %c0_i32_0 = arith.constant 0 : i32
    return %c0_i32, %arg0 : i32, i32
  }
}

</mosaic_0001>

<llo_original>
// kernel: tpu_custom_call.1
$region0: #{tpu_custom_call.1}
  #allocation0 [shape = 'u32[]', space=smem, size = 0x4, offset = 0x4, fixed_abs, tag = 'smem constant byte address 0x4 - core index']
  #allocation1 [shape = 'u32[144,128]{1,0:T(1,128)}', space=vmem, size = 0x12000, scoped, tag = 'internal scratch']
  #allocation2 [shape = 'f32[1,1]{1,0:T(1,128)S(6)}', space=smem, size = 0x200, scoped, tag = 'scoped memory for tpu_custom_call.1']
  %s0 = inlined_call_operand.hbm [shape: f32[2,2304], index: 0, kind: input, shape index: {}]
  %s1 = inlined_call_operand.hbm [shape: f32[1,2304], index: 1, kind: input, shape index: {}]
  %s2 = inlined_call_operand.<no memory space> [shape: f32[1,1], index: 2, kind: input, shape index: {}]
  %s3 = inlined_call_operand.hbm [shape: f32[1,128], index: 3, kind: output, shape index: {}]
  %s4 = sld [smem:[#allocation0]]
  $region30: #{tpu_custom_call.1} parent=0
    _
  %s6 = ssub.s32 1, %s4
  %s7 = scalar_select 0, %s6, %s4
  %8 = sst [smem:[#allocation2]] %s2
  $region1: #{tpu_custom_call.1} parent=0
    #allocation3 [shape = 'u8[1179648]{0}', space=vmem, size = 0x120000, scoped, tag = 'input window, operand 0, single buffered']
    #allocation4 [shape = 's32[1]{0}', space=sflag, size = 0x4, scoped, tag = 'scoped memory for tpu_custom_call.1']
    #allocation5 [shape = 's32[1]{0}', space=sflag, size = 0x4, scoped, tag = 'scoped memory for tpu_custom_call.1']
    #allocation6 [shape = 'u8[9216]{0}', space=vmem, size = 0x2400, scoped, tag = 'input window, operand 1, single buffered']
    #allocation7 [shape = 's32[1]{0}', space=sflag, size = 0x4, scoped, tag = 'scoped memory for tpu_custom_call.1']
    #allocation8 [shape = 'u8[512]{0}', space=vmem, size = 0x400, scoped, tag = 'output window, operand 0, single buffered']
    %9 = vsyncpa [#allocation4], 0
    %10 = vsyncpa [#allocation7], 0
    %11 = vsyncpa [#allocation5], 0
    // Predicated region
    $region2: #{tpu_custom_call.1} parent=1 // pred_check
      _
    $region3: #{tpu_custom_call.1} parent=1 // pred_check_branch
      %13 = sbr.rel (0) target = $region5
    $region4: #{tpu_custom_call.1} parent=1 // pred_region
      %s15 = ssub.s32 36864, 576
      %16 = vsyncadd [#allocation4], %s15
      %s17 = sshll.u32 [#allocation3], 4
      %s18 = int_to_ptr.vmem [resolvable:$true] %s17
      %23 = dma.hbm_to_vmem [thread:$0]  %s0, 576, %s18, [#allocation4], 576, 576, 36
    $region5: #{tpu_custom_call.1} parent=1 // pred_fallthru
      _
    // Predicated region
    $region6: #{tpu_custom_call.1} parent=1 // pred_check
      _
    $region7: #{tpu_custom_call.1} parent=1 // pred_check_branch
      %25 = sbr.rel (0) target = $region9
    $region8: #{tpu_custom_call.1} parent=1 // pred_region
      %s27 = ssub.s32 288, 288
      %28 = vsyncadd [#allocation7], %s27
      %s30 = sshll.u32 [#allocation6], 4
      %s31 = int_to_ptr.vmem [resolvable:$true] %s30
      %33 = dma.hbm_to_vmem [thread:$0]  %s1, 288, %s31, [#allocation7]
    $region9: #{tpu_custom_call.1} parent=1 // pred_fallthru
      _
    // Predicated region
    $region10: #{tpu_custom_call.1} parent=1 // pred_check
      _
    $region11: #{tpu_custom_call.1} parent=1 // pred_check_branch
      %35 = sbr.rel (0) target = $region13
    $region12: #{tpu_custom_call.1} parent=1 // pred_region
      _
    $region13: #{tpu_custom_call.1} parent=1 // pred_fallthru
      _
    // Predicated region
    $region14: #{tpu_custom_call.1} parent=1 // pred_check
      _
    $region15: #{tpu_custom_call.1} parent=1 // pred_check_branch
      %37 = sbr.rel (0) target = $region17
    $region16: #{tpu_custom_call.1} parent=1 // pred_region
      %38 = dma.done [#allocation4], 36864
    $region17: #{tpu_custom_call.1} parent=1 // pred_fallthru
      _
    // Predicated region
    $region18: #{tpu_custom_call.1} parent=1 // pred_check
      _
    $region19: #{tpu_custom_call.1} parent=1 // pred_check_branch
      %40 = sbr.rel (0) target = $region21
    $region20: #{tpu_custom_call.1} parent=1 // pred_region
      %41 = dma.done [#allocation7], 288
    $region21: #{tpu_custom_call.1} parent=1 // pred_fallthru
      _
    %v42 = vld [vmem:[#allocation3] sm:$0xff]
    %v43 = vld [vmem:[#allocation3 + $0x8] sm:$0xff]
    %v44 = vld [vmem:[#allocation3 + $0x10] sm:$0xff]
    %v45 = vld [vmem:[#allocation3 + $0x18] sm:$0xff]
    %v46 = vld [vmem:[#allocation3 + $0x20] sm:$0xf]
    %v47 = vld [vmem:[#allocation3 + $0x24] sm:$0xff]
    %v48 = vld [vmem:[#allocation3 + $0x2c] sm:$0xff]
    %v49 = vld [vmem:[#allocation3 + $0x34] sm:$0xff]
    %v50 = vld [vmem:[#allocation3 + $0x3c] sm:$0xff]
    %v51 = vld [vmem:[#allocation3 + $0x44] sm:$0xf]
    %v52 = vld [vmem:[#allocation3 + $0x48] sm:$0xff]
    %v53 = vld [vmem:[#allocation3 + $0x50] sm:$0xff]
    %v54 = vld [vmem:[#allocation3 + $0x58] sm:$0xff]
    %v55 = vld [vmem:[#allocation3 + $0x60] sm:$0xff]
    %v56 = vld [vmem:[#allocation3 + $0x68] sm:$0xf]
    %v57 = vld [vmem:[#allocation3 + $0x6c] sm:$0xff]
    %v58 = vld [vmem:[#allocation3 + $0x74] sm:$0xff]
    %v59 = vld [vmem:[#allocation3 + $0x7c] sm:$0xff]
    %v60 = vld [vmem:[#allocation3 + $0x84] sm:$0xff]
    %v61 = vld [vmem:[#allocation3 + $0x8c] sm:$0xf]
    %v62 = vld [vmem:[#allocation3 + $0x90] sm:$0xff]
    %v63 = vld [vmem:[#allocation3 + $0x98] sm:$0xff]
    %v64 = vld [vmem:[#allocation3 + $0xa0] sm:$0xff]
    %v65 = vld [vmem:[#allocation3 + $0xa8] sm:$0xff]
    %v66 = vld [vmem:[#allocation3 + $0xb0] sm:$0xf]
    %v67 = vld [vmem:[#allocation3 + $0xb4] sm:$0xff]
    %v68 = vld [vmem:[#allocation3 + $0xbc] sm:$0xff]
    %v69 = vld [vmem:[#allocation3 + $0xc4] sm:$0xff]
    %v70 = vld [vmem:[#allocation3 + $0xcc] sm:$0xff]
    %v71 = vld [vmem:[#allocation3 + $0xd4] sm:$0xf]
    %v72 = vld [vmem:[#allocation3 + $0xd8] sm:$0xff]
    %v73 = vld [vmem:[#allocation3 + $0xe0] sm:$0xff]
    %v74 = vld [vmem:[#allocation3 + $0xe8] sm:$0xff]
    %v75 = vld [vmem:[#allocation3 + $0xf0] sm:$0xff]
    %v76 = vld [vmem:[#allocation3 + $0xf8] sm:$0xf]
    %v77 = vld [vmem:[#allocation3 + $0xfc] sm:$0xff]
    %v78 = vld [vmem:[#allocation3 + $0x104] sm:$0xff]
    %v79 = vld [vmem:[#allocation3 + $0x10c] sm:$0xff]
    %v80 = vld [vmem:[#allocation3 + $0x114] sm:$0xff]
    %v81 = vld [vmem:[#allocation3 + $0x11c] sm:$0xf]
    %v82 = vld [vmem:[#allocation3 + $0x120] sm:$0xff]
    %v83 = vld [vmem:[#allocation3 + $0x128] sm:$0xff]
    %v84 = vld [vmem:[#allocation3 + $0x130] sm:$0xff]
    %v85 = vld [vmem:[#allocation3 + $0x138] sm:$0xff]
    %v86 = vld [vmem:[#allocation3 + $0x140] sm:$0xf]
    %v87 = vld [vmem:[#allocation3 + $0x144] sm:$0xff]
    %v88 = vld [vmem:[#allocation3 + $0x14c] sm:$0xff]
    %v89 = vld [vmem:[#allocation3 + $0x154] sm:$0xff]
    %v90 = vld [vmem:[#allocation3 + $0x15c] sm:$0xff]
    %v91 = vld [vmem:[#allocation3 + $0x164] sm:$0xf]
    %v92 = vld [vmem:[#allocation3 + $0x168] sm:$0xff]
    %v93 = vld [vmem:[#allocation3 + $0x170] sm:$0xff]
    %v94 = vld [vmem:[#allocation3 + $0x178] sm:$0xff]
    %v95 = vld [vmem:[#allocation3 + $0x180] sm:$0xff]
    %v96 = vld [vmem:[#allocation3 + $0x188] sm:$0xf]
    %v97 = vld [vmem:[#allocation3 + $0x18c] sm:$0xff]
    %v98 = vld [vmem:[#allocation3 + $0x194] sm:$0xff]
    %v99 = vld [vmem:[#allocation3 + $0x19c] sm:$0xff]
    %v100 = vld [vmem:[#allocation3 + $0x1a4] sm:$0xff]
    %v101 = vld [vmem:[#allocation3 + $0x1ac] sm:$0xf]
    %v102 = vld [vmem:[#allocation3 + $0x1b0] sm:$0xff]
    %v103 = vld [vmem:[#allocation3 + $0x1b8] sm:$0xff]
    %v104 = vld [vmem:[#allocation3 + $0x1c0] sm:$0xff]
    %v105 = vld [vmem:[#allocation3 + $0x1c8] sm:$0xff]
    %v106 = vld [vmem:[#allocation3 + $0x1d0] sm:$0xf]
    %v107 = vld [vmem:[#allocation3 + $0x1d4] sm:$0xff]
    %v108 = vld [vmem:[#allocation3 + $0x1dc] sm:$0xff]
    %v109 = vld [vmem:[#allocation3 + $0x1e4] sm:$0xff]
    %v110 = vld [vmem:[#allocation3 + $0x1ec] sm:$0xff]
    %v111 = vld [vmem:[#allocation3 + $0x1f4] sm:$0xf]
    %v112 = vld [vmem:[#allocation3 + $0x1f8] sm:$0xff]
    %v113 = vld [vmem:[#allocation3 + $0x200] sm:$0xff]
    %v114 = vld [vmem:[#allocation3 + $0x208] sm:$0xff]
    %v115 = vld [vmem:[#allocation3 + $0x210] sm:$0xff]
    %v116 = vld [vmem:[#allocation3 + $0x218] sm:$0xf]
    %v117 = vld [vmem:[#allocation3 + $0x21c] sm:$0xff]
    %v118 = vld [vmem:[#allocation3 + $0x224] sm:$0xff]
    %v119 = vld [vmem:[#allocation3 + $0x22c] sm:$0xff]
    %v120 = vld [vmem:[#allocation3 + $0x234] sm:$0xff]
    %v121 = vld [vmem:[#allocation3 + $0x23c] sm:$0xf]
    %v122 = vld [vmem:[#allocation3 + $0x240] sm:$0xff]
    %v123 = vld [vmem:[#allocation3 + $0x248] sm:$0xff]
    %v124 = vld [vmem:[#allocation3 + $0x250] sm:$0xff]
    %v125 = vld [vmem:[#allocation3 + $0x258] sm:$0xff]
    %v126 = vld [vmem:[#allocation3 + $0x260] sm:$0xf]
    %v127 = vld [vmem:[#allocation3 + $0x264] sm:$0xff]
    %v128 = vld [vmem:[#allocation3 + $0x26c] sm:$0xff]
    %v129 = vld [vmem:[#allocation3 + $0x274] sm:$0xff]
    %v130 = vld [vmem:[#allocation3 + $0x27c] sm:$0xff]
    %v131 = vld [vmem:[#allocation3 + $0x284] sm:$0xf]
    %v132 = vld [vmem:[#allocation3 + $0x288] sm:$0xff]
    %v133 = vld [vmem:[#allocation3 + $0x290] sm:$0xff]
    %v134 = vld [vmem:[#allocation3 + $0x298] sm:$0xff]
    %v135 = vld [vmem:[#allocation3 + $0x2a0] sm:$0xff]
    %v136 = vld [vmem:[#allocation3 + $0x2a8] sm:$0xf]
    %v137 = vld [vmem:[#allocation3 + $0x2ac] sm:$0xff]
    %v138 = vld [vmem:[#allocation3 + $0x2b4] sm:$0xff]
    %v139 = vld [vmem:[#allocation3 + $0x2bc] sm:$0xff]
    %v140 = vld [vmem:[#allocation3 + $0x2c4] sm:$0xff]
    %v141 = vld [vmem:[#allocation3 + $0x2cc] sm:$0xf]
    %v142 = vld [vmem:[#allocation3 + $0x2d0] sm:$0xff]
    %v143 = vld [vmem:[#allocation3 + $0x2d8] sm:$0xff]
    %v144 = vld [vmem:[#allocation3 + $0x2e0] sm:$0xff]
    %v145 = vld [vmem:[#allocation3 + $0x2e8] sm:$0xff]
    %v146 = vld [vmem:[#allocation3 + $0x2f0] sm:$0xf]
    %v147 = vld [vmem:[#allocation3 + $0x2f4] sm:$0xff]
    %v148 = vld [vmem:[#allocation3 + $0x2fc] sm:$0xff]
    %v149 = vld [vmem:[#allocation3 + $0x304] sm:$0xff]
    %v150 = vld [vmem:[#allocation3 + $0x30c] sm:$0xff]
    %v151 = vld [vmem:[#allocation3 + $0x314] sm:$0xf]
    %v152 = vld [vmem:[#allocation3 + $0x318] sm:$0xff]
    %v153 = vld [vmem:[#allocation3 + $0x320] sm:$0xff]
    %v154 = vld [vmem:[#allocation3 + $0x328] sm:$0xff]
    %v155 = vld [vmem:[#allocation3 + $0x330] sm:$0xff]
    %v156 = vld [vmem:[#allocation3 + $0x338] sm:$0xf]
    %v157 = vld [vmem:[#allocation3 + $0x33c] sm:$0xff]
    %v158 = vld [vmem:[#allocation3 + $0x344] sm:$0xff]
    %v159 = vld [vmem:[#allocation3 + $0x34c] sm:$0xff]
    %v160 = vld [vmem:[#allocation3 + $0x354] sm:$0xff]
    %v161 = vld [vmem:[#allocation3 + $0x35c] sm:$0xf]
    %v162 = vld [vmem:[#allocation3 + $0x360] sm:$0xff]
    %v163 = vld [vmem:[#allocation3 + $0x368] sm:$0xff]
    %v164 = vld [vmem:[#allocation3 + $0x370] sm:$0xff]
    %v165 = vld [vmem:[#allocation3 + $0x378] sm:$0xff]
    %v166 = vld [vmem:[#allocation3 + $0x380] sm:$0xf]
    %v167 = vld [vmem:[#allocation3 + $0x384] sm:$0xff]
    %v168 = vld [vmem:[#allocation3 + $0x38c] sm:$0xff]
    %v169 = vld [vmem:[#allocation3 + $0x394] sm:$0xff]
    %v170 = vld [vmem:[#allocation3 + $0x39c] sm:$0xff]
    %v171 = vld [vmem:[#allocation3 + $0x3a4] sm:$0xf]
    %v172 = vld [vmem:[#allocation3 + $0x3a8] sm:$0xff]
    %v173 = vld [vmem:[#allocation3 + $0x3b0] sm:$0xff]
    %v174 = vld [vmem:[#allocation3 + $0x3b8] sm:$0xff]
    %v175 = vld [vmem:[#allocation3 + $0x3c0] sm:$0xff]
    %v176 = vld [vmem:[#allocation3 + $0x3c8] sm:$0xf]
    %v177 = vld [vmem:[#allocation3 + $0x3cc] sm:$0xff]
    %v178 = vld [vmem:[#allocation3 + $0x3d4] sm:$0xff]
    %v179 = vld [vmem:[#allocation3 + $0x3dc] sm:$0xff]
    %v180 = vld [vmem:[#allocation3 + $0x3e4] sm:$0xff]
    %v181 = vld [vmem:[#allocation3 + $0x3ec] sm:$0xf]
    %v182 = vld [vmem:[#allocation3 + $0x3f0] sm:$0xff]
    %v183 = vld [vmem:[#allocation3 + $0x3f8] sm:$0xff]
    %v184 = vld [vmem:[#allocation3 + $0x400] sm:$0xff]
    %v185 = vld [vmem:[#allocation3 + $0x408] sm:$0xff]
    %v186 = vld [vmem:[#allocation3 + $0x410] sm:$0xf]
    %v187 = vld [vmem:[#allocation3 + $0x414] sm:$0xff]
    %v188 = vld [vmem:[#allocation3 + $0x41c] sm:$0xff]
    %v189 = vld [vmem:[#allocation3 + $0x424] sm:$0xff]
    %v190 = vld [vmem:[#allocation3 + $0x42c] sm:$0xff]
    %v191 = vld [vmem:[#allocation3 + $0x434] sm:$0xf]
    %v192 = vld [vmem:[#allocation3 + $0x438] sm:$0xff]
    %v193 = vld [vmem:[#allocation3 + $0x440] sm:$0xff]
    %v194 = vld [vmem:[#allocation3 + $0x448] sm:$0xff]
    %v195 = vld [vmem:[#allocation3 + $0x450] sm:$0xff]
    %v196 = vld [vmem:[#allocation3 + $0x458] sm:$0xf]
    %v197 = vld [vmem:[#allocation3 + $0x45c] sm:$0xff]
    %v198 = vld [vmem:[#allocation3 + $0x464] sm:$0xff]
    %v199 = vld [vmem:[#allocation3 + $0x46c] sm:$0xff]
    %v200 = vld [vmem:[#allocation3 + $0x474] sm:$0xff]
    %v201 = vld [vmem:[#allocation3 + $0x47c] sm:$0xf]
    %v202 = vld [vmem:[#allocation3 + $0x480] sm:$0xff]
    %v203 = vld [vmem:[#allocation3 + $0x488] sm:$0xff]
    %v204 = vld [vmem:[#allocation3 + $0x490] sm:$0xff]
    %v205 = vld [vmem:[#allocation3 + $0x498] sm:$0xff]
    %v206 = vld [vmem:[#allocation3 + $0x4a0] sm:$0xf]
    %v207 = vld [vmem:[#allocation3 + $0x4a4] sm:$0xff]
    %v208 = vld [vmem:[#allocation3 + $0x4ac] sm:$0xff]
    %v209 = vld [vmem:[#allocation3 + $0x4b4] sm:$0xff]
    %v210 = vld [vmem:[#allocation3 + $0x4bc] sm:$0xff]
    %v211 = vld [vmem:[#allocation3 + $0x4c4] sm:$0xf]
    %v212 = vld [vmem:[#allocation3 + $0x4c8] sm:$0xff]
    %v213 = vld [vmem:[#allocation3 + $0x4d0] sm:$0xff]
    %v214 = vld [vmem:[#allocation3 + $0x4d8] sm:$0xff]
    %v215 = vld [vmem:[#allocation3 + $0x4e0] sm:$0xff]
    %v216 = vld [vmem:[#allocation3 + $0x4e8] sm:$0xf]
    %v217 = vld [vmem:[#allocation3 + $0x4ec] sm:$0xff]
    %v218 = vld [vmem:[#allocation3 + $0x4f4] sm:$0xff]
    %v219 = vld [vmem:[#allocation3 + $0x4fc] sm:$0xff]
    %v220 = vld [vmem:[#allocation3 + $0x504] sm:$0xff]
    %v221 = vld [vmem:[#allocation3 + $0x50c] sm:$0xf]
    %v222 = vld [vmem:[#allocation3 + $0x510] sm:$0xff]
    %v223 = vld [vmem:[#allocation3 + $0x518] sm:$0xff]
    %v224 = vld [vmem:[#allocation3 + $0x520] sm:$0xff]
    %v225 = vld [vmem:[#allocation3 + $0x528] sm:$0xff]
    %v226 = vld [vmem:[#allocation3 + $0x530] sm:$0xf]
    %v227 = vld [vmem:[#allocation3 + $0x534] sm:$0xff]
    %v228 = vld [vmem:[#allocation3 + $0x53c] sm:$0xff]
    %v229 = vld [vmem:[#allocation3 + $0x544] sm:$0xff]
    %v230 = vld [vmem:[#allocation3 + $0x54c] sm:$0xff]
    %v231 = vld [vmem:[#allocation3 + $0x554] sm:$0xf]
    %v232 = vld [vmem:[#allocation3 + $0x558] sm:$0xff]
    %v233 = vld [vmem:[#allocation3 + $0x560] sm:$0xff]
    %v234 = vld [vmem:[#allocation3 + $0x568] sm:$0xff]
    %v235 = vld [vmem:[#allocation3 + $0x570] sm:$0xff]
    %v236 = vld [vmem:[#allocation3 + $0x578] sm:$0xf]
    %v237 = vld [vmem:[#allocation3 + $0x57c] sm:$0xff]
    %v238 = vld [vmem:[#allocation3 + $0x584] sm:$0xff]
    %v239 = vld [vmem:[#allocation3 + $0x58c] sm:$0xff]
    %v240 = vld [vmem:[#allocation3 + $0x594] sm:$0xff]
    %v241 = vld [vmem:[#allocation3 + $0x59c] sm:$0xf]
    %v242 = vld [vmem:[#allocation3 + $0x5a0] sm:$0xff]
    %v243 = vld [vmem:[#allocation3 + $0x5a8] sm:$0xff]
    %v244 = vld [vmem:[#allocation3 + $0x5b0] sm:$0xff]
    %v245 = vld [vmem:[#allocation3 + $0x5b8] sm:$0xff]
    %v246 = vld [vmem:[#allocation3 + $0x5c0] sm:$0xf]
    %v247 = vld [vmem:[#allocation3 + $0x5c4] sm:$0xff]
    %v248 = vld [vmem:[#allocation3 + $0x5cc] sm:$0xff]
    %v249 = vld [vmem:[#allocation3 + $0x5d4] sm:$0xff]
    %v250 = vld [vmem:[#allocation3 + $0x5dc] sm:$0xff]
    %v251 = vld [vmem:[#allocation3 + $0x5e4] sm:$0xf]
    %v252 = vld [vmem:[#allocation3 + $0x5e8] sm:$0xff]
    %v253 = vld [vmem:[#allocation3 + $0x5f0] sm:$0xff]
    %v254 = vld [vmem:[#allocation3 + $0x5f8] sm:$0xff]
    %v255 = vld [vmem:[#allocation3 + $0x600] sm:$0xff]
    %v256 = vld [vmem:[#allocation3 + $0x608] sm:$0xf]
    %v257 = vld [vmem:[#allocation3 + $0x60c] sm:$0xff]
    %v258 = vld [vmem:[#allocation3 + $0x614] sm:$0xff]
    %v259 = vld [vmem:[#allocation3 + $0x61c] sm:$0xff]
    %v260 = vld [vmem:[#allocation3 + $0x624] sm:$0xff]
    %v261 = vld [vmem:[#allocation3 + $0x62c] sm:$0xf]
    %v262 = vld [vmem:[#allocation3 + $0x630] sm:$0xff]
    %v263 = vld [vmem:[#allocation3 + $0x638] sm:$0xff]
    %v264 = vld [vmem:[#allocation3 + $0x640] sm:$0xff]
    %v265 = vld [vmem:[#allocation3 + $0x648] sm:$0xff]
    %v266 = vld [vmem:[#allocation3 + $0x650] sm:$0xf]
    %v267 = vld [vmem:[#allocation3 + $0x654] sm:$0xff]
    %v268 = vld [vmem:[#allocation3 + $0x65c] sm:$0xff]
    %v269 = vld [vmem:[#allocation3 + $0x664] sm:$0xff]
    %v270 = vld [vmem:[#allocation3 + $0x66c] sm:$0xff]
    %v271 = vld [vmem:[#allocation3 + $0x674] sm:$0xf]
    %v272 = vld [vmem:[#allocation3 + $0x678] sm:$0xff]
    %v273 = vld [vmem:[#allocation3 + $0x680] sm:$0xff]
    %v274 = vld [vmem:[#allocation3 + $0x688] sm:$0xff]
    %v275 = vld [vmem:[#allocation3 + $0x690] sm:$0xff]
    %v276 = vld [vmem:[#allocation3 + $0x698] sm:$0xf]
    %v277 = vld [vmem:[#allocation3 + $0x69c] sm:$0xff]
    %v278 = vld [vmem:[#allocation3 + $0x6a4] sm:$0xff]
    %v279 = vld [vmem:[#allocation3 + $0x6ac] sm:$0xff]
    %v280 = vld [vmem:[#allocation3 + $0x6b4] sm:$0xff]
    %v281 = vld [vmem:[#allocation3 + $0x6bc] sm:$0xf]
    %v282 = vld [vmem:[#allocation3 + $0x6c0] sm:$0xff]
    %v283 = vld [vmem:[#allocation3 + $0x6c8] sm:$0xff]
    %v284 = vld [vmem:[#allocation3 + $0x6d0] sm:$0xff]
    %v285 = vld [vmem:[#allocation3 + $0x6d8] sm:$0xff]
    %v286 = vld [vmem:[#allocation3 + $0x6e0] sm:$0xf]
    %v287 = vld [vmem:[#allocation3 + $0x6e4] sm:$0xff]
    %v288 = vld [vmem:[#allocation3 + $0x6ec] sm:$0xff]
    %v289 = vld [vmem:[#allocation3 + $0x6f4] sm:$0xff]
    %v290 = vld [vmem:[#allocation3 + $0x6fc] sm:$0xff]
    %v291 = vld [vmem:[#allocation3 + $0x704] sm:$0xf]
    %v292 = vld [vmem:[#allocation3 + $0x708] sm:$0xff]
    %v293 = vld [vmem:[#allocation3 + $0x710] sm:$0xff]
    %v294 = vld [vmem:[#allocation3 + $0x718] sm:$0xff]
    %v295 = vld [vmem:[#allocation3 + $0x720] sm:$0xff]
    %v296 = vld [vmem:[#allocation3 + $0x728] sm:$0xf]
    %v297 = vld [vmem:[#allocation3 + $0x72c] sm:$0xff]
    %v298 = vld [vmem:[#allocation3 + $0x734] sm:$0xff]
    %v299 = vld [vmem:[#allocation3 + $0x73c] sm:$0xff]
    %v300 = vld [vmem:[#allocation3 + $0x744] sm:$0xff]
    %v301 = vld [vmem:[#allocation3 + $0x74c] sm:$0xf]
    %v302 = vld [vmem:[#allocation3 + $0x750] sm:$0xff]
    %v303 = vld [vmem:[#allocation3 + $0x758] sm:$0xff]
    %v304 = vld [vmem:[#allocation3 + $0x760] sm:$0xff]
    %v305 = vld [vmem:[#allocation3 + $0x768] sm:$0xff]
    %v306 = vld [vmem:[#allocation3 + $0x770] sm:$0xf]
    %v307 = vld [vmem:[#allocation3 + $0x774] sm:$0xff]
    %v308 = vld [vmem:[#allocation3 + $0x77c] sm:$0xff]
    %v309 = vld [vmem:[#allocation3 + $0x784] sm:$0xff]
    %v310 = vld [vmem:[#allocation3 + $0x78c] sm:$0xff]
    %v311 = vld [vmem:[#allocation3 + $0x794] sm:$0xf]
    %v312 = vld [vmem:[#allocation3 + $0x798] sm:$0xff]
    %v313 = vld [vmem:[#allocation3 + $0x7a0] sm:$0xff]
    %v314 = vld [vmem:[#allocation3 + $0x7a8] sm:$0xff]
    %v315 = vld [vmem:[#allocation3 + $0x7b0] sm:$0xff]
    %v316 = vld [vmem:[#allocation3 + $0x7b8] sm:$0xf]
    %v317 = vld [vmem:[#allocation3 + $0x7bc] sm:$0xff]
    %v318 = vld [vmem:[#allocation3 + $0x7c4] sm:$0xff]
    %v319 = vld [vmem:[#allocation3 + $0x7cc] sm:$0xff]
    %v320 = vld [vmem:[#allocation3 + $0x7d4] sm:$0xff]
    %v321 = vld [vmem:[#allocation3 + $0x7dc] sm:$0xf]
    %v322 = vld [vmem:[#allocation3 + $0x7e0] sm:$0xff]
    %v323 = vld [vmem:[#allocation3 + $0x7e8] sm:$0xff]
    %v324 = vld [vmem:[#allocation3 + $0x7f0] sm:$0xff]
    %v325 = vld [vmem:[#allocation3 + $0x7f8] sm:$0xff]
    %v326 = vld [vmem:[#allocation3 + $0x800] sm:$0xf]
    %v327 = vld [vmem:[#allocation3 + $0x804] sm:$0xff]
    %v328 = vld [vmem:[#allocation3 + $0x80c] sm:$0xff]
    %v329 = vld [vmem:[#allocation3 + $0x814] sm:$0xff]
    %v330 = vld [vmem:[#allocation3 + $0x81c] sm:$0xff]
    %v331 = vld [vmem:[#allocation3 + $0x824] sm:$0xf]
    %v332 = vld [vmem:[#allocation3 + $0x828] sm:$0xff]
    %v333 = vld [vmem:[#allocation3 + $0x830] sm:$0xff]
    %v334 = vld [vmem:[#allocation3 + $0x838] sm:$0xff]
    %v335 = vld [vmem:[#allocation3 + $0x840] sm:$0xff]
    %v336 = vld [vmem:[#allocation3 + $0x848] sm:$0xf]
    %v337 = vld [vmem:[#allocation3 + $0x84c] sm:$0xff]
    %v338 = vld [vmem:[#allocation3 + $0x854] sm:$0xff]
    %v339 = vld [vmem:[#allocation3 + $0x85c] sm:$0xff]
    %v340 = vld [vmem:[#allocation3 + $0x864] sm:$0xff]
    %v341 = vld [vmem:[#allocation3 + $0x86c] sm:$0xf]
    %v342 = vld [vmem:[#allocation3 + $0x870] sm:$0xff]
    %v343 = vld [vmem:[#allocation3 + $0x878] sm:$0xff]
    %v344 = vld [vmem:[#allocation3 + $0x880] sm:$0xff]
    %v345 = vld [vmem:[#allocation3 + $0x888] sm:$0xff]
    %v346 = vld [vmem:[#allocation3 + $0x890] sm:$0xf]
    %v347 = vld [vmem:[#allocation3 + $0x894] sm:$0xff]
    %v348 = vld [vmem:[#allocation3 + $0x89c] sm:$0xff]
    %v349 = vld [vmem:[#allocation3 + $0x8a4] sm:$0xff]
    %v350 = vld [vmem:[#allocation3 + $0x8ac] sm:$0xff]
    %v351 = vld [vmem:[#allocation3 + $0x8b4] sm:$0xf]
    %v352 = vld [vmem:[#allocation3 + $0x8b8] sm:$0xff]
    %v353 = vld [vmem:[#allocation3 + $0x8c0] sm:$0xff]
    %v354 = vld [vmem:[#allocation3 + $0x8c8] sm:$0xff]
    %v355 = vld [vmem:[#allocation3 + $0x8d0] sm:$0xff]
    %v356 = vld [vmem:[#allocation3 + $0x8d8] sm:$0xf]
    %v357 = vld [vmem:[#allocation3 + $0x8dc] sm:$0xff]
    %v358 = vld [vmem:[#allocation3 + $0x8e4] sm:$0xff]
    %v359 = vld [vmem:[#allocation3 + $0x8ec] sm:$0xff]
    %v360 = vld [vmem:[#allocation3 + $0x8f4] sm:$0xff]
    %v361 = vld [vmem:[#allocation3 + $0x8fc] sm:$0xf]
    %v362 = vld [vmem:[#allocation6] sm:$0xff]
    %v363 = vld [vmem:[#allocation6 + $0x8] sm:$0xff]
    %v364 = vld [vmem:[#allocation6 + $0x10] sm:$0x3]
    %v368 = vlaneseq
    %v369 = vshrl.u32 %v368, 7
    %v370 = vsub.s32 0, %v369
    %v371 = vrot.slane %v362, %v370
    %v372 = vlaneseq
    %v373 = vshrl.u32 %v372, 7
    %v374 = vsub.s32 1, %v373
    %v375 = vrot.slane %v362, %v374
    %v376 = vlaneseq
    %v377 = vshrl.u32 %v376, 7
    %v378 = vsub.s32 2, %v377
    %v379 = vrot.slane %v362, %v378
    %v380 = vlaneseq
    %v381 = vshrl.u32 %v380, 7
    %v382 = vsub.s32 3, %v381
    %v383 = vrot.slane %v362, %v382
    %v384 = vlaneseq
    %v385 = vshrl.u32 %v384, 7
    %v386 = vsub.s32 4, %v385
    %v387 = vrot.slane %v362, %v386
    %v388 = vlaneseq
    %v389 = vshrl.u32 %v388, 7
    %v390 = vsub.s32 5, %v389
    %v391 = vrot.slane %v362, %v390
    %v392 = vlaneseq
    %v393 = vshrl.u32 %v392, 7
    %v394 = vsub.s32 6, %v393
    %v395 = vrot.slane %v362, %v394
    %v396 = vlaneseq
    %v397 = vshrl.u32 %v396, 7
    %v398 = vsub.s32 7, %v397
    %v399 = vrot.slane %v362, %v398
    %v400 = vlaneseq
    %v401 = vshrl.u32 %v400, 7
    %v402 = vsub.s32 0, %v401
    %v403 = vrot.slane %v363, %v402
    %v404 = vlaneseq
    %v405 = vshrl.u32 %v404, 7
    %v406 = vsub.s32 1, %v405
    %v407 = vrot.slane %v363, %v406
    %v408 = vlaneseq
    %v409 = vshrl.u32 %v408, 7
    %v410 = vsub.s32 2, %v409
    %v411 = vrot.slane %v363, %v410
    %v412 = vlaneseq
    %v413 = vshrl.u32 %v412, 7
    %v414 = vsub.s32 3, %v413
    %v415 = vrot.slane %v363, %v414
    %v416 = vlaneseq
    %v417 = vshrl.u32 %v416, 7
    %v418 = vsub.s32 4, %v417
    %v419 = vrot.slane %v363, %v418
    %v420 = vlaneseq
    %v421 = vshrl.u32 %v420, 7
    %v422 = vsub.s32 5, %v421
    %v423 = vrot.slane %v363, %v422
    %v424 = vlaneseq
    %v425 = vshrl.u32 %v424, 7
    %v426 = vsub.s32 6, %v425
    %v427 = vrot.slane %v363, %v426
    %v428 = vlaneseq
    %v429 = vshrl.u32 %v428, 7
    %v430 = vsub.s32 7, %v429
    %v431 = vrot.slane %v363, %v430
    %v432 = vlaneseq
    %v433 = vshrl.u32 %v432, 7
    %v434 = vsub.s32 0, %v433
    %v435 = vrot.slane %v364, %v434
    %v436 = vlaneseq
    %v437 = vshrl.u32 %v436, 7
    %v438 = vsub.s32 1, %v437
    %v439 = vrot.slane %v364, %v438
    %v440 = vcombine.low %v371, %v375
    %v441 = vcombine.high %v371, %v375
    %v442 = vcombine.low %v379, %v383
    %v443 = vcombine.high %v379, %v383
    %v445 = vunpack.c.l.s4 1983009808
    %v446 = vunpack.c.0.s8 %v445
    %v447 = vlaneseq
    %v448 = vshrl.u32 %v447, 7
    %v449 = vsub.s32 %v446, %v448
    %v450 = vrot.slane %v440, %v449
    %v452 = vunpack.c.l.s4 1983009808
    %v453 = vunpack.c.0.s8 %v452
    %v454 = vlaneseq
    %v455 = vshrl.u32 %v454, 7
    %v456 = vsub.s32 %v453, %v455
    %v457 = vrot.slane %v441, %v456
    %v459 = vunpack.c.l.s4 1983009808
    %v460 = vunpack.c.0.s8 %v459
    %v461 = vlaneseq
    %v462 = vshrl.u32 %v461, 7
    %v463 = vsub.s32 %v460, %v462
    %v464 = vrot.slane %v442, %v463
    %v466 = vunpack.c.l.s4 1983009808
    %v467 = vunpack.c.0.s8 %v466
    %v468 = vlaneseq
    %v469 = vshrl.u32 %v468, 7
    %v470 = vsub.s32 %v467, %v469
    %v471 = vrot.slane %v443, %v470
    %v472 = vcombine.low %v450, %v464
    %v473 = vcombine.high %v450, %v464
    %v474 = vcombine.low %v457, %v471
    %v475 = vcombine.high %v457, %v471
    %v476 = vcombine.low %v387, %v391
    %v477 = vcombine.high %v387, %v391
    %v478 = vcombine.low %v395, %v399
    %v479 = vcombine.high %v395, %v399
    %v481 = vunpack.c.l.s4 1983009808
    %v482 = vunpack.c.0.s8 %v481
    %v483 = vlaneseq
    %v484 = vshrl.u32 %v483, 7
    %v485 = vsub.s32 %v482, %v484
    %v486 = vrot.slane %v476, %v485
    %v488 = vunpack.c.l.s4 1983009808
    %v489 = vunpack.c.0.s8 %v488
    %v490 = vlaneseq
    %v491 = vshrl.u32 %v490, 7
    %v492 = vsub.s32 %v489, %v491
    %v493 = vrot.slane %v477, %v492
    %v495 = vunpack.c.l.s4 1983009808
    %v496 = vunpack.c.0.s8 %v495
    %v497 = vlaneseq
    %v498 = vshrl.u32 %v497, 7
    %v499 = vsub.s32 %v496, %v498
    %v500 = vrot.slane %v478, %v499
    %v502 = vunpack.c.l.s4 1983009808
    %v503 = vunpack.c.0.s8 %v502
    %v504 = vlaneseq
    %v505 = vshrl.u32 %v504, 7
    %v506 = vsub.s32 %v503, %v505
    %v507 = vrot.slane %v479, %v506
    %v508 = vcombine.low %v486, %v500
    %v509 = vcombine.high %v486, %v500
    %v510 = vcombine.low %v493, %v507
    %v511 = vcombine.high %v493, %v507
    %v512 = vcombine.low %v403, %v407
    %v513 = vcombine.high %v403, %v407
    %v514 = vcombine.low %v411, %v415
    %v515 = vcombine.high %v411, %v415
    %v517 = vunpack.c.l.s4 1983009808
    %v518 = vunpack.c.0.s8 %v517
    %v519 = vlaneseq
    %v520 = vshrl.u32 %v519, 7
    %v521 = vsub.s32 %v518, %v520
    %v522 = vrot.slane %v512, %v521
    %v524 = vunpack.c.l.s4 1983009808
    %v525 = vunpack.c.0.s8 %v524
    %v526 = vlaneseq
    %v527 = vshrl.u32 %v526, 7
    %v528 = vsub.s32 %v525, %v527
    %v529 = vrot.slane %v513, %v528
    %v531 = vunpack.c.l.s4 1983009808
    %v532 = vunpack.c.0.s8 %v531
    %v533 = vlaneseq
    %v534 = vshrl.u32 %v533, 7
    %v535 = vsub.s32 %v532, %v534
    %v536 = vrot.slane %v514, %v535
    %v538 = vunpack.c.l.s4 1983009808
    %v539 = vunpack.c.0.s8 %v538
    %v540 = vlaneseq
    %v541 = vshrl.u32 %v540, 7
    %v542 = vsub.s32 %v539, %v541
    %v543 = vrot.slane %v515, %v542
    %v544 = vcombine.low %v522, %v536
    %v545 = vcombine.high %v522, %v536
    %v546 = vcombine.low %v529, %v543
    %v547 = vcombine.high %v529, %v543
    %v548 = vcombine.low %v419, %v423
    %v549 = vcombine.high %v419, %v423
    %v550 = vcombine.low %v427, %v431
    %v551 = vcombine.high %v427, %v431
    %v553 = vunpack.c.l.s4 1983009808
    %v554 = vunpack.c.0.s8 %v553
    %v555 = vlaneseq
    %v556 = vshrl.u32 %v555, 7
    %v557 = vsub.s32 %v554, %v556
    %v558 = vrot.slane %v548, %v557
    %v560 = vunpack.c.l.s4 1983009808
    %v561 = vunpack.c.0.s8 %v560
    %v562 = vlaneseq
    %v563 = vshrl.u32 %v562, 7
    %v564 = vsub.s32 %v561, %v563
    %v565 = vrot.slane %v549, %v564
    %v567 = vunpack.c.l.s4 1983009808
    %v568 = vunpack.c.0.s8 %v567
    %v569 = vlaneseq
    %v570 = vshrl.u32 %v569, 7
    %v571 = vsub.s32 %v568, %v570
    %v572 = vrot.slane %v550, %v571
    %v574 = vunpack.c.l.s4 1983009808
    %v575 = vunpack.c.0.s8 %v574
    %v576 = vlaneseq
    %v577 = vshrl.u32 %v576, 7
    %v578 = vsub.s32 %v575, %v577
    %v579 = vrot.slane %v551, %v578
    %v580 = vcombine.low %v558, %v572
    %v581 = vcombine.high %v558, %v572
    %v582 = vcombine.low %v565, %v579
    %v583 = vcombine.high %v565, %v579
    %v584 = vcombine.low %v435, %v439
    %v585 = vcombine.high %v435, %v439
    %v587 = vunpack.c.l.s4 1983009808
    %v588 = vunpack.c.0.s8 %v587
    %v589 = vlaneseq
    %v590 = vshrl.u32 %v589, 7
    %v591 = vsub.s32 %v588, %v590
    %v592 = vrot.slane %v584, %v591
    %v594 = vunpack.c.l.s4 1983009808
    %v595 = vunpack.c.0.s8 %v594
    %v596 = vlaneseq
    %v597 = vshrl.u32 %v596, 7
    %v598 = vsub.s32 %v595, %v597
    %v599 = vrot.slane %v585, %v598
    %v600 = vcombine.high %v592, %v592
    %v601 = vcombine.high %v599, %v599
    %v622 = vmul.f32 %v42, %v472
    %v623 = vmul.f32 %v43, %v508
    %v624 = vmul.f32 %v44, %v544
    %v625 = vmul.f32 %v45, %v580
    %v626 = vmul.f32 %v46, %v592
    %v627 = vmul.f32 %v47, %v473
    %v628 = vmul.f32 %v48, %v509
    %v629 = vmul.f32 %v49, %v545
    %v630 = vmul.f32 %v50, %v581
    %v631 = vmul.f32 %v51, %v600
    %v632 = vmul.f32 %v52, %v474
    %v633 = vmul.f32 %v53, %v510
    %v634 = vmul.f32 %v54, %v546
    %v635 = vmul.f32 %v55, %v582
    %v636 = vmul.f32 %v56, %v599
    %v637 = vmul.f32 %v57, %v475
    %v638 = vmul.f32 %v58, %v511
    %v639 = vmul.f32 %v59, %v547
    %v640 = vmul.f32 %v60, %v583
    %v641 = vmul.f32 %v61, %v601
    %v642 = vmul.f32 %v62, %v472
    %v643 = vmul.f32 %v63, %v508
    %v644 = vmul.f32 %v64, %v544
    %v645 = vmul.f32 %v65, %v580
    %v646 = vmul.f32 %v66, %v592
    %v647 = vmul.f32 %v67, %v473
    %v648 = vmul.f32 %v68, %v509
    %v649 = vmul.f32 %v69, %v545
    %v650 = vmul.f32 %v70, %v581
    %v651 = vmul.f32 %v71, %v600
    %v652 = vmul.f32 %v72, %v474
    %v653 = vmul.f32 %v73, %v510
    %v654 = vmul.f32 %v74, %v546
    %v655 = vmul.f32 %v75, %v582
    %v656 = vmul.f32 %v76, %v599
    %v657 = vmul.f32 %v77, %v475
    %v658 = vmul.f32 %v78, %v511
    %v659 = vmul.f32 %v79, %v547
    %v660 = vmul.f32 %v80, %v583
    %v661 = vmul.f32 %v81, %v601
    %v662 = vmul.f32 %v82, %v472
    %v663 = vmul.f32 %v83, %v508
    %v664 = vmul.f32 %v84, %v544
    %v665 = vmul.f32 %v85, %v580
    %v666 = vmul.f32 %v86, %v592
    %v667 = vmul.f32 %v87, %v473
    %v668 = vmul.f32 %v88, %v509
    %v669 = vmul.f32 %v89, %v545
    %v670 = vmul.f32 %v90, %v581
    %v671 = vmul.f32 %v91, %v600
    %v672 = vmul.f32 %v92, %v474
    %v673 = vmul.f32 %v93, %v510
    %v674 = vmul.f32 %v94, %v546
    %v675 = vmul.f32 %v95, %v582
    %v676 = vmul.f32 %v96, %v599
    %v677 = vmul.f32 %v97, %v475
    %v678 = vmul.f32 %v98, %v511
    %v679 = vmul.f32 %v99, %v547
    %v680 = vmul.f32 %v100, %v583
    %v681 = vmul.f32 %v101, %v601
    %v682 = vmul.f32 %v102, %v472
    %v683 = vmul.f32 %v103, %v508
    %v684 = vmul.f32 %v104, %v544
    %v685 = vmul.f32 %v105, %v580
    %v686 = vmul.f32 %v106, %v592
    %v687 = vmul.f32 %v107, %v473
    %v688 = vmul.f32 %v108, %v509
    %v689 = vmul.f32 %v109, %v545
    %v690 = vmul.f32 %v110, %v581
    %v691 = vmul.f32 %v111, %v600
    %v692 = vmul.f32 %v112, %v474
    %v693 = vmul.f32 %v113, %v510
    %v694 = vmul.f32 %v114, %v546
    %v695 = vmul.f32 %v115, %v582
    %v696 = vmul.f32 %v116, %v599
    %v697 = vmul.f32 %v117, %v475
    %v698 = vmul.f32 %v118, %v511
    %v699 = vmul.f32 %v119, %v547
    %v700 = vmul.f32 %v120, %v583
    %v701 = vmul.f32 %v121, %v601
    %v702 = vmul.f32 %v122, %v472
    %v703 = vmul.f32 %v123, %v508
    %v704 = vmul.f32 %v124, %v544
    %v705 = vmul.f32 %v125, %v580
    %v706 = vmul.f32 %v126, %v592
    %v707 = vmul.f32 %v127, %v473
    %v708 = vmul.f32 %v128, %v509
    %v709 = vmul.f32 %v129, %v545
    %v710 = vmul.f32 %v130, %v581
    %v711 = vmul.f32 %v131, %v600
    %v712 = vmul.f32 %v132, %v474
    %v713 = vmul.f32 %v133, %v510
    %v714 = vmul.f32 %v134, %v546
    %v715 = vmul.f32 %v135, %v582
    %v716 = vmul.f32 %v136, %v599
    %v717 = vmul.f32 %v137, %v475
    %v718 = vmul.f32 %v138, %v511
    %v719 = vmul.f32 %v139, %v547
    %v720 = vmul.f32 %v140, %v583
    %v721 = vmul.f32 %v141, %v601
    %v722 = vmul.f32 %v142, %v472
    %v723 = vmul.f32 %v143, %v508
    %v724 = vmul.f32 %v144, %v544
    %v725 = vmul.f32 %v145, %v580
    %v726 = vmul.f32 %v146, %v592
    %v727 = vmul.f32 %v147, %v473
    %v728 = vmul.f32 %v148, %v509
    %v729 = vmul.f32 %v149, %v545
    %v730 = vmul.f32 %v150, %v581
    %v731 = vmul.f32 %v151, %v600
    %v732 = vmul.f32 %v152, %v474
    %v733 = vmul.f32 %v153, %v510
    %v734 = vmul.f32 %v154, %v546
    %v735 = vmul.f32 %v155, %v582
    %v736 = vmul.f32 %v156, %v599
    %v737 = vmul.f32 %v157, %v475
    %v738 = vmul.f32 %v158, %v511
    %v739 = vmul.f32 %v159, %v547
    %v740 = vmul.f32 %v160, %v583
    %v741 = vmul.f32 %v161, %v601
    %v742 = vmul.f32 %v162, %v472
    %v743 = vmul.f32 %v163, %v508
    %v744 = vmul.f32 %v164, %v544
    %v745 = vmul.f32 %v165, %v580
    %v746 = vmul.f32 %v166, %v592
    %v747 = vmul.f32 %v167, %v473
    %v748 = vmul.f32 %v168, %v509
    %v749 = vmul.f32 %v169, %v545
    %v750 = vmul.f32 %v170, %v581
    %v751 = vmul.f32 %v171, %v600
    %v752 = vmul.f32 %v172, %v474
    %v753 = vmul.f32 %v173, %v510
    %v754 = vmul.f32 %v174, %v546
    %v755 = vmul.f32 %v175, %v582
    %v756 = vmul.f32 %v176, %v599
    %v757 = vmul.f32 %v177, %v475
    %v758 = vmul.f32 %v178, %v511
    %v759 = vmul.f32 %v179, %v547
    %v760 = vmul.f32 %v180, %v583
    %v761 = vmul.f32 %v181, %v601
    %v762 = vmul.f32 %v182, %v472
    %v763 = vmul.f32 %v183, %v508
    %v764 = vmul.f32 %v184, %v544
    %v765 = vmul.f32 %v185, %v580
    %v766 = vmul.f32 %v186, %v592
    %v767 = vmul.f32 %v187, %v473
    %v768 = vmul.f32 %v188, %v509
    %v769 = vmul.f32 %v189, %v545
    %v770 = vmul.f32 %v190, %v581
    %v771 = vmul.f32 %v191, %v600
    %v772 = vmul.f32 %v192, %v474
    %v773 = vmul.f32 %v193, %v510
    %v774 = vmul.f32 %v194, %v546
    %v775 = vmul.f32 %v195, %v582
    %v776 = vmul.f32 %v196, %v599
    %v777 = vmul.f32 %v197, %v475
    %v778 = vmul.f32 %v198, %v511
    %v779 = vmul.f32 %v199, %v547
    %v780 = vmul.f32 %v200, %v583
    %v781 = vmul.f32 %v201, %v601
    %v782 = vmul.f32 %v202, %v472
    %v783 = vmul.f32 %v203, %v508
    %v784 = vmul.f32 %v204, %v544
    %v785 = vmul.f32 %v205, %v580
    %v786 = vmul.f32 %v206, %v592
    %v787 = vmul.f32 %v207, %v473
    %v788 = vmul.f32 %v208, %v509
    %v789 = vmul.f32 %v209, %v545
    %v790 = vmul.f32 %v210, %v581
    %v791 = vmul.f32 %v211, %v600
    %v792 = vmul.f32 %v212, %v474
    %v793 = vmul.f32 %v213, %v510
    %v794 = vmul.f32 %v214, %v546
    %v795 = vmul.f32 %v215, %v582
    %v796 = vmul.f32 %v216, %v599
    %v797 = vmul.f32 %v217, %v475
    %v798 = vmul.f32 %v218, %v511
    %v799 = vmul.f32 %v219, %v547
    %v800 = vmul.f32 %v220, %v583
    %v801 = vmul.f32 %v221, %v601
    %v802 = vmul.f32 %v222, %v472
    %v803 = vmul.f32 %v223, %v508
    %v804 = vmul.f32 %v224, %v544
    %v805 = vmul.f32 %v225, %v580
    %v806 = vmul.f32 %v226, %v592
    %v807 = vmul.f32 %v227, %v473
    %v808 = vmul.f32 %v228, %v509
    %v809 = vmul.f32 %v229, %v545
    %v810 = vmul.f32 %v230, %v581
    %v811 = vmul.f32 %v231, %v600
    %v812 = vmul.f32 %v232, %v474
    %v813 = vmul.f32 %v233, %v510
    %v814 = vmul.f32 %v234, %v546
    %v815 = vmul.f32 %v235, %v582
    %v816 = vmul.f32 %v236, %v599
    %v817 = vmul.f32 %v237, %v475
    %v818 = vmul.f32 %v238, %v511
    %v819 = vmul.f32 %v239, %v547
    %v820 = vmul.f32 %v240, %v583
    %v821 = vmul.f32 %v241, %v601
    %v822 = vmul.f32 %v242, %v472
    %v823 = vmul.f32 %v243, %v508
    %v824 = vmul.f32 %v244, %v544
    %v825 = vmul.f32 %v245, %v580
    %v826 = vmul.f32 %v246, %v592
    %v827 = vmul.f32 %v247, %v473
    %v828 = vmul.f32 %v248, %v509
    %v829 = vmul.f32 %v249, %v545
    %v830 = vmul.f32 %v250, %v581
    %v831 = vmul.f32 %v251, %v600
    %v832 = vmul.f32 %v252, %v474
    %v833 = vmul.f32 %v253, %v510
    %v834 = vmul.f32 %v254, %v546
    %v835 = vmul.f32 %v255, %v582
    %v836 = vmul.f32 %v256, %v599
    %v837 = vmul.f32 %v257, %v475
    %v838 = vmul.f32 %v258, %v511
    %v839 = vmul.f32 %v259, %v547
    %v840 = vmul.f32 %v260, %v583
    %v841 = vmul.f32 %v261, %v601
    %v842 = vmul.f32 %v262, %v472
    %v843 = vmul.f32 %v263, %v508
    %v844 = vmul.f32 %v264, %v544
    %v845 = vmul.f32 %v265, %v580
    %v846 = vmul.f32 %v266, %v592
    %v847 = vmul.f32 %v267, %v473
    %v848 = vmul.f32 %v268, %v509
    %v849 = vmul.f32 %v269, %v545
    %v850 = vmul.f32 %v270, %v581
    %v851 = vmul.f32 %v271, %v600
    %v852 = vmul.f32 %v272, %v474
    %v853 = vmul.f32 %v273, %v510
    %v854 = vmul.f32 %v274, %v546
    %v855 = vmul.f32 %v275, %v582
    %v856 = vmul.f32 %v276, %v599
    %v857 = vmul.f32 %v277, %v475
    %v858 = vmul.f32 %v278, %v511
    %v859 = vmul.f32 %v279, %v547
    %v860 = vmul.f32 %v280, %v583
    %v861 = vmul.f32 %v281, %v601
    %v862 = vmul.f32 %v282, %v472
    %v863 = vmul.f32 %v283, %v508
    %v864 = vmul.f32 %v284, %v544
    %v865 = vmul.f32 %v285, %v580
    %v866 = vmul.f32 %v286, %v592
    %v867 = vmul.f32 %v287, %v473
    %v868 = vmul.f32 %v288, %v509
    %v869 = vmul.f32 %v289, %v545
    %v870 = vmul.f32 %v290, %v581
    %v871 = vmul.f32 %v291, %v600
    %v872 = vmul.f32 %v292, %v474
    %v873 = vmul.f32 %v293, %v510
    %v874 = vmul.f32 %v294, %v546
    %v875 = vmul.f32 %v295, %v582
    %v876 = vmul.f32 %v296, %v599
    %v877 = vmul.f32 %v297, %v475
    %v878 = vmul.f32 %v298, %v511
    %v879 = vmul.f32 %v299, %v547
    %v880 = vmul.f32 %v300, %v583
    %v881 = vmul.f32 %v301, %v601
    %v882 = vmul.f32 %v302, %v472
    %v883 = vmul.f32 %v303, %v508
    %v884 = vmul.f32 %v304, %v544
    %v885 = vmul.f32 %v305, %v580
    %v886 = vmul.f32 %v306, %v592
    %v887 = vmul.f32 %v307, %v473
    %v888 = vmul.f32 %v308, %v509
    %v889 = vmul.f32 %v309, %v545
    %v890 = vmul.f32 %v310, %v581
    %v891 = vmul.f32 %v311, %v600
    %v892 = vmul.f32 %v312, %v474
    %v893 = vmul.f32 %v313, %v510
    %v894 = vmul.f32 %v314, %v546
    %v895 = vmul.f32 %v315, %v582
    %v896 = vmul.f32 %v316, %v599
    %v897 = vmul.f32 %v317, %v475
    %v898 = vmul.f32 %v318, %v511
    %v899 = vmul.f32 %v319, %v547
    %v900 = vmul.f32 %v320, %v583
    %v901 = vmul.f32 %v321, %v601
    %v902 = vmul.f32 %v322, %v472
    %v903 = vmul.f32 %v323, %v508
    %v904 = vmul.f32 %v324, %v544
    %v905 = vmul.f32 %v325, %v580
    %v906 = vmul.f32 %v326, %v592
    %v907 = vmul.f32 %v327, %v473
    %v908 = vmul.f32 %v328, %v509
    %v909 = vmul.f32 %v329, %v545
    %v910 = vmul.f32 %v330, %v581
    %v911 = vmul.f32 %v331, %v600
    %v912 = vmul.f32 %v332, %v474
    %v913 = vmul.f32 %v333, %v510
    %v914 = vmul.f32 %v334, %v546
    %v915 = vmul.f32 %v335, %v582
    %v916 = vmul.f32 %v336, %v599
    %v917 = vmul.f32 %v337, %v475
    %v918 = vmul.f32 %v338, %v511
    %v919 = vmul.f32 %v339, %v547
    %v920 = vmul.f32 %v340, %v583
    %v921 = vmul.f32 %v341, %v601
    %v922 = vmul.f32 %v342, %v472
    %v923 = vmul.f32 %v343, %v508
    %v924 = vmul.f32 %v344, %v544
    %v925 = vmul.f32 %v345, %v580
    %v926 = vmul.f32 %v346, %v592
    %v927 = vmul.f32 %v347, %v473
    %v928 = vmul.f32 %v348, %v509
    %v929 = vmul.f32 %v349, %v545
    %v930 = vmul.f32 %v350, %v581
    %v931 = vmul.f32 %v351, %v600
    %v932 = vmul.f32 %v352, %v474
    %v933 = vmul.f32 %v353, %v510
    %v934 = vmul.f32 %v354, %v546
    %v935 = vmul.f32 %v355, %v582
    %v936 = vmul.f32 %v356, %v599
    %v937 = vmul.f32 %v357, %v475
    %v938 = vmul.f32 %v358, %v511
    %v939 = vmul.f32 %v359, %v547
    %v940 = vmul.f32 %v360, %v583
    %v941 = vmul.f32 %v361, %v601
    %v1262 = vcombine.low %v622, %v627
    %v1263 = vcombine.high %v622, %v627
    %v1264 = vcombine.low %v632, %v637
    %v1265 = vcombine.high %v632, %v637
    %v1267 = vunpack.c.l.s4 1983009808
    %v1268 = vunpack.c.0.s8 %v1267
    %v1269 = vlaneseq
    %v1270 = vshrl.u32 %v1269, 7
    %v1271 = vsub.s32 %v1268, %v1270
    %v1272 = vrot.slane %v1262, %v1271
    %v1274 = vunpack.c.l.s4 1983009808
    %v1275 = vunpack.c.0.s8 %v1274
    %v1276 = vlaneseq
    %v1277 = vshrl.u32 %v1276, 7
    %v1278 = vsub.s32 %v1275, %v1277
    %v1279 = vrot.slane %v1263, %v1278
    %v1281 = vunpack.c.l.s4 1983009808
    %v1282 = vunpack.c.0.s8 %v1281
    %v1283 = vlaneseq
    %v1284 = vshrl.u32 %v1283, 7
    %v1285 = vsub.s32 %v1282, %v1284
    %v1286 = vrot.slane %v1264, %v1285
    %v1288 = vunpack.c.l.s4 1983009808
    %v1289 = vunpack.c.0.s8 %v1288
    %v1290 = vlaneseq
    %v1291 = vshrl.u32 %v1290, 7
    %v1292 = vsub.s32 %v1289, %v1291
    %v1293 = vrot.slane %v1265, %v1292
    %v1294 = vcombine.low %v1272, %v1286
    %v1295 = vcombine.high %v1272, %v1286
    %v1296 = vcombine.low %v1279, %v1293
    %v1297 = vcombine.high %v1279, %v1293
    %v1298 = vcombine.low %v623, %v628
    %v1299 = vcombine.high %v623, %v628
    %v1300 = vcombine.low %v633, %v638
    %v1301 = vcombine.high %v633, %v638
    %v1303 = vunpack.c.l.s4 1983009808
    %v1304 = vunpack.c.0.s8 %v1303
    %v1305 = vlaneseq
    %v1306 = vshrl.u32 %v1305, 7
    %v1307 = vsub.s32 %v1304, %v1306
    %v1308 = vrot.slane %v1298, %v1307
    %v1310 = vunpack.c.l.s4 1983009808
    %v1311 = vunpack.c.0.s8 %v1310
    %v1312 = vlaneseq
    %v1313 = vshrl.u32 %v1312, 7
    %v1314 = vsub.s32 %v1311, %v1313
    %v1315 = vrot.slane %v1299, %v1314
    %v1317 = vunpack.c.l.s4 1983009808
    %v1318 = vunpack.c.0.s8 %v1317
    %v1319 = vlaneseq
    %v1320 = vshrl.u32 %v1319, 7
    %v1321 = vsub.s32 %v1318, %v1320
    %v1322 = vrot.slane %v1300, %v1321
    %v1324 = vunpack.c.l.s4 1983009808
    %v1325 = vunpack.c.0.s8 %v1324
    %v1326 = vlaneseq
    %v1327 = vshrl.u32 %v1326, 7
    %v1328 = vsub.s32 %v1325, %v1327
    %v1329 = vrot.slane %v1301, %v1328
    %v1330 = vcombine.low %v1308, %v1322
    %v1331 = vcombine.high %v1308, %v1322
    %v1332 = vcombine.low %v1315, %v1329
    %v1333 = vcombine.high %v1315, %v1329
    %v1334 = vcombine.low %v624, %v629
    %v1335 = vcombine.high %v624, %v629
    %v1336 = vcombine.low %v634, %v639
    %v1337 = vcombine.high %v634, %v639
    %v1339 = vunpack.c.l.s4 1983009808
    %v1340 = vunpack.c.0.s8 %v1339
    %v1341 = vlaneseq
    %v1342 = vshrl.u32 %v1341, 7
    %v1343 = vsub.s32 %v1340, %v1342
    %v1344 = vrot.slane %v1334, %v1343
    %v1346 = vunpack.c.l.s4 1983009808
    %v1347 = vunpack.c.0.s8 %v1346
    %v1348 = vlaneseq
    %v1349 = vshrl.u32 %v1348, 7
    %v1350 = vsub.s32 %v1347, %v1349
    %v1351 = vrot.slane %v1335, %v1350
    %v1353 = vunpack.c.l.s4 1983009808
    %v1354 = vunpack.c.0.s8 %v1353
    %v1355 = vlaneseq
    %v1356 = vshrl.u32 %v1355, 7
    %v1357 = vsub.s32 %v1354, %v1356
    %v1358 = vrot.slane %v1336, %v1357
    %v1360 = vunpack.c.l.s4 1983009808
    %v1361 = vunpack.c.0.s8 %v1360
    %v1362 = vlaneseq
    %v1363 = vshrl.u32 %v1362, 7
    %v1364 = vsub.s32 %v1361, %v1363
    %v1365 = vrot.slane %v1337, %v1364
    %v1366 = vcombine.low %v1344, %v1358
    %v1367 = vcombine.high %v1344, %v1358
    %v1368 = vcombine.low %v1351, %v1365
    %v1369 = vcombine.high %v1351, %v1365
    %v1370 = vcombine.low %v625, %v630
    %v1371 = vcombine.high %v625, %v630
    %v1372 = vcombine.low %v635, %v640
    %v1373 = vcombine.high %v635, %v640
    %v1375 = vunpack.c.l.s4 1983009808
    %v1376 = vunpack.c.0.s8 %v1375
    %v1377 = vlaneseq
    %v1378 = vshrl.u32 %v1377, 7
    %v1379 = vsub.s32 %v1376, %v1378
    %v1380 = vrot.slane %v1370, %v1379
    %v1382 = vunpack.c.l.s4 1983009808
    %v1383 = vunpack.c.0.s8 %v1382
    %v1384 = vlaneseq
    %v1385 = vshrl.u32 %v1384, 7
    %v1386 = vsub.s32 %v1383, %v1385
    %v1387 = vrot.slane %v1371, %v1386
    %v1389 = vunpack.c.l.s4 1983009808
    %v1390 = vunpack.c.0.s8 %v1389
    %v1391 = vlaneseq
    %v1392 = vshrl.u32 %v1391, 7
    %v1393 = vsub.s32 %v1390, %v1392
    %v1394 = vrot.slane %v1372, %v1393
    %v1396 = vunpack.c.l.s4 1983009808
    %v1397 = vunpack.c.0.s8 %v1396
    %v1398 = vlaneseq
    %v1399 = vshrl.u32 %v1398, 7
    %v1400 = vsub.s32 %v1397, %v1399
    %v1401 = vrot.slane %v1373, %v1400
    %v1402 = vcombine.low %v1380, %v1394
    %v1403 = vcombine.high %v1380, %v1394
    %v1404 = vcombine.low %v1387, %v1401
    %v1405 = vcombine.high %v1387, %v1401
    %v1406 = vcombine.low %v626, %v631
    %v1407 = vcombine.low %v636, %v641
    %v1409 = vunpack.c.l.s4 1983009808
    %v1410 = vunpack.c.0.s8 %v1409
    %v1411 = vlaneseq
    %v1412 = vshrl.u32 %v1411, 7
    %v1413 = vsub.s32 %v1410, %v1412
    %v1414 = vrot.slane %v1406, %v1413
    %v1416 = vunpack.c.l.s4 1983009808
    %v1417 = vunpack.c.0.s8 %v1416
    %v1418 = vlaneseq
    %v1419 = vshrl.u32 %v1418, 7
    %v1420 = vsub.s32 %v1417, %v1419
    %v1421 = vrot.slane %v1407, %v1420
    %v1422 = vcombine.low %v1414, %v1421
    %v1423 = vcombine.high %v1414, %v1421
    %v1424 = vcombine.low %v642, %v647
    %v1425 = vcombine.high %v642, %v647
    %v1426 = vcombine.low %v652, %v657
    %v1427 = vcombine.high %v652, %v657
    %v1429 = vunpack.c.l.s4 1983009808
    %v1430 = vunpack.c.0.s8 %v1429
    %v1431 = vlaneseq
    %v1432 = vshrl.u32 %v1431, 7
    %v1433 = vsub.s32 %v1430, %v1432
    %v1434 = vrot.slane %v1424, %v1433
    %v1436 = vunpack.c.l.s4 1983009808
    %v1437 = vunpack.c.0.s8 %v1436
    %v1438 = vlaneseq
    %v1439 = vshrl.u32 %v1438, 7
    %v1440 = vsub.s32 %v1437, %v1439
    %v1441 = vrot.slane %v1425, %v1440
    %v1443 = vunpack.c.l.s4 1983009808
    %v1444 = vunpack.c.0.s8 %v1443
    %v1445 = vlaneseq
    %v1446 = vshrl.u32 %v1445, 7
    %v1447 = vsub.s32 %v1444, %v1446
    %v1448 = vrot.slane %v1426, %v1447
    %v1450 = vunpack.c.l.s4 1983009808
    %v1451 = vunpack.c.0.s8 %v1450
    %v1452 = vlaneseq
    %v1453 = vshrl.u32 %v1452, 7
    %v1454 = vsub.s32 %v1451, %v1453
    %v1455 = vrot.slane %v1427, %v1454
    %v1456 = vcombine.low %v1434, %v1448
    %v1457 = vcombine.high %v1434, %v1448
    %v1458 = vcombine.low %v1441, %v1455
    %v1459 = vcombine.high %v1441, %v1455
    %v1460 = vcombine.low %v643, %v648
    %v1461 = vcombine.high %v643, %v648
    %v1462 = vcombine.low %v653, %v658
    %v1463 = vcombine.high %v653, %v658
    %v1465 = vunpack.c.l.s4 1983009808
    %v1466 = vunpack.c.0.s8 %v1465
    %v1467 = vlaneseq
    %v1468 = vshrl.u32 %v1467, 7
    %v1469 = vsub.s32 %v1466, %v1468
    %v1470 = vrot.slane %v1460, %v1469
    %v1472 = vunpack.c.l.s4 1983009808
    %v1473 = vunpack.c.0.s8 %v1472
    %v1474 = vlaneseq
    %v1475 = vshrl.u32 %v1474, 7
    %v1476 = vsub.s32 %v1473, %v1475
    %v1477 = vrot.slane %v1461, %v1476
    %v1479 = vunpack.c.l.s4 1983009808
    %v1480 = vunpack.c.0.s8 %v1479
    %v1481 = vlaneseq
    %v1482 = vshrl.u32 %v1481, 7
    %v1483 = vsub.s32 %v1480, %v1482
    %v1484 = vrot.slane %v1462, %v1483
    %v1486 = vunpack.c.l.s4 1983009808
    %v1487 = vunpack.c.0.s8 %v1486
    %v1488 = vlaneseq
    %v1489 = vshrl.u32 %v1488, 7
    %v1490 = vsub.s32 %v1487, %v1489
    %v1491 = vrot.slane %v1463, %v1490
    %v1492 = vcombine.low %v1470, %v1484
    %v1493 = vcombine.high %v1470, %v1484
    %v1494 = vcombine.low %v1477, %v1491
    %v1495 = vcombine.high %v1477, %v1491
    %v1496 = vcombine.low %v644, %v649
    %v1497 = vcombine.high %v644, %v649
    %v1498 = vcombine.low %v654, %v659
    %v1499 = vcombine.high %v654, %v659
    %v1501 = vunpack.c.l.s4 1983009808
    %v1502 = vunpack.c.0.s8 %v1501
    %v1503 = vlaneseq
    %v1504 = vshrl.u32 %v1503, 7
    %v1505 = vsub.s32 %v1502, %v1504
    %v1506 = vrot.slane %v1496, %v1505
    %v1508 = vunpack.c.l.s4 1983009808
    %v1509 = vunpack.c.0.s8 %v1508
    %v1510 = vlaneseq
    %v1511 = vshrl.u32 %v1510, 7
    %v1512 = vsub.s32 %v1509, %v1511
    %v1513 = vrot.slane %v1497, %v1512
    %v1515 = vunpack.c.l.s4 1983009808
    %v1516 = vunpack.c.0.s8 %v1515
    %v1517 = vlaneseq
    %v1518 = vshrl.u32 %v1517, 7
    %v1519 = vsub.s32 %v1516, %v1518
    %v1520 = vrot.slane %v1498, %v1519
    %v1522 = vunpack.c.l.s4 1983009808
    %v1523 = vunpack.c.0.s8 %v1522
    %v1524 = vlaneseq
    %v1525 = vshrl.u32 %v1524, 7
    %v1526 = vsub.s32 %v1523, %v1525
    %v1527 = vrot.slane %v1499, %v1526
    %v1528 = vcombine.low %v1506, %v1520
    %v1529 = vcombine.high %v1506, %v1520
    %v1530 = vcombine.low %v1513, %v1527
    %v1531 = vcombine.high %v1513, %v1527
    %v1532 = vcombine.low %v645, %v650
    %v1533 = vcombine.high %v645, %v650
    %v1534 = vcombine.low %v655, %v660
    %v1535 = vcombine.high %v655, %v660
    %v1537 = vunpack.c.l.s4 1983009808
    %v1538 = vunpack.c.0.s8 %v1537
    %v1539 = vlaneseq
    %v1540 = vshrl.u32 %v1539, 7
    %v1541 = vsub.s32 %v1538, %v1540
    %v1542 = vrot.slane %v1532, %v1541
    %v1544 = vunpack.c.l.s4 1983009808
    %v1545 = vunpack.c.0.s8 %v1544
    %v1546 = vlaneseq
    %v1547 = vshrl.u32 %v1546, 7
    %v1548 = vsub.s32 %v1545, %v1547
    %v1549 = vrot.slane %v1533, %v1548
    %v1551 = vunpack.c.l.s4 1983009808
    %v1552 = vunpack.c.0.s8 %v1551
    %v1553 = vlaneseq
    %v1554 = vshrl.u32 %v1553, 7
    %v1555 = vsub.s32 %v1552, %v1554
    %v1556 = vrot.slane %v1534, %v1555
    %v1558 = vunpack.c.l.s4 1983009808
    %v1559 = vunpack.c.0.s8 %v1558
    %v1560 = vlaneseq
    %v1561 = vshrl.u32 %v1560, 7
    %v1562 = vsub.s32 %v1559, %v1561
    %v1563 = vrot.slane %v1535, %v1562
    %v1564 = vcombine.low %v1542, %v1556
    %v1565 = vcombine.high %v1542, %v1556
    %v1566 = vcombine.low %v1549, %v1563
    %v1567 = vcombine.high %v1549, %v1563
    %v1568 = vcombine.low %v646, %v651
    %v1569 = vcombine.low %v656, %v661
    %v1571 = vunpack.c.l.s4 1983009808
    %v1572 = vunpack.c.0.s8 %v1571
    %v1573 = vlaneseq
    %v1574 = vshrl.u32 %v1573, 7
    %v1575 = vsub.s32 %v1572, %v1574
    %v1576 = vrot.slane %v1568, %v1575
    %v1578 = vunpack.c.l.s4 1983009808
    %v1579 = vunpack.c.0.s8 %v1578
    %v1580 = vlaneseq
    %v1581 = vshrl.u32 %v1580, 7
    %v1582 = vsub.s32 %v1579, %v1581
    %v1583 = vrot.slane %v1569, %v1582
    %v1584 = vcombine.low %v1576, %v1583
    %v1585 = vcombine.high %v1576, %v1583
    %v1586 = vcombine.low %v662, %v667
    %v1587 = vcombine.high %v662, %v667
    %v1588 = vcombine.low %v672, %v677
    %v1589 = vcombine.high %v672, %v677
    %v1591 = vunpack.c.l.s4 1983009808
    %v1592 = vunpack.c.0.s8 %v1591
    %v1593 = vlaneseq
    %v1594 = vshrl.u32 %v1593, 7
    %v1595 = vsub.s32 %v1592, %v1594
    %v1596 = vrot.slane %v1586, %v1595
    %v1598 = vunpack.c.l.s4 1983009808
    %v1599 = vunpack.c.0.s8 %v1598
    %v1600 = vlaneseq
    %v1601 = vshrl.u32 %v1600, 7
    %v1602 = vsub.s32 %v1599, %v1601
    %v1603 = vrot.slane %v1587, %v1602
    %v1605 = vunpack.c.l.s4 1983009808
    %v1606 = vunpack.c.0.s8 %v1605
    %v1607 = vlaneseq
    %v1608 = vshrl.u32 %v1607, 7
    %v1609 = vsub.s32 %v1606, %v1608
    %v1610 = vrot.slane %v1588, %v1609
    %v1612 = vunpack.c.l.s4 1983009808
    %v1613 = vunpack.c.0.s8 %v1612
    %v1614 = vlaneseq
    %v1615 = vshrl.u32 %v1614, 7
    %v1616 = vsub.s32 %v1613, %v1615
    %v1617 = vrot.slane %v1589, %v1616
    %v1618 = vcombine.low %v1596, %v1610
    %v1619 = vcombine.high %v1596, %v1610
    %v1620 = vcombine.low %v1603, %v1617
    %v1621 = vcombine.high %v1603, %v1617
    %v1622 = vcombine.low %v663, %v668
    %v1623 = vcombine.high %v663, %v668
    %v1624 = vcombine.low %v673, %v678
    %v1625 = vcombine.high %v673, %v678
    %v1627 = vunpack.c.l.s4 1983009808
    %v1628 = vunpack.c.0.s8 %v1627
    %v1629 = vlaneseq
    %v1630 = vshrl.u32 %v1629, 7
    %v1631 = vsub.s32 %v1628, %v1630
    %v1632 = vrot.slane %v1622, %v1631
    %v1634 = vunpack.c.l.s4 1983009808
    %v1635 = vunpack.c.0.s8 %v1634
    %v1636 = vlaneseq
    %v1637 = vshrl.u32 %v1636, 7
    %v1638 = vsub.s32 %v1635, %v1637
    %v1639 = vrot.slane %v1623, %v1638
    %v1641 = vunpack.c.l.s4 1983009808
    %v1642 = vunpack.c.0.s8 %v1641
    %v1643 = vlaneseq
    %v1644 = vshrl.u32 %v1643, 7
    %v1645 = vsub.s32 %v1642, %v1644
    %v1646 = vrot.slane %v1624, %v1645
    %v1648 = vunpack.c.l.s4 1983009808
    %v1649 = vunpack.c.0.s8 %v1648
    %v1650 = vlaneseq
    %v1651 = vshrl.u32 %v1650, 7
    %v1652 = vsub.s32 %v1649, %v1651
    %v1653 = vrot.slane %v1625, %v1652
    %v1654 = vcombine.low %v1632, %v1646
    %v1655 = vcombine.high %v1632, %v1646
    %v1656 = vcombine.low %v1639, %v1653
    %v1657 = vcombine.high %v1639, %v1653
    %v1658 = vcombine.low %v664, %v669
    %v1659 = vcombine.high %v664, %v669
    %v1660 = vcombine.low %v674, %v679
    %v1661 = vcombine.high %v674, %v679
    %v1663 = vunpack.c.l.s4 1983009808
    %v1664 = vunpack.c.0.s8 %v1663
    %v1665 = vlaneseq
    %v1666 = vshrl.u32 %v1665, 7
    %v1667 = vsub.s32 %v1664, %v1666
    %v1668 = vrot.slane %v1658, %v1667
    %v1670 = vunpack.c.l.s4 1983009808
    %v1671 = vunpack.c.0.s8 %v1670
    %v1672 = vlaneseq
    %v1673 = vshrl.u32 %v1672, 7
    %v1674 = vsub.s32 %v1671, %v1673
    %v1675 = vrot.slane %v1659, %v1674
    %v1677 = vunpack.c.l.s4 1983009808
    %v1678 = vunpack.c.0.s8 %v1677
    %v1679 = vlaneseq
    %v1680 = vshrl.u32 %v1679, 7
    %v1681 = vsub.s32 %v1678, %v1680
    %v1682 = vrot.slane %v1660, %v1681
    %v1684 = vunpack.c.l.s4 1983009808
    %v1685 = vunpack.c.0.s8 %v1684
    %v1686 = vlaneseq
    %v1687 = vshrl.u32 %v1686, 7
    %v1688 = vsub.s32 %v1685, %v1687
    %v1689 = vrot.slane %v1661, %v1688
    %v1690 = vcombine.low %v1668, %v1682
    %v1691 = vcombine.high %v1668, %v1682
    %v1692 = vcombine.low %v1675, %v1689
    %v1693 = vcombine.high %v1675, %v1689
    %v1694 = vcombine.low %v665, %v670
    %v1695 = vcombine.high %v665, %v670
    %v1696 = vcombine.low %v675, %v680
    %v1697 = vcombine.high %v675, %v680
    %v1699 = vunpack.c.l.s4 1983009808
    %v1700 = vunpack.c.0.s8 %v1699
    %v1701 = vlaneseq
    %v1702 = vshrl.u32 %v1701, 7
    %v1703 = vsub.s32 %v1700, %v1702
    %v1704 = vrot.slane %v1694, %v1703
    %v1706 = vunpack.c.l.s4 1983009808
    %v1707 = vunpack.c.0.s8 %v1706
    %v1708 = vlaneseq
    %v1709 = vshrl.u32 %v1708, 7
    %v1710 = vsub.s32 %v1707, %v1709
    %v1711 = vrot.slane %v1695, %v1710
    %v1713 = vunpack.c.l.s4 1983009808
    %v1714 = vunpack.c.0.s8 %v1713
    %v1715 = vlaneseq
    %v1716 = vshrl.u32 %v1715, 7
    %v1717 = vsub.s32 %v1714, %v1716
    %v1718 = vrot.slane %v1696, %v1717
    %v1720 = vunpack.c.l.s4 1983009808
    %v1721 = vunpack.c.0.s8 %v1720
    %v1722 = vlaneseq
    %v1723 = vshrl.u32 %v1722, 7
    %v1724 = vsub.s32 %v1721, %v1723
    %v1725 = vrot.slane %v1697, %v1724
    %v1726 = vcombine.low %v1704, %v1718
    %v1727 = vcombine.high %v1704, %v1718
    %v1728 = vcombine.low %v1711, %v1725
    %v1729 = vcombine.high %v1711, %v1725
    %v1730 = vcombine.low %v666, %v671
    %v1731 = vcombine.low %v676, %v681
    %v1733 = vunpack.c.l.s4 1983009808
    %v1734 = vunpack.c.0.s8 %v1733
    %v1735 = vlaneseq
    %v1736 = vshrl.u32 %v1735, 7
    %v1737 = vsub.s32 %v1734, %v1736
    %v1738 = vrot.slane %v1730, %v1737
    %v1740 = vunpack.c.l.s4 1983009808
    %v1741 = vunpack.c.0.s8 %v1740
    %v1742 = vlaneseq
    %v1743 = vshrl.u32 %v1742, 7
    %v1744 = vsub.s32 %v1741, %v1743
    %v1745 = vrot.slane %v1731, %v1744
    %v1746 = vcombine.low %v1738, %v1745
    %v1747 = vcombine.high %v1738, %v1745
    %v1748 = vcombine.low %v682, %v687
    %v1749 = vcombine.high %v682, %v687
    %v1750 = vcombine.low %v692, %v697
    %v1751 = vcombine.high %v692, %v697
    %v1753 = vunpack.c.l.s4 1983009808
    %v1754 = vunpack.c.0.s8 %v1753
    %v1755 = vlaneseq
    %v1756 = vshrl.u32 %v1755, 7
    %v1757 = vsub.s32 %v1754, %v1756
    %v1758 = vrot.slane %v1748, %v1757
    %v1760 = vunpack.c.l.s4 1983009808
    %v1761 = vunpack.c.0.s8 %v1760
    %v1762 = vlaneseq
    %v1763 = vshrl.u32 %v1762, 7
    %v1764 = vsub.s32 %v1761, %v1763
    %v1765 = vrot.slane %v1749, %v1764
    %v1767 = vunpack.c.l.s4 1983009808
    %v1768 = vunpack.c.0.s8 %v1767
    %v1769 = vlaneseq
    %v1770 = vshrl.u32 %v1769, 7
    %v1771 = vsub.s32 %v1768, %v1770
    %v1772 = vrot.slane %v1750, %v1771
    %v1774 = vunpack.c.l.s4 1983009808
    %v1775 = vunpack.c.0.s8 %v1774
    %v1776 = vlaneseq
    %v1777 = vshrl.u32 %v1776, 7
    %v1778 = vsub.s32 %v1775, %v1777
    %v1779 = vrot.slane %v1751, %v1778
    %v1780 = vcombine.low %v1758, %v1772
    %v1781 = vcombine.high %v1758, %v1772
    %v1782 = vcombine.low %v1765, %v1779
    %v1783 = vcombine.high %v1765, %v1779
    %v1784 = vcombine.low %v683, %v688
    %v1785 = vcombine.high %v683, %v688
    %v1786 = vcombine.low %v693, %v698
    %v1787 = vcombine.high %v693, %v698
    %v1789 = vunpack.c.l.s4 1983009808
    %v1790 = vunpack.c.0.s8 %v1789
    %v1791 = vlaneseq
    %v1792 = vshrl.u32 %v1791, 7
    %v1793 = vsub.s32 %v1790, %v1792
    %v1794 = vrot.slane %v1784, %v1793
    %v1796 = vunpack.c.l.s4 1983009808
    %v1797 = vunpack.c.0.s8 %v1796
    %v1798 = vlaneseq
    %v1799 = vshrl.u32 %v1798, 7
    %v1800 = vsub.s32 %v1797, %v1799
    %v1801 = vrot.slane %v1785, %v1800
    %v1803 = vunpack.c.l.s4 1983009808
    %v1804 = vunpack.c.0.s8 %v1803
    %v1805 = vlaneseq
    %v1806 = vshrl.u32 %v1805, 7
    %v1807 = vsub.s32 %v1804, %v1806
    %v1808 = vrot.slane %v1786, %v1807
    %v1810 = vunpack.c.l.s4 1983009808
    %v1811 = vunpack.c.0.s8 %v1810
    %v1812 = vlaneseq
    %v1813 = vshrl.u32 %v1812, 7
    %v1814 = vsub.s32 %v1811, %v1813
    %v1815 = vrot.slane %v1787, %v1814
    %v1816 = vcombine.low %v1794, %v1808
    %v1817 = vcombine.high %v1794, %v1808
    %v1818 = vcombine.low %v1801, %v1815
    %v1819 = vcombine.high %v1801, %v1815
    %v1820 = vcombine.low %v684, %v689
    %v1821 = vcombine.high %v684, %v689
    %v1822 = vcombine.low %v694, %v699
    %v1823 = vcombine.high %v694, %v699
    %v1825 = vunpack.c.l.s4 1983009808
    %v1826 = vunpack.c.0.s8 %v1825
    %v1827 = vlaneseq
    %v1828 = vshrl.u32 %v1827, 7
    %v1829 = vsub.s32 %v1826, %v1828
    %v1830 = vrot.slane %v1820, %v1829
    %v1832 = vunpack.c.l.s4 1983009808
    %v1833 = vunpack.c.0.s8 %v1832
    %v1834 = vlaneseq
    %v1835 = vshrl.u32 %v1834, 7
    %v1836 = vsub.s32 %v1833, %v1835
    %v1837 = vrot.slane %v1821, %v1836
    %v1839 = vunpack.c.l.s4 1983009808
    %v1840 = vunpack.c.0.s8 %v1839
    %v1841 = vlaneseq
    %v1842 = vshrl.u32 %v1841, 7
    %v1843 = vsub.s32 %v1840, %v1842
    %v1844 = vrot.slane %v1822, %v1843
    %v1846 = vunpack.c.l.s4 1983009808
    %v1847 = vunpack.c.0.s8 %v1846
    %v1848 = vlaneseq
    %v1849 = vshrl.u32 %v1848, 7
    %v1850 = vsub.s32 %v1847, %v1849
    %v1851 = vrot.slane %v1823, %v1850
    %v1852 = vcombine.low %v1830, %v1844
    %v1853 = vcombine.high %v1830, %v1844
    %v1854 = vcombine.low %v1837, %v1851
    %v1855 = vcombine.high %v1837, %v1851
    %v1856 = vcombine.low %v685, %v690
    %v1857 = vcombine.high %v685, %v690
    %v1858 = vcombine.low %v695, %v700
    %v1859 = vcombine.high %v695, %v700
    %v1861 = vunpack.c.l.s4 1983009808
    %v1862 = vunpack.c.0.s8 %v1861
    %v1863 = vlaneseq
    %v1864 = vshrl.u32 %v1863, 7
    %v1865 = vsub.s32 %v1862, %v1864
    %v1866 = vrot.slane %v1856, %v1865
    %v1868 = vunpack.c.l.s4 1983009808
    %v1869 = vunpack.c.0.s8 %v1868
    %v1870 = vlaneseq
    %v1871 = vshrl.u32 %v1870, 7
    %v1872 = vsub.s32 %v1869, %v1871
    %v1873 = vrot.slane %v1857, %v1872
    %v1875 = vunpack.c.l.s4 1983009808
    %v1876 = vunpack.c.0.s8 %v1875
    %v1877 = vlaneseq
    %v1878 = vshrl.u32 %v1877, 7
    %v1879 = vsub.s32 %v1876, %v1878
    %v1880 = vrot.slane %v1858, %v1879
    %v1882 = vunpack.c.l.s4 1983009808
    %v1883 = vunpack.c.0.s8 %v1882
    %v1884 = vlaneseq
    %v1885 = vshrl.u32 %v1884, 7
    %v1886 = vsub.s32 %v1883, %v1885
    %v1887 = vrot.slane %v1859, %v1886
    %v1888 = vcombine.low %v1866, %v1880
    %v1889 = vcombine.high %v1866, %v1880
    %v1890 = vcombine.low %v1873, %v1887
    %v1891 = vcombine.high %v1873, %v1887
    %v1892 = vcombine.low %v686, %v691
    %v1893 = vcombine.low %v696, %v701
    %v1895 = vunpack.c.l.s4 1983009808
    %v1896 = vunpack.c.0.s8 %v1895
    %v1897 = vlaneseq
    %v1898 = vshrl.u32 %v1897, 7
    %v1899 = vsub.s32 %v1896, %v1898
    %v1900 = vrot.slane %v1892, %v1899
    %v1902 = vunpack.c.l.s4 1983009808
    %v1903 = vunpack.c.0.s8 %v1902
    %v1904 = vlaneseq
    %v1905 = vshrl.u32 %v1904, 7
    %v1906 = vsub.s32 %v1903, %v1905
    %v1907 = vrot.slane %v1893, %v1906
    %v1908 = vcombine.low %v1900, %v1907
    %v1909 = vcombine.high %v1900, %v1907
    %v1910 = vcombine.low %v702, %v707
    %v1911 = vcombine.high %v702, %v707
    %v1912 = vcombine.low %v712, %v717
    %v1913 = vcombine.high %v712, %v717
    %v1915 = vunpack.c.l.s4 1983009808
    %v1916 = vunpack.c.0.s8 %v1915
    %v1917 = vlaneseq
    %v1918 = vshrl.u32 %v1917, 7
    %v1919 = vsub.s32 %v1916, %v1918
    %v1920 = vrot.slane %v1910, %v1919
    %v1922 = vunpack.c.l.s4 1983009808
    %v1923 = vunpack.c.0.s8 %v1922
    %v1924 = vlaneseq
    %v1925 = vshrl.u32 %v1924, 7
    %v1926 = vsub.s32 %v1923, %v1925
    %v1927 = vrot.slane %v1911, %v1926
    %v1929 = vunpack.c.l.s4 1983009808
    %v1930 = vunpack.c.0.s8 %v1929
    %v1931 = vlaneseq
    %v1932 = vshrl.u32 %v1931, 7
    %v1933 = vsub.s32 %v1930, %v1932
    %v1934 = vrot.slane %v1912, %v1933
    %v1936 = vunpack.c.l.s4 1983009808
    %v1937 = vunpack.c.0.s8 %v1936
    %v1938 = vlaneseq
    %v1939 = vshrl.u32 %v1938, 7
    %v1940 = vsub.s32 %v1937, %v1939
    %v1941 = vrot.slane %v1913, %v1940
    %v1942 = vcombine.low %v1920, %v1934
    %v1943 = vcombine.high %v1920, %v1934
    %v1944 = vcombine.low %v1927, %v1941
    %v1945 = vcombine.high %v1927, %v1941
    %v1946 = vcombine.low %v703, %v708
    %v1947 = vcombine.high %v703, %v708
    %v1948 = vcombine.low %v713, %v718
    %v1949 = vcombine.high %v713, %v718
    %v1951 = vunpack.c.l.s4 1983009808
    %v1952 = vunpack.c.0.s8 %v1951
    %v1953 = vlaneseq
    %v1954 = vshrl.u32 %v1953, 7
    %v1955 = vsub.s32 %v1952, %v1954
    %v1956 = vrot.slane %v1946, %v1955
    %v1958 = vunpack.c.l.s4 1983009808
    %v1959 = vunpack.c.0.s8 %v1958
    %v1960 = vlaneseq
    %v1961 = vshrl.u32 %v1960, 7
    %v1962 = vsub.s32 %v1959, %v1961
    %v1963 = vrot.slane %v1947, %v1962
    %v1965 = vunpack.c.l.s4 1983009808
    %v1966 = vunpack.c.0.s8 %v1965
    %v1967 = vlaneseq
    %v1968 = vshrl.u32 %v1967, 7
    %v1969 = vsub.s32 %v1966, %v1968
    %v1970 = vrot.slane %v1948, %v1969
    %v1972 = vunpack.c.l.s4 1983009808
    %v1973 = vunpack.c.0.s8 %v1972
    %v1974 = vlaneseq
    %v1975 = vshrl.u32 %v1974, 7
    %v1976 = vsub.s32 %v1973, %v1975
    %v1977 = vrot.slane %v1949, %v1976
    %v1978 = vcombine.low %v1956, %v1970
    %v1979 = vcombine.high %v1956, %v1970
    %v1980 = vcombine.low %v1963, %v1977
    %v1981 = vcombine.high %v1963, %v1977
    %v1982 = vcombine.low %v704, %v709
    %v1983 = vcombine.high %v704, %v709
    %v1984 = vcombine.low %v714, %v719
    %v1985 = vcombine.high %v714, %v719
    %v1987 = vunpack.c.l.s4 1983009808
    %v1988 = vunpack.c.0.s8 %v1987
    %v1989 = vlaneseq
    %v1990 = vshrl.u32 %v1989, 7
    %v1991 = vsub.s32 %v1988, %v1990
    %v1992 = vrot.slane %v1982, %v1991
    %v1994 = vunpack.c.l.s4 1983009808
    %v1995 = vunpack.c.0.s8 %v1994
    %v1996 = vlaneseq
    %v1997 = vshrl.u32 %v1996, 7
    %v1998 = vsub.s32 %v1995, %v1997
    %v1999 = vrot.slane %v1983, %v1998
    %v2001 = vunpack.c.l.s4 1983009808
    %v2002 = vunpack.c.0.s8 %v2001
    %v2003 = vlaneseq
    %v2004 = vshrl.u32 %v2003, 7
    %v2005 = vsub.s32 %v2002, %v2004
    %v2006 = vrot.slane %v1984, %v2005
    %v2008 = vunpack.c.l.s4 1983009808
    %v2009 = vunpack.c.0.s8 %v2008
    %v2010 = vlaneseq
    %v2011 = vshrl.u32 %v2010, 7
    %v2012 = vsub.s32 %v2009, %v2011
    %v2013 = vrot.slane %v1985, %v2012
    %v2014 = vcombine.low %v1992, %v2006
    %v2015 = vcombine.high %v1992, %v2006
    %v2016 = vcombine.low %v1999, %v2013
    %v2017 = vcombine.high %v1999, %v2013
    %v2018 = vcombine.low %v705, %v710
    %v2019 = vcombine.high %v705, %v710
    %v2020 = vcombine.low %v715, %v720
    %v2021 = vcombine.high %v715, %v720
    %v2023 = vunpack.c.l.s4 1983009808
    %v2024 = vunpack.c.0.s8 %v2023
    %v2025 = vlaneseq
    %v2026 = vshrl.u32 %v2025, 7
    %v2027 = vsub.s32 %v2024, %v2026
    %v2028 = vrot.slane %v2018, %v2027
    %v2030 = vunpack.c.l.s4 1983009808
    %v2031 = vunpack.c.0.s8 %v2030
    %v2032 = vlaneseq
    %v2033 = vshrl.u32 %v2032, 7
    %v2034 = vsub.s32 %v2031, %v2033
    %v2035 = vrot.slane %v2019, %v2034
    %v2037 = vunpack.c.l.s4 1983009808
    %v2038 = vunpack.c.0.s8 %v2037
    %v2039 = vlaneseq
    %v2040 = vshrl.u32 %v2039, 7
    %v2041 = vsub.s32 %v2038, %v2040
    %v2042 = vrot.slane %v2020, %v2041
    %v2044 = vunpack.c.l.s4 1983009808
    %v2045 = vunpack.c.0.s8 %v2044
    %v2046 = vlaneseq
    %v2047 = vshrl.u32 %v2046, 7
    %v2048 = vsub.s32 %v2045, %v2047
    %v2049 = vrot.slane %v2021, %v2048
    %v2050 = vcombine.low %v2028, %v2042
    %v2051 = vcombine.high %v2028, %v2042
    %v2052 = vcombine.low %v2035, %v2049
    %v2053 = vcombine.high %v2035, %v2049
    %v2054 = vcombine.low %v706, %v711
    %v2055 = vcombine.low %v716, %v721
    %v2057 = vunpack.c.l.s4 1983009808
    %v2058 = vunpack.c.0.s8 %v2057
    %v2059 = vlaneseq
    %v2060 = vshrl.u32 %v2059, 7
    %v2061 = vsub.s32 %v2058, %v2060
    %v2062 = vrot.slane %v2054, %v2061
    %v2064 = vunpack.c.l.s4 1983009808
    %v2065 = vunpack.c.0.s8 %v2064
    %v2066 = vlaneseq
    %v2067 = vshrl.u32 %v2066, 7
    %v2068 = vsub.s32 %v2065, %v2067
    %v2069 = vrot.slane %v2055, %v2068
    %v2070 = vcombine.low %v2062, %v2069
    %v2071 = vcombine.high %v2062, %v2069
    %v2072 = vcombine.low %v722, %v727
    %v2073 = vcombine.high %v722, %v727
    %v2074 = vcombine.low %v732, %v737
    %v2075 = vcombine.high %v732, %v737
    %v2077 = vunpack.c.l.s4 1983009808
    %v2078 = vunpack.c.0.s8 %v2077
    %v2079 = vlaneseq
    %v2080 = vshrl.u32 %v2079, 7
    %v2081 = vsub.s32 %v2078, %v2080
    %v2082 = vrot.slane %v2072, %v2081
    %v2084 = vunpack.c.l.s4 1983009808
    %v2085 = vunpack.c.0.s8 %v2084
    %v2086 = vlaneseq
    %v2087 = vshrl.u32 %v2086, 7
    %v2088 = vsub.s32 %v2085, %v2087
    %v2089 = vrot.slane %v2073, %v2088
    %v2091 = vunpack.c.l.s4 1983009808
    %v2092 = vunpack.c.0.s8 %v2091
    %v2093 = vlaneseq
    %v2094 = vshrl.u32 %v2093, 7
    %v2095 = vsub.s32 %v2092, %v2094
    %v2096 = vrot.slane %v2074, %v2095
    %v2098 = vunpack.c.l.s4 1983009808
    %v2099 = vunpack.c.0.s8 %v2098
    %v2100 = vlaneseq
    %v2101 = vshrl.u32 %v2100, 7
    %v2102 = vsub.s32 %v2099, %v2101
    %v2103 = vrot.slane %v2075, %v2102
    %v2104 = vcombine.low %v2082, %v2096
    %v2105 = vcombine.high %v2082, %v2096
    %v2106 = vcombine.low %v2089, %v2103
    %v2107 = vcombine.high %v2089, %v2103
    %v2108 = vcombine.low %v723, %v728
    %v2109 = vcombine.high %v723, %v728
    %v2110 = vcombine.low %v733, %v738
    %v2111 = vcombine.high %v733, %v738
    %v2113 = vunpack.c.l.s4 1983009808
    %v2114 = vunpack.c.0.s8 %v2113
    %v2115 = vlaneseq
    %v2116 = vshrl.u32 %v2115, 7
    %v2117 = vsub.s32 %v2114, %v2116
    %v2118 = vrot.slane %v2108, %v2117
    %v2120 = vunpack.c.l.s4 1983009808
    %v2121 = vunpack.c.0.s8 %v2120
    %v2122 = vlaneseq
    %v2123 = vshrl.u32 %v2122, 7
    %v2124 = vsub.s32 %v2121, %v2123
    %v2125 = vrot.slane %v2109, %v2124
    %v2127 = vunpack.c.l.s4 1983009808
    %v2128 = vunpack.c.0.s8 %v2127
    %v2129 = vlaneseq
    %v2130 = vshrl.u32 %v2129, 7
    %v2131 = vsub.s32 %v2128, %v2130
    %v2132 = vrot.slane %v2110, %v2131
    %v2134 = vunpack.c.l.s4 1983009808
    %v2135 = vunpack.c.0.s8 %v2134
    %v2136 = vlaneseq
    %v2137 = vshrl.u32 %v2136, 7
    %v2138 = vsub.s32 %v2135, %v2137
    %v2139 = vrot.slane %v2111, %v2138
    %v2140 = vcombine.low %v2118, %v2132
    %v2141 = vcombine.high %v2118, %v2132
    %v2142 = vcombine.low %v2125, %v2139
    %v2143 = vcombine.high %v2125, %v2139
    %v2144 = vcombine.low %v724, %v729
    %v2145 = vcombine.high %v724, %v729
    %v2146 = vcombine.low %v734, %v739
    %v2147 = vcombine.high %v734, %v739
    %v2149 = vunpack.c.l.s4 1983009808
    %v2150 = vunpack.c.0.s8 %v2149
    %v2151 = vlaneseq
    %v2152 = vshrl.u32 %v2151, 7
    %v2153 = vsub.s32 %v2150, %v2152
    %v2154 = vrot.slane %v2144, %v2153
    %v2156 = vunpack.c.l.s4 1983009808
    %v2157 = vunpack.c.0.s8 %v2156
    %v2158 = vlaneseq
    %v2159 = vshrl.u32 %v2158, 7
    %v2160 = vsub.s32 %v2157, %v2159
    %v2161 = vrot.slane %v2145, %v2160
    %v2163 = vunpack.c.l.s4 1983009808
    %v2164 = vunpack.c.0.s8 %v2163
    %v2165 = vlaneseq
    %v2166 = vshrl.u32 %v2165, 7
    %v2167 = vsub.s32 %v2164, %v2166
    %v2168 = vrot.slane %v2146, %v2167
    %v2170 = vunpack.c.l.s4 1983009808
    %v2171 = vunpack.c.0.s8 %v2170
    %v2172 = vlaneseq
    %v2173 = vshrl.u32 %v2172, 7
    %v2174 = vsub.s32 %v2171, %v2173
    %v2175 = vrot.slane %v2147, %v2174
    %v2176 = vcombine.low %v2154, %v2168
    %v2177 = vcombine.high %v2154, %v2168
    %v2178 = vcombine.low %v2161, %v2175
    %v2179 = vcombine.high %v2161, %v2175
    %v2180 = vcombine.low %v725, %v730
    %v2181 = vcombine.high %v725, %v730
    %v2182 = vcombine.low %v735, %v740
    %v2183 = vcombine.high %v735, %v740
    %v2185 = vunpack.c.l.s4 1983009808
    %v2186 = vunpack.c.0.s8 %v2185
    %v2187 = vlaneseq
    %v2188 = vshrl.u32 %v2187, 7
    %v2189 = vsub.s32 %v2186, %v2188
    %v2190 = vrot.slane %v2180, %v2189
    %v2192 = vunpack.c.l.s4 1983009808
    %v2193 = vunpack.c.0.s8 %v2192
    %v2194 = vlaneseq
    %v2195 = vshrl.u32 %v2194, 7
    %v2196 = vsub.s32 %v2193, %v2195
    %v2197 = vrot.slane %v2181, %v2196
    %v2199 = vunpack.c.l.s4 1983009808
    %v2200 = vunpack.c.0.s8 %v2199
    %v2201 = vlaneseq
    %v2202 = vshrl.u32 %v2201, 7
    %v2203 = vsub.s32 %v2200, %v2202
    %v2204 = vrot.slane %v2182, %v2203
    %v2206 = vunpack.c.l.s4 1983009808
    %v2207 = vunpack.c.0.s8 %v2206
    %v2208 = vlaneseq
    %v2209 = vshrl.u32 %v2208, 7
    %v2210 = vsub.s32 %v2207, %v2209
    %v2211 = vrot.slane %v2183, %v2210
    %v2212 = vcombine.low %v2190, %v2204
    %v2213 = vcombine.high %v2190, %v2204
    %v2214 = vcombine.low %v2197, %v2211
    %v2215 = vcombine.high %v2197, %v2211
    %v2216 = vcombine.low %v726, %v731
    %v2217 = vcombine.low %v736, %v741
    %v2219 = vunpack.c.l.s4 1983009808
    %v2220 = vunpack.c.0.s8 %v2219
    %v2221 = vlaneseq
    %v2222 = vshrl.u32 %v2221, 7
    %v2223 = vsub.s32 %v2220, %v2222
    %v2224 = vrot.slane %v2216, %v2223
    %v2226 = vunpack.c.l.s4 1983009808
    %v2227 = vunpack.c.0.s8 %v2226
    %v2228 = vlaneseq
    %v2229 = vshrl.u32 %v2228, 7
    %v2230 = vsub.s32 %v2227, %v2229
    %v2231 = vrot.slane %v2217, %v2230
    %v2232 = vcombine.low %v2224, %v2231
    %v2233 = vcombine.high %v2224, %v2231
    %v2234 = vcombine.low %v742, %v747
    %v2235 = vcombine.high %v742, %v747
    %v2236 = vcombine.low %v752, %v757
    %v2237 = vcombine.high %v752, %v757
    %v2239 = vunpack.c.l.s4 1983009808
    %v2240 = vunpack.c.0.s8 %v2239
    %v2241 = vlaneseq
    %v2242 = vshrl.u32 %v2241, 7
    %v2243 = vsub.s32 %v2240, %v2242
    %v2244 = vrot.slane %v2234, %v2243
    %v2246 = vunpack.c.l.s4 1983009808
    %v2247 = vunpack.c.0.s8 %v2246
    %v2248 = vlaneseq
    %v2249 = vshrl.u32 %v2248, 7
    %v2250 = vsub.s32 %v2247, %v2249
    %v2251 = vrot.slane %v2235, %v2250
    %v2253 = vunpack.c.l.s4 1983009808
    %v2254 = vunpack.c.0.s8 %v2253
    %v2255 = vlaneseq
    %v2256 = vshrl.u32 %v2255, 7
    %v2257 = vsub.s32 %v2254, %v2256
    %v2258 = vrot.slane %v2236, %v2257
    %v2260 = vunpack.c.l.s4 1983009808
    %v2261 = vunpack.c.0.s8 %v2260
    %v2262 = vlaneseq
    %v2263 = vshrl.u32 %v2262, 7
    %v2264 = vsub.s32 %v2261, %v2263
    %v2265 = vrot.slane %v2237, %v2264
    %v2266 = vcombine.low %v2244, %v2258
    %v2267 = vcombine.high %v2244, %v2258
    %v2268 = vcombine.low %v2251, %v2265
    %v2269 = vcombine.high %v2251, %v2265
    %v2270 = vcombine.low %v743, %v748
    %v2271 = vcombine.high %v743, %v748
    %v2272 = vcombine.low %v753, %v758
    %v2273 = vcombine.high %v753, %v758
    %v2275 = vunpack.c.l.s4 1983009808
    %v2276 = vunpack.c.0.s8 %v2275
    %v2277 = vlaneseq
    %v2278 = vshrl.u32 %v2277, 7
    %v2279 = vsub.s32 %v2276, %v2278
    %v2280 = vrot.slane %v2270, %v2279
    %v2282 = vunpack.c.l.s4 1983009808
    %v2283 = vunpack.c.0.s8 %v2282
    %v2284 = vlaneseq
    %v2285 = vshrl.u32 %v2284, 7
    %v2286 = vsub.s32 %v2283, %v2285
    %v2287 = vrot.slane %v2271, %v2286
    %v2289 = vunpack.c.l.s4 1983009808
    %v2290 = vunpack.c.0.s8 %v2289
    %v2291 = vlaneseq
    %v2292 = vshrl.u32 %v2291, 7
    %v2293 = vsub.s32 %v2290, %v2292
    %v2294 = vrot.slane %v2272, %v2293
    %v2296 = vunpack.c.l.s4 1983009808
    %v2297 = vunpack.c.0.s8 %v2296
    %v2298 = vlaneseq
    %v2299 = vshrl.u32 %v2298, 7
    %v2300 = vsub.s32 %v2297, %v2299
    %v2301 = vrot.slane %v2273, %v2300
    %v2302 = vcombine.low %v2280, %v2294
    %v2303 = vcombine.high %v2280, %v2294
    %v2304 = vcombine.low %v2287, %v2301
    %v2305 = vcombine.high %v2287, %v2301
    %v2306 = vcombine.low %v744, %v749
    %v2307 = vcombine.high %v744, %v749
    %v2308 = vcombine.low %v754, %v759
    %v2309 = vcombine.high %v754, %v759
    %v2311 = vunpack.c.l.s4 1983009808
    %v2312 = vunpack.c.0.s8 %v2311
    %v2313 = vlaneseq
    %v2314 = vshrl.u32 %v2313, 7
    %v2315 = vsub.s32 %v2312, %v2314
    %v2316 = vrot.slane %v2306, %v2315
    %v2318 = vunpack.c.l.s4 1983009808
    %v2319 = vunpack.c.0.s8 %v2318
    %v2320 = vlaneseq
    %v2321 = vshrl.u32 %v2320, 7
    %v2322 = vsub.s32 %v2319, %v2321
    %v2323 = vrot.slane %v2307, %v2322
    %v2325 = vunpack.c.l.s4 1983009808
    %v2326 = vunpack.c.0.s8 %v2325
    %v2327 = vlaneseq
    %v2328 = vshrl.u32 %v2327, 7
    %v2329 = vsub.s32 %v2326, %v2328
    %v2330 = vrot.slane %v2308, %v2329
    %v2332 = vunpack.c.l.s4 1983009808
    %v2333 = vunpack.c.0.s8 %v2332
    %v2334 = vlaneseq
    %v2335 = vshrl.u32 %v2334, 7
    %v2336 = vsub.s32 %v2333, %v2335
    %v2337 = vrot.slane %v2309, %v2336
    %v2338 = vcombine.low %v2316, %v2330
    %v2339 = vcombine.high %v2316, %v2330
    %v2340 = vcombine.low %v2323, %v2337
    %v2341 = vcombine.high %v2323, %v2337
    %v2342 = vcombine.low %v745, %v750
    %v2343 = vcombine.high %v745, %v750
    %v2344 = vcombine.low %v755, %v760
    %v2345 = vcombine.high %v755, %v760
    %v2347 = vunpack.c.l.s4 1983009808
    %v2348 = vunpack.c.0.s8 %v2347
    %v2349 = vlaneseq
    %v2350 = vshrl.u32 %v2349, 7
    %v2351 = vsub.s32 %v2348, %v2350
    %v2352 = vrot.slane %v2342, %v2351
    %v2354 = vunpack.c.l.s4 1983009808
    %v2355 = vunpack.c.0.s8 %v2354
    %v2356 = vlaneseq
    %v2357 = vshrl.u32 %v2356, 7
    %v2358 = vsub.s32 %v2355, %v2357
    %v2359 = vrot.slane %v2343, %v2358
    %v2361 = vunpack.c.l.s4 1983009808
    %v2362 = vunpack.c.0.s8 %v2361
    %v2363 = vlaneseq
    %v2364 = vshrl.u32 %v2363, 7
    %v2365 = vsub.s32 %v2362, %v2364
    %v2366 = vrot.slane %v2344, %v2365
    %v2368 = vunpack.c.l.s4 1983009808
    %v2369 = vunpack.c.0.s8 %v2368
    %v2370 = vlaneseq
    %v2371 = vshrl.u32 %v2370, 7
    %v2372 = vsub.s32 %v2369, %v2371
    %v2373 = vrot.slane %v2345, %v2372
    %v2374 = vcombine.low %v2352, %v2366
    %v2375 = vcombine.high %v2352, %v2366
    %v2376 = vcombine.low %v2359, %v2373
    %v2377 = vcombine.high %v2359, %v2373
    %v2378 = vcombine.low %v746, %v751
    %v2379 = vcombine.low %v756, %v761
    %v2381 = vunpack.c.l.s4 1983009808
    %v2382 = vunpack.c.0.s8 %v2381
    %v2383 = vlaneseq
    %v2384 = vshrl.u32 %v2383, 7
    %v2385 = vsub.s32 %v2382, %v2384
    %v2386 = vrot.slane %v2378, %v2385
    %v2388 = vunpack.c.l.s4 1983009808
    %v2389 = vunpack.c.0.s8 %v2388
    %v2390 = vlaneseq
    %v2391 = vshrl.u32 %v2390, 7
    %v2392 = vsub.s32 %v2389, %v2391
    %v2393 = vrot.slane %v2379, %v2392
    %v2394 = vcombine.low %v2386, %v2393
    %v2395 = vcombine.high %v2386, %v2393
    %v2396 = vcombine.low %v762, %v767
    %v2397 = vcombine.high %v762, %v767
    %v2398 = vcombine.low %v772, %v777
    %v2399 = vcombine.high %v772, %v777
    %v2401 = vunpack.c.l.s4 1983009808
    %v2402 = vunpack.c.0.s8 %v2401
    %v2403 = vlaneseq
    %v2404 = vshrl.u32 %v2403, 7
    %v2405 = vsub.s32 %v2402, %v2404
    %v2406 = vrot.slane %v2396, %v2405
    %v2408 = vunpack.c.l.s4 1983009808
    %v2409 = vunpack.c.0.s8 %v2408
    %v2410 = vlaneseq
    %v2411 = vshrl.u32 %v2410, 7
    %v2412 = vsub.s32 %v2409, %v2411
    %v2413 = vrot.slane %v2397, %v2412
    %v2415 = vunpack.c.l.s4 1983009808
    %v2416 = vunpack.c.0.s8 %v2415
    %v2417 = vlaneseq
    %v2418 = vshrl.u32 %v2417, 7
    %v2419 = vsub.s32 %v2416, %v2418
    %v2420 = vrot.slane %v2398, %v2419
    %v2422 = vunpack.c.l.s4 1983009808
    %v2423 = vunpack.c.0.s8 %v2422
    %v2424 = vlaneseq
    %v2425 = vshrl.u32 %v2424, 7
    %v2426 = vsub.s32 %v2423, %v2425
    %v2427 = vrot.slane %v2399, %v2426
    %v2428 = vcombine.low %v2406, %v2420
    %v2429 = vcombine.high %v2406, %v2420
    %v2430 = vcombine.low %v2413, %v2427
    %v2431 = vcombine.high %v2413, %v2427
    %v2432 = vcombine.low %v763, %v768
    %v2433 = vcombine.high %v763, %v768
    %v2434 = vcombine.low %v773, %v778
    %v2435 = vcombine.high %v773, %v778
    %v2437 = vunpack.c.l.s4 1983009808
    %v2438 = vunpack.c.0.s8 %v2437
    %v2439 = vlaneseq
    %v2440 = vshrl.u32 %v2439, 7
    %v2441 = vsub.s32 %v2438, %v2440
    %v2442 = vrot.slane %v2432, %v2441
    %v2444 = vunpack.c.l.s4 1983009808
    %v2445 = vunpack.c.0.s8 %v2444
    %v2446 = vlaneseq
    %v2447 = vshrl.u32 %v2446, 7
    %v2448 = vsub.s32 %v2445, %v2447
    %v2449 = vrot.slane %v2433, %v2448
    %v2451 = vunpack.c.l.s4 1983009808
    %v2452 = vunpack.c.0.s8 %v2451
    %v2453 = vlaneseq
    %v2454 = vshrl.u32 %v2453, 7
    %v2455 = vsub.s32 %v2452, %v2454
    %v2456 = vrot.slane %v2434, %v2455
    %v2458 = vunpack.c.l.s4 1983009808
    %v2459 = vunpack.c.0.s8 %v2458
    %v2460 = vlaneseq
    %v2461 = vshrl.u32 %v2460, 7
    %v2462 = vsub.s32 %v2459, %v2461
    %v2463 = vrot.slane %v2435, %v2462
    %v2464 = vcombine.low %v2442, %v2456
    %v2465 = vcombine.high %v2442, %v2456
    %v2466 = vcombine.low %v2449, %v2463
    %v2467 = vcombine.high %v2449, %v2463
    %v2468 = vcombine.low %v764, %v769
    %v2469 = vcombine.high %v764, %v769
    %v2470 = vcombine.low %v774, %v779
    %v2471 = vcombine.high %v774, %v779
    %v2473 = vunpack.c.l.s4 1983009808
    %v2474 = vunpack.c.0.s8 %v2473
    %v2475 = vlaneseq
    %v2476 = vshrl.u32 %v2475, 7
    %v2477 = vsub.s32 %v2474, %v2476
    %v2478 = vrot.slane %v2468, %v2477
    %v2480 = vunpack.c.l.s4 1983009808
    %v2481 = vunpack.c.0.s8 %v2480
    %v2482 = vlaneseq
    %v2483 = vshrl.u32 %v2482, 7
    %v2484 = vsub.s32 %v2481, %v2483
    %v2485 = vrot.slane %v2469, %v2484
    %v2487 = vunpack.c.l.s4 1983009808
    %v2488 = vunpack.c.0.s8 %v2487
    %v2489 = vlaneseq
    %v2490 = vshrl.u32 %v2489, 7
    %v2491 = vsub.s32 %v2488, %v2490
    %v2492 = vrot.slane %v2470, %v2491
    %v2494 = vunpack.c.l.s4 1983009808
    %v2495 = vunpack.c.0.s8 %v2494
    %v2496 = vlaneseq
    %v2497 = vshrl.u32 %v2496, 7
    %v2498 = vsub.s32 %v2495, %v2497
    %v2499 = vrot.slane %v2471, %v2498
    %v2500 = vcombine.low %v2478, %v2492
    %v2501 = vcombine.high %v2478, %v2492
    %v2502 = vcombine.low %v2485, %v2499
    %v2503 = vcombine.high %v2485, %v2499
    %v2504 = vcombine.low %v765, %v770
    %v2505 = vcombine.high %v765, %v770
    %v2506 = vcombine.low %v775, %v780
    %v2507 = vcombine.high %v775, %v780
    %v2509 = vunpack.c.l.s4 1983009808
    %v2510 = vunpack.c.0.s8 %v2509
    %v2511 = vlaneseq
    %v2512 = vshrl.u32 %v2511, 7
    %v2513 = vsub.s32 %v2510, %v2512
    %v2514 = vrot.slane %v2504, %v2513
    %v2516 = vunpack.c.l.s4 1983009808
    %v2517 = vunpack.c.0.s8 %v2516
    %v2518 = vlaneseq
    %v2519 = vshrl.u32 %v2518, 7
    %v2520 = vsub.s32 %v2517, %v2519
    %v2521 = vrot.slane %v2505, %v2520
    %v2523 = vunpack.c.l.s4 1983009808
    %v2524 = vunpack.c.0.s8 %v2523
    %v2525 = vlaneseq
    %v2526 = vshrl.u32 %v2525, 7
    %v2527 = vsub.s32 %v2524, %v2526
    %v2528 = vrot.slane %v2506, %v2527
    %v2530 = vunpack.c.l.s4 1983009808
    %v2531 = vunpack.c.0.s8 %v2530
    %v2532 = vlaneseq
    %v2533 = vshrl.u32 %v2532, 7
    %v2534 = vsub.s32 %v2531, %v2533
    %v2535 = vrot.slane %v2507, %v2534
    %v2536 = vcombine.low %v2514, %v2528
    %v2537 = vcombine.high %v2514, %v2528
    %v2538 = vcombine.low %v2521, %v2535
    %v2539 = vcombine.high %v2521, %v2535
    %v2540 = vcombine.low %v766, %v771
    %v2541 = vcombine.low %v776, %v781
    %v2543 = vunpack.c.l.s4 1983009808
    %v2544 = vunpack.c.0.s8 %v2543
    %v2545 = vlaneseq
    %v2546 = vshrl.u32 %v2545, 7
    %v2547 = vsub.s32 %v2544, %v2546
    %v2548 = vrot.slane %v2540, %v2547
    %v2550 = vunpack.c.l.s4 1983009808
    %v2551 = vunpack.c.0.s8 %v2550
    %v2552 = vlaneseq
    %v2553 = vshrl.u32 %v2552, 7
    %v2554 = vsub.s32 %v2551, %v2553
    %v2555 = vrot.slane %v2541, %v2554
    %v2556 = vcombine.low %v2548, %v2555
    %v2557 = vcombine.high %v2548, %v2555
    %v2558 = vcombine.low %v782, %v787
    %v2559 = vcombine.high %v782, %v787
    %v2560 = vcombine.low %v792, %v797
    %v2561 = vcombine.high %v792, %v797
    %v2563 = vunpack.c.l.s4 1983009808
    %v2564 = vunpack.c.0.s8 %v2563
    %v2565 = vlaneseq
    %v2566 = vshrl.u32 %v2565, 7
    %v2567 = vsub.s32 %v2564, %v2566
    %v2568 = vrot.slane %v2558, %v2567
    %v2570 = vunpack.c.l.s4 1983009808
    %v2571 = vunpack.c.0.s8 %v2570
    %v2572 = vlaneseq
    %v2573 = vshrl.u32 %v2572, 7
    %v2574 = vsub.s32 %v2571, %v2573
    %v2575 = vrot.slane %v2559, %v2574
    %v2577 = vunpack.c.l.s4 1983009808
    %v2578 = vunpack.c.0.s8 %v2577
    %v2579 = vlaneseq
    %v2580 = vshrl.u32 %v2579, 7
    %v2581 = vsub.s32 %v2578, %v2580
    %v2582 = vrot.slane %v2560, %v2581
    %v2584 = vunpack.c.l.s4 1983009808
    %v2585 = vunpack.c.0.s8 %v2584
    %v2586 = vlaneseq
    %v2587 = vshrl.u32 %v2586, 7
    %v2588 = vsub.s32 %v2585, %v2587
    %v2589 = vrot.slane %v2561, %v2588
    %v2590 = vcombine.low %v2568, %v2582
    %v2591 = vcombine.high %v2568, %v2582
    %v2592 = vcombine.low %v2575, %v2589
    %v2593 = vcombine.high %v2575, %v2589
    %v2594 = vcombine.low %v783, %v788
    %v2595 = vcombine.high %v783, %v788
    %v2596 = vcombine.low %v793, %v798
    %v2597 = vcombine.high %v793, %v798
    %v2599 = vunpack.c.l.s4 1983009808
    %v2600 = vunpack.c.0.s8 %v2599
    %v2601 = vlaneseq
    %v2602 = vshrl.u32 %v2601, 7
    %v2603 = vsub.s32 %v2600, %v2602
    %v2604 = vrot.slane %v2594, %v2603
    %v2606 = vunpack.c.l.s4 1983009808
    %v2607 = vunpack.c.0.s8 %v2606
    %v2608 = vlaneseq
    %v2609 = vshrl.u32 %v2608, 7
    %v2610 = vsub.s32 %v2607, %v2609
    %v2611 = vrot.slane %v2595, %v2610
    %v2613 = vunpack.c.l.s4 1983009808
    %v2614 = vunpack.c.0.s8 %v2613
    %v2615 = vlaneseq
    %v2616 = vshrl.u32 %v2615, 7
    %v2617 = vsub.s32 %v2614, %v2616
    %v2618 = vrot.slane %v2596, %v2617
    %v2620 = vunpack.c.l.s4 1983009808
    %v2621 = vunpack.c.0.s8 %v2620
    %v2622 = vlaneseq
    %v2623 = vshrl.u32 %v2622, 7
    %v2624 = vsub.s32 %v2621, %v2623
    %v2625 = vrot.slane %v2597, %v2624
    %v2626 = vcombine.low %v2604, %v2618
    %v2627 = vcombine.high %v2604, %v2618
    %v2628 = vcombine.low %v2611, %v2625
    %v2629 = vcombine.high %v2611, %v2625
    %v2630 = vcombine.low %v784, %v789
    %v2631 = vcombine.high %v784, %v789
    %v2632 = vcombine.low %v794, %v799
    %v2633 = vcombine.high %v794, %v799
    %v2635 = vunpack.c.l.s4 1983009808
    %v2636 = vunpack.c.0.s8 %v2635
    %v2637 = vlaneseq
    %v2638 = vshrl.u32 %v2637, 7
    %v2639 = vsub.s32 %v2636, %v2638
    %v2640 = vrot.slane %v2630, %v2639
    %v2642 = vunpack.c.l.s4 1983009808
    %v2643 = vunpack.c.0.s8 %v2642
    %v2644 = vlaneseq
    %v2645 = vshrl.u32 %v2644, 7
    %v2646 = vsub.s32 %v2643, %v2645
    %v2647 = vrot.slane %v2631, %v2646
    %v2649 = vunpack.c.l.s4 1983009808
    %v2650 = vunpack.c.0.s8 %v2649
    %v2651 = vlaneseq
    %v2652 = vshrl.u32 %v2651, 7
    %v2653 = vsub.s32 %v2650, %v2652
    %v2654 = vrot.slane %v2632, %v2653
    %v2656 = vunpack.c.l.s4 1983009808
    %v2657 = vunpack.c.0.s8 %v2656
    %v2658 = vlaneseq
    %v2659 = vshrl.u32 %v2658, 7
    %v2660 = vsub.s32 %v2657, %v2659
    %v2661 = vrot.slane %v2633, %v2660
    %v2662 = vcombine.low %v2640, %v2654
    %v2663 = vcombine.high %v2640, %v2654
    %v2664 = vcombine.low %v2647, %v2661
    %v2665 = vcombine.high %v2647, %v2661
    %v2666 = vcombine.low %v785, %v790
    %v2667 = vcombine.high %v785, %v790
    %v2668 = vcombine.low %v795, %v800
    %v2669 = vcombine.high %v795, %v800
    %v2671 = vunpack.c.l.s4 1983009808
    %v2672 = vunpack.c.0.s8 %v2671
    %v2673 = vlaneseq
    %v2674 = vshrl.u32 %v2673, 7
    %v2675 = vsub.s32 %v2672, %v2674
    %v2676 = vrot.slane %v2666, %v2675
    %v2678 = vunpack.c.l.s4 1983009808
    %v2679 = vunpack.c.0.s8 %v2678
    %v2680 = vlaneseq
    %v2681 = vshrl.u32 %v2680, 7
    %v2682 = vsub.s32 %v2679, %v2681
    %v2683 = vrot.slane %v2667, %v2682
    %v2685 = vunpack.c.l.s4 1983009808
    %v2686 = vunpack.c.0.s8 %v2685
    %v2687 = vlaneseq
    %v2688 = vshrl.u32 %v2687, 7
    %v2689 = vsub.s32 %v2686, %v2688
    %v2690 = vrot.slane %v2668, %v2689
    %v2692 = vunpack.c.l.s4 1983009808
    %v2693 = vunpack.c.0.s8 %v2692
    %v2694 = vlaneseq
    %v2695 = vshrl.u32 %v2694, 7
    %v2696 = vsub.s32 %v2693, %v2695
    %v2697 = vrot.slane %v2669, %v2696
    %v2698 = vcombine.low %v2676, %v2690
    %v2699 = vcombine.high %v2676, %v2690
    %v2700 = vcombine.low %v2683, %v2697
    %v2701 = vcombine.high %v2683, %v2697
    %v2702 = vcombine.low %v786, %v791
    %v2703 = vcombine.low %v796, %v801
    %v2705 = vunpack.c.l.s4 1983009808
    %v2706 = vunpack.c.0.s8 %v2705
    %v2707 = vlaneseq
    %v2708 = vshrl.u32 %v2707, 7
    %v2709 = vsub.s32 %v2706, %v2708
    %v2710 = vrot.slane %v2702, %v2709
    %v2712 = vunpack.c.l.s4 1983009808
    %v2713 = vunpack.c.0.s8 %v2712
    %v2714 = vlaneseq
    %v2715 = vshrl.u32 %v2714, 7
    %v2716 = vsub.s32 %v2713, %v2715
    %v2717 = vrot.slane %v2703, %v2716
    %v2718 = vcombine.low %v2710, %v2717
    %v2719 = vcombine.high %v2710, %v2717
    %v2720 = vcombine.low %v802, %v807
    %v2721 = vcombine.high %v802, %v807
    %v2722 = vcombine.low %v812, %v817
    %v2723 = vcombine.high %v812, %v817
    %v2725 = vunpack.c.l.s4 1983009808
    %v2726 = vunpack.c.0.s8 %v2725
    %v2727 = vlaneseq
    %v2728 = vshrl.u32 %v2727, 7
    %v2729 = vsub.s32 %v2726, %v2728
    %v2730 = vrot.slane %v2720, %v2729
    %v2732 = vunpack.c.l.s4 1983009808
    %v2733 = vunpack.c.0.s8 %v2732
    %v2734 = vlaneseq
    %v2735 = vshrl.u32 %v2734, 7
    %v2736 = vsub.s32 %v2733, %v2735
    %v2737 = vrot.slane %v2721, %v2736
    %v2739 = vunpack.c.l.s4 1983009808
    %v2740 = vunpack.c.0.s8 %v2739
    %v2741 = vlaneseq
    %v2742 = vshrl.u32 %v2741, 7
    %v2743 = vsub.s32 %v2740, %v2742
    %v2744 = vrot.slane %v2722, %v2743
    %v2746 = vunpack.c.l.s4 1983009808
    %v2747 = vunpack.c.0.s8 %v2746
    %v2748 = vlaneseq
    %v2749 = vshrl.u32 %v2748, 7
    %v2750 = vsub.s32 %v2747, %v2749
    %v2751 = vrot.slane %v2723, %v2750
    %v2752 = vcombine.low %v2730, %v2744
    %v2753 = vcombine.high %v2730, %v2744
    %v2754 = vcombine.low %v2737, %v2751
    %v2755 = vcombine.high %v2737, %v2751
    %v2756 = vcombine.low %v803, %v808
    %v2757 = vcombine.high %v803, %v808
    %v2758 = vcombine.low %v813, %v818
    %v2759 = vcombine.high %v813, %v818
    %v2761 = vunpack.c.l.s4 1983009808
    %v2762 = vunpack.c.0.s8 %v2761
    %v2763 = vlaneseq
    %v2764 = vshrl.u32 %v2763, 7
    %v2765 = vsub.s32 %v2762, %v2764
    %v2766 = vrot.slane %v2756, %v2765
    %v2768 = vunpack.c.l.s4 1983009808
    %v2769 = vunpack.c.0.s8 %v2768
    %v2770 = vlaneseq
    %v2771 = vshrl.u32 %v2770, 7
    %v2772 = vsub.s32 %v2769, %v2771
    %v2773 = vrot.slane %v2757, %v2772
    %v2775 = vunpack.c.l.s4 1983009808
    %v2776 = vunpack.c.0.s8 %v2775
    %v2777 = vlaneseq
    %v2778 = vshrl.u32 %v2777, 7
    %v2779 = vsub.s32 %v2776, %v2778
    %v2780 = vrot.slane %v2758, %v2779
    %v2782 = vunpack.c.l.s4 1983009808
    %v2783 = vunpack.c.0.s8 %v2782
    %v2784 = vlaneseq
    %v2785 = vshrl.u32 %v2784, 7
    %v2786 = vsub.s32 %v2783, %v2785
    %v2787 = vrot.slane %v2759, %v2786
    %v2788 = vcombine.low %v2766, %v2780
    %v2789 = vcombine.high %v2766, %v2780
    %v2790 = vcombine.low %v2773, %v2787
    %v2791 = vcombine.high %v2773, %v2787
    %v2792 = vcombine.low %v804, %v809
    %v2793 = vcombine.high %v804, %v809
    %v2794 = vcombine.low %v814, %v819
    %v2795 = vcombine.high %v814, %v819
    %v2797 = vunpack.c.l.s4 1983009808
    %v2798 = vunpack.c.0.s8 %v2797
    %v2799 = vlaneseq
    %v2800 = vshrl.u32 %v2799, 7
    %v2801 = vsub.s32 %v2798, %v2800
    %v2802 = vrot.slane %v2792, %v2801
    %v2804 = vunpack.c.l.s4 1983009808
    %v2805 = vunpack.c.0.s8 %v2804
    %v2806 = vlaneseq
    %v2807 = vshrl.u32 %v2806, 7
    %v2808 = vsub.s32 %v2805, %v2807
    %v2809 = vrot.slane %v2793, %v2808
    %v2811 = vunpack.c.l.s4 1983009808
    %v2812 = vunpack.c.0.s8 %v2811
    %v2813 = vlaneseq
    %v2814 = vshrl.u32 %v2813, 7
    %v2815 = vsub.s32 %v2812, %v2814
    %v2816 = vrot.slane %v2794, %v2815
    %v2818 = vunpack.c.l.s4 1983009808
    %v2819 = vunpack.c.0.s8 %v2818
    %v2820 = vlaneseq
    %v2821 = vshrl.u32 %v2820, 7
    %v2822 = vsub.s32 %v2819, %v2821
    %v2823 = vrot.slane %v2795, %v2822
    %v2824 = vcombine.low %v2802, %v2816
    %v2825 = vcombine.high %v2802, %v2816
    %v2826 = vcombine.low %v2809, %v2823
    %v2827 = vcombine.high %v2809, %v2823
    %v2828 = vcombine.low %v805, %v810
    %v2829 = vcombine.high %v805, %v810
    %v2830 = vcombine.low %v815, %v820
    %v2831 = vcombine.high %v815, %v820
    %v2833 = vunpack.c.l.s4 1983009808
    %v2834 = vunpack.c.0.s8 %v2833
    %v2835 = vlaneseq
    %v2836 = vshrl.u32 %v2835, 7
    %v2837 = vsub.s32 %v2834, %v2836
    %v2838 = vrot.slane %v2828, %v2837
    %v2840 = vunpack.c.l.s4 1983009808
    %v2841 = vunpack.c.0.s8 %v2840
    %v2842 = vlaneseq
    %v2843 = vshrl.u32 %v2842, 7
    %v2844 = vsub.s32 %v2841, %v2843
    %v2845 = vrot.slane %v2829, %v2844
    %v2847 = vunpack.c.l.s4 1983009808
    %v2848 = vunpack.c.0.s8 %v2847
    %v2849 = vlaneseq
    %v2850 = vshrl.u32 %v2849, 7
    %v2851 = vsub.s32 %v2848, %v2850
    %v2852 = vrot.slane %v2830, %v2851
    %v2854 = vunpack.c.l.s4 1983009808
    %v2855 = vunpack.c.0.s8 %v2854
    %v2856 = vlaneseq
    %v2857 = vshrl.u32 %v2856, 7
    %v2858 = vsub.s32 %v2855, %v2857
    %v2859 = vrot.slane %v2831, %v2858
    %v2860 = vcombine.low %v2838, %v2852
    %v2861 = vcombine.high %v2838, %v2852
    %v2862 = vcombine.low %v2845, %v2859
    %v2863 = vcombine.high %v2845, %v2859
    %v2864 = vcombine.low %v806, %v811
    %v2865 = vcombine.low %v816, %v821
    %v2867 = vunpack.c.l.s4 1983009808
    %v2868 = vunpack.c.0.s8 %v2867
    %v2869 = vlaneseq
    %v2870 = vshrl.u32 %v2869, 7
    %v2871 = vsub.s32 %v2868, %v2870
    %v2872 = vrot.slane %v2864, %v2871
    %v2874 = vunpack.c.l.s4 1983009808
    %v2875 = vunpack.c.0.s8 %v2874
    %v2876 = vlaneseq
    %v2877 = vshrl.u32 %v2876, 7
    %v2878 = vsub.s32 %v2875, %v2877
    %v2879 = vrot.slane %v2865, %v2878
    %v2880 = vcombine.low %v2872, %v2879
    %v2881 = vcombine.high %v2872, %v2879
    %v2882 = vcombine.low %v822, %v827
    %v2883 = vcombine.high %v822, %v827
    %v2884 = vcombine.low %v832, %v837
    %v2885 = vcombine.high %v832, %v837
    %v2887 = vunpack.c.l.s4 1983009808
    %v2888 = vunpack.c.0.s8 %v2887
    %v2889 = vlaneseq
    %v2890 = vshrl.u32 %v2889, 7
    %v2891 = vsub.s32 %v2888, %v2890
    %v2892 = vrot.slane %v2882, %v2891
    %v2894 = vunpack.c.l.s4 1983009808
    %v2895 = vunpack.c.0.s8 %v2894
    %v2896 = vlaneseq
    %v2897 = vshrl.u32 %v2896, 7
    %v2898 = vsub.s32 %v2895, %v2897
    %v2899 = vrot.slane %v2883, %v2898
    %v2901 = vunpack.c.l.s4 1983009808
    %v2902 = vunpack.c.0.s8 %v2901
    %v2903 = vlaneseq
    %v2904 = vshrl.u32 %v2903, 7
    %v2905 = vsub.s32 %v2902, %v2904
    %v2906 = vrot.slane %v2884, %v2905
    %v2908 = vunpack.c.l.s4 1983009808
    %v2909 = vunpack.c.0.s8 %v2908
    %v2910 = vlaneseq
    %v2911 = vshrl.u32 %v2910, 7
    %v2912 = vsub.s32 %v2909, %v2911
    %v2913 = vrot.slane %v2885, %v2912
    %v2914 = vcombine.low %v2892, %v2906
    %v2915 = vcombine.high %v2892, %v2906
    %v2916 = vcombine.low %v2899, %v2913
    %v2917 = vcombine.high %v2899, %v2913
    %v2918 = vcombine.low %v823, %v828
    %v2919 = vcombine.high %v823, %v828
    %v2920 = vcombine.low %v833, %v838
    %v2921 = vcombine.high %v833, %v838
    %v2923 = vunpack.c.l.s4 1983009808
    %v2924 = vunpack.c.0.s8 %v2923
    %v2925 = vlaneseq
    %v2926 = vshrl.u32 %v2925, 7
    %v2927 = vsub.s32 %v2924, %v2926
    %v2928 = vrot.slane %v2918, %v2927
    %v2930 = vunpack.c.l.s4 1983009808
    %v2931 = vunpack.c.0.s8 %v2930
    %v2932 = vlaneseq
    %v2933 = vshrl.u32 %v2932, 7
    %v2934 = vsub.s32 %v2931, %v2933
    %v2935 = vrot.slane %v2919, %v2934
    %v2937 = vunpack.c.l.s4 1983009808
    %v2938 = vunpack.c.0.s8 %v2937
    %v2939 = vlaneseq
    %v2940 = vshrl.u32 %v2939, 7
    %v2941 = vsub.s32 %v2938, %v2940
    %v2942 = vrot.slane %v2920, %v2941
    %v2944 = vunpack.c.l.s4 1983009808
    %v2945 = vunpack.c.0.s8 %v2944
    %v2946 = vlaneseq
    %v2947 = vshrl.u32 %v2946, 7
    %v2948 = vsub.s32 %v2945, %v2947
    %v2949 = vrot.slane %v2921, %v2948
    %v2950 = vcombine.low %v2928, %v2942
    %v2951 = vcombine.high %v2928, %v2942
    %v2952 = vcombine.low %v2935, %v2949
    %v2953 = vcombine.high %v2935, %v2949
    %v2954 = vcombine.low %v824, %v829
    %v2955 = vcombine.high %v824, %v829
    %v2956 = vcombine.low %v834, %v839
    %v2957 = vcombine.high %v834, %v839
    %v2959 = vunpack.c.l.s4 1983009808
    %v2960 = vunpack.c.0.s8 %v2959
    %v2961 = vlaneseq
    %v2962 = vshrl.u32 %v2961, 7
    %v2963 = vsub.s32 %v2960, %v2962
    %v2964 = vrot.slane %v2954, %v2963
    %v2966 = vunpack.c.l.s4 1983009808
    %v2967 = vunpack.c.0.s8 %v2966
    %v2968 = vlaneseq
    %v2969 = vshrl.u32 %v2968, 7
    %v2970 = vsub.s32 %v2967, %v2969
    %v2971 = vrot.slane %v2955, %v2970
    %v2973 = vunpack.c.l.s4 1983009808
    %v2974 = vunpack.c.0.s8 %v2973
    %v2975 = vlaneseq
    %v2976 = vshrl.u32 %v2975, 7
    %v2977 = vsub.s32 %v2974, %v2976
    %v2978 = vrot.slane %v2956, %v2977
    %v2980 = vunpack.c.l.s4 1983009808
    %v2981 = vunpack.c.0.s8 %v2980
    %v2982 = vlaneseq
    %v2983 = vshrl.u32 %v2982, 7
    %v2984 = vsub.s32 %v2981, %v2983
    %v2985 = vrot.slane %v2957, %v2984
    %v2986 = vcombine.low %v2964, %v2978
    %v2987 = vcombine.high %v2964, %v2978
    %v2988 = vcombine.low %v2971, %v2985
    %v2989 = vcombine.high %v2971, %v2985
    %v2990 = vcombine.low %v825, %v830
    %v2991 = vcombine.high %v825, %v830
    %v2992 = vcombine.low %v835, %v840
    %v2993 = vcombine.high %v835, %v840
    %v2995 = vunpack.c.l.s4 1983009808
    %v2996 = vunpack.c.0.s8 %v2995
    %v2997 = vlaneseq
    %v2998 = vshrl.u32 %v2997, 7
    %v2999 = vsub.s32 %v2996, %v2998
    %v3000 = vrot.slane %v2990, %v2999
    %v3002 = vunpack.c.l.s4 1983009808
    %v3003 = vunpack.c.0.s8 %v3002
    %v3004 = vlaneseq
    %v3005 = vshrl.u32 %v3004, 7
    %v3006 = vsub.s32 %v3003, %v3005
    %v3007 = vrot.slane %v2991, %v3006
    %v3009 = vunpack.c.l.s4 1983009808
    %v3010 = vunpack.c.0.s8 %v3009
    %v3011 = vlaneseq
    %v3012 = vshrl.u32 %v3011, 7
    %v3013 = vsub.s32 %v3010, %v3012
    %v3014 = vrot.slane %v2992, %v3013
    %v3016 = vunpack.c.l.s4 1983009808
    %v3017 = vunpack.c.0.s8 %v3016
    %v3018 = vlaneseq
    %v3019 = vshrl.u32 %v3018, 7
    %v3020 = vsub.s32 %v3017, %v3019
    %v3021 = vrot.slane %v2993, %v3020
    %v3022 = vcombine.low %v3000, %v3014
    %v3023 = vcombine.high %v3000, %v3014
    %v3024 = vcombine.low %v3007, %v3021
    %v3025 = vcombine.high %v3007, %v3021
    %v3026 = vcombine.low %v826, %v831
    %v3027 = vcombine.low %v836, %v841
    %v3029 = vunpack.c.l.s4 1983009808
    %v3030 = vunpack.c.0.s8 %v3029
    %v3031 = vlaneseq
    %v3032 = vshrl.u32 %v3031, 7
    %v3033 = vsub.s32 %v3030, %v3032
    %v3034 = vrot.slane %v3026, %v3033
    %v3036 = vunpack.c.l.s4 1983009808
    %v3037 = vunpack.c.0.s8 %v3036
    %v3038 = vlaneseq
    %v3039 = vshrl.u32 %v3038, 7
    %v3040 = vsub.s32 %v3037, %v3039
    %v3041 = vrot.slane %v3027, %v3040
    %v3042 = vcombine.low %v3034, %v3041
    %v3043 = vcombine.high %v3034, %v3041
    %v3044 = vcombine.low %v842, %v847
    %v3045 = vcombine.high %v842, %v847
    %v3046 = vcombine.low %v852, %v857
    %v3047 = vcombine.high %v852, %v857
    %v3049 = vunpack.c.l.s4 1983009808
    %v3050 = vunpack.c.0.s8 %v3049
    %v3051 = vlaneseq
    %v3052 = vshrl.u32 %v3051, 7
    %v3053 = vsub.s32 %v3050, %v3052
    %v3054 = vrot.slane %v3044, %v3053
    %v3056 = vunpack.c.l.s4 1983009808
    %v3057 = vunpack.c.0.s8 %v3056
    %v3058 = vlaneseq
    %v3059 = vshrl.u32 %v3058, 7
    %v3060 = vsub.s32 %v3057, %v3059
    %v3061 = vrot.slane %v3045, %v3060
    %v3063 = vunpack.c.l.s4 1983009808
    %v3064 = vunpack.c.0.s8 %v3063
    %v3065 = vlaneseq
    %v3066 = vshrl.u32 %v3065, 7
    %v3067 = vsub.s32 %v3064, %v3066
    %v3068 = vrot.slane %v3046, %v3067
    %v3070 = vunpack.c.l.s4 1983009808
    %v3071 = vunpack.c.0.s8 %v3070
    %v3072 = vlaneseq
    %v3073 = vshrl.u32 %v3072, 7
    %v3074 = vsub.s32 %v3071, %v3073
    %v3075 = vrot.slane %v3047, %v3074
    %v3076 = vcombine.low %v3054, %v3068
    %v3077 = vcombine.high %v3054, %v3068
    %v3078 = vcombine.low %v3061, %v3075
    %v3079 = vcombine.high %v3061, %v3075
    %v3080 = vcombine.low %v843, %v848
    %v3081 = vcombine.high %v843, %v848
    %v3082 = vcombine.low %v853, %v858
    %v3083 = vcombine.high %v853, %v858
    %v3085 = vunpack.c.l.s4 1983009808
    %v3086 = vunpack.c.0.s8 %v3085
    %v3087 = vlaneseq
    %v3088 = vshrl.u32 %v3087, 7
    %v3089 = vsub.s32 %v3086, %v3088
    %v3090 = vrot.slane %v3080, %v3089
    %v3092 = vunpack.c.l.s4 1983009808
    %v3093 = vunpack.c.0.s8 %v3092
    %v3094 = vlaneseq
    %v3095 = vshrl.u32 %v3094, 7
    %v3096 = vsub.s32 %v3093, %v3095
    %v3097 = vrot.slane %v3081, %v3096
    %v3099 = vunpack.c.l.s4 1983009808
    %v3100 = vunpack.c.0.s8 %v3099
    %v3101 = vlaneseq
    %v3102 = vshrl.u32 %v3101, 7
    %v3103 = vsub.s32 %v3100, %v3102
    %v3104 = vrot.slane %v3082, %v3103
    %v3106 = vunpack.c.l.s4 1983009808
    %v3107 = vunpack.c.0.s8 %v3106
    %v3108 = vlaneseq
    %v3109 = vshrl.u32 %v3108, 7
    %v3110 = vsub.s32 %v3107, %v3109
    %v3111 = vrot.slane %v3083, %v3110
    %v3112 = vcombine.low %v3090, %v3104
    %v3113 = vcombine.high %v3090, %v3104
    %v3114 = vcombine.low %v3097, %v3111
    %v3115 = vcombine.high %v3097, %v3111
    %v3116 = vcombine.low %v844, %v849
    %v3117 = vcombine.high %v844, %v849
    %v3118 = vcombine.low %v854, %v859
    %v3119 = vcombine.high %v854, %v859
    %v3121 = vunpack.c.l.s4 1983009808
    %v3122 = vunpack.c.0.s8 %v3121
    %v3123 = vlaneseq
    %v3124 = vshrl.u32 %v3123, 7
    %v3125 = vsub.s32 %v3122, %v3124
    %v3126 = vrot.slane %v3116, %v3125
    %v3128 = vunpack.c.l.s4 1983009808
    %v3129 = vunpack.c.0.s8 %v3128
    %v3130 = vlaneseq
    %v3131 = vshrl.u32 %v3130, 7
    %v3132 = vsub.s32 %v3129, %v3131
    %v3133 = vrot.slane %v3117, %v3132
    %v3135 = vunpack.c.l.s4 1983009808
    %v3136 = vunpack.c.0.s8 %v3135
    %v3137 = vlaneseq
    %v3138 = vshrl.u32 %v3137, 7
    %v3139 = vsub.s32 %v3136, %v3138
    %v3140 = vrot.slane %v3118, %v3139
    %v3142 = vunpack.c.l.s4 1983009808
    %v3143 = vunpack.c.0.s8 %v3142
    %v3144 = vlaneseq
    %v3145 = vshrl.u32 %v3144, 7
    %v3146 = vsub.s32 %v3143, %v3145
    %v3147 = vrot.slane %v3119, %v3146
    %v3148 = vcombine.low %v3126, %v3140
    %v3149 = vcombine.high %v3126, %v3140
    %v3150 = vcombine.low %v3133, %v3147
    %v3151 = vcombine.high %v3133, %v3147
    %v3152 = vcombine.low %v845, %v850
    %v3153 = vcombine.high %v845, %v850
    %v3154 = vcombine.low %v855, %v860
    %v3155 = vcombine.high %v855, %v860
    %v3157 = vunpack.c.l.s4 1983009808
    %v3158 = vunpack.c.0.s8 %v3157
    %v3159 = vlaneseq
    %v3160 = vshrl.u32 %v3159, 7
    %v3161 = vsub.s32 %v3158, %v3160
    %v3162 = vrot.slane %v3152, %v3161
    %v3164 = vunpack.c.l.s4 1983009808
    %v3165 = vunpack.c.0.s8 %v3164
    %v3166 = vlaneseq
    %v3167 = vshrl.u32 %v3166, 7
    %v3168 = vsub.s32 %v3165, %v3167
    %v3169 = vrot.slane %v3153, %v3168
    %v3171 = vunpack.c.l.s4 1983009808
    %v3172 = vunpack.c.0.s8 %v3171
    %v3173 = vlaneseq
    %v3174 = vshrl.u32 %v3173, 7
    %v3175 = vsub.s32 %v3172, %v3174
    %v3176 = vrot.slane %v3154, %v3175
    %v3178 = vunpack.c.l.s4 1983009808
    %v3179 = vunpack.c.0.s8 %v3178
    %v3180 = vlaneseq
    %v3181 = vshrl.u32 %v3180, 7
    %v3182 = vsub.s32 %v3179, %v3181
    %v3183 = vrot.slane %v3155, %v3182
    %v3184 = vcombine.low %v3162, %v3176
    %v3185 = vcombine.high %v3162, %v3176
    %v3186 = vcombine.low %v3169, %v3183
    %v3187 = vcombine.high %v3169, %v3183
    %v3188 = vcombine.low %v846, %v851
    %v3189 = vcombine.low %v856, %v861
    %v3191 = vunpack.c.l.s4 1983009808
    %v3192 = vunpack.c.0.s8 %v3191
    %v3193 = vlaneseq
    %v3194 = vshrl.u32 %v3193, 7
    %v3195 = vsub.s32 %v3192, %v3194
    %v3196 = vrot.slane %v3188, %v3195
    %v3198 = vunpack.c.l.s4 1983009808
    %v3199 = vunpack.c.0.s8 %v3198
    %v3200 = vlaneseq
    %v3201 = vshrl.u32 %v3200, 7
    %v3202 = vsub.s32 %v3199, %v3201
    %v3203 = vrot.slane %v3189, %v3202
    %v3204 = vcombine.low %v3196, %v3203
    %v3205 = vcombine.high %v3196, %v3203
    %v3206 = vcombine.low %v862, %v867
    %v3207 = vcombine.high %v862, %v867
    %v3208 = vcombine.low %v872, %v877
    %v3209 = vcombine.high %v872, %v877
    %v3211 = vunpack.c.l.s4 1983009808
    %v3212 = vunpack.c.0.s8 %v3211
    %v3213 = vlaneseq
    %v3214 = vshrl.u32 %v3213, 7
    %v3215 = vsub.s32 %v3212, %v3214
    %v3216 = vrot.slane %v3206, %v3215
    %v3218 = vunpack.c.l.s4 1983009808
    %v3219 = vunpack.c.0.s8 %v3218
    %v3220 = vlaneseq
    %v3221 = vshrl.u32 %v3220, 7
    %v3222 = vsub.s32 %v3219, %v3221
    %v3223 = vrot.slane %v3207, %v3222
    %v3225 = vunpack.c.l.s4 1983009808
    %v3226 = vunpack.c.0.s8 %v3225
    %v3227 = vlaneseq
    %v3228 = vshrl.u32 %v3227, 7
    %v3229 = vsub.s32 %v3226, %v3228
    %v3230 = vrot.slane %v3208, %v3229
    %v3232 = vunpack.c.l.s4 1983009808
    %v3233 = vunpack.c.0.s8 %v3232
    %v3234 = vlaneseq
    %v3235 = vshrl.u32 %v3234, 7
    %v3236 = vsub.s32 %v3233, %v3235
    %v3237 = vrot.slane %v3209, %v3236
    %v3238 = vcombine.low %v3216, %v3230
    %v3239 = vcombine.high %v3216, %v3230
    %v3240 = vcombine.low %v3223, %v3237
    %v3241 = vcombine.high %v3223, %v3237
    %v3242 = vcombine.low %v863, %v868
    %v3243 = vcombine.high %v863, %v868
    %v3244 = vcombine.low %v873, %v878
    %v3245 = vcombine.high %v873, %v878
    %v3247 = vunpack.c.l.s4 1983009808
    %v3248 = vunpack.c.0.s8 %v3247
    %v3249 = vlaneseq
    %v3250 = vshrl.u32 %v3249, 7
    %v3251 = vsub.s32 %v3248, %v3250
    %v3252 = vrot.slane %v3242, %v3251
    %v3254 = vunpack.c.l.s4 1983009808
    %v3255 = vunpack.c.0.s8 %v3254
    %v3256 = vlaneseq
    %v3257 = vshrl.u32 %v3256, 7
    %v3258 = vsub.s32 %v3255, %v3257
    %v3259 = vrot.slane %v3243, %v3258
    %v3261 = vunpack.c.l.s4 1983009808
    %v3262 = vunpack.c.0.s8 %v3261
    %v3263 = vlaneseq
    %v3264 = vshrl.u32 %v3263, 7
    %v3265 = vsub.s32 %v3262, %v3264
    %v3266 = vrot.slane %v3244, %v3265
    %v3268 = vunpack.c.l.s4 1983009808
    %v3269 = vunpack.c.0.s8 %v3268
    %v3270 = vlaneseq
    %v3271 = vshrl.u32 %v3270, 7
    %v3272 = vsub.s32 %v3269, %v3271
    %v3273 = vrot.slane %v3245, %v3272
    %v3274 = vcombine.low %v3252, %v3266
    %v3275 = vcombine.high %v3252, %v3266
    %v3276 = vcombine.low %v3259, %v3273
    %v3277 = vcombine.high %v3259, %v3273
    %v3278 = vcombine.low %v864, %v869
    %v3279 = vcombine.high %v864, %v869
    %v3280 = vcombine.low %v874, %v879
    %v3281 = vcombine.high %v874, %v879
    %v3283 = vunpack.c.l.s4 1983009808
    %v3284 = vunpack.c.0.s8 %v3283
    %v3285 = vlaneseq
    %v3286 = vshrl.u32 %v3285, 7
    %v3287 = vsub.s32 %v3284, %v3286
    %v3288 = vrot.slane %v3278, %v3287
    %v3290 = vunpack.c.l.s4 1983009808
    %v3291 = vunpack.c.0.s8 %v3290
    %v3292 = vlaneseq
    %v3293 = vshrl.u32 %v3292, 7
    %v3294 = vsub.s32 %v3291, %v3293
    %v3295 = vrot.slane %v3279, %v3294
    %v3297 = vunpack.c.l.s4 1983009808
    %v3298 = vunpack.c.0.s8 %v3297
    %v3299 = vlaneseq
    %v3300 = vshrl.u32 %v3299, 7
    %v3301 = vsub.s32 %v3298, %v3300
    %v3302 = vrot.slane %v3280, %v3301
    %v3304 = vunpack.c.l.s4 1983009808
    %v3305 = vunpack.c.0.s8 %v3304
    %v3306 = vlaneseq
    %v3307 = vshrl.u32 %v3306, 7
    %v3308 = vsub.s32 %v3305, %v3307
    %v3309 = vrot.slane %v3281, %v3308
    %v3310 = vcombine.low %v3288, %v3302
    %v3311 = vcombine.high %v3288, %v3302
    %v3312 = vcombine.low %v3295, %v3309
    %v3313 = vcombine.high %v3295, %v3309
    %v3314 = vcombine.low %v865, %v870
    %v3315 = vcombine.high %v865, %v870
    %v3316 = vcombine.low %v875, %v880
    %v3317 = vcombine.high %v875, %v880
    %v3319 = vunpack.c.l.s4 1983009808
    %v3320 = vunpack.c.0.s8 %v3319
    %v3321 = vlaneseq
    %v3322 = vshrl.u32 %v3321, 7
    %v3323 = vsub.s32 %v3320, %v3322
    %v3324 = vrot.slane %v3314, %v3323
    %v3326 = vunpack.c.l.s4 1983009808
    %v3327 = vunpack.c.0.s8 %v3326
    %v3328 = vlaneseq
    %v3329 = vshrl.u32 %v3328, 7
    %v3330 = vsub.s32 %v3327, %v3329
    %v3331 = vrot.slane %v3315, %v3330
    %v3333 = vunpack.c.l.s4 1983009808
    %v3334 = vunpack.c.0.s8 %v3333
    %v3335 = vlaneseq
    %v3336 = vshrl.u32 %v3335, 7
    %v3337 = vsub.s32 %v3334, %v3336
    %v3338 = vrot.slane %v3316, %v3337
    %v3340 = vunpack.c.l.s4 1983009808
    %v3341 = vunpack.c.0.s8 %v3340
    %v3342 = vlaneseq
    %v3343 = vshrl.u32 %v3342, 7
    %v3344 = vsub.s32 %v3341, %v3343
    %v3345 = vrot.slane %v3317, %v3344
    %v3346 = vcombine.low %v3324, %v3338
    %v3347 = vcombine.high %v3324, %v3338
    %v3348 = vcombine.low %v3331, %v3345
    %v3349 = vcombine.high %v3331, %v3345
    %v3350 = vcombine.low %v866, %v871
    %v3351 = vcombine.low %v876, %v881
    %v3353 = vunpack.c.l.s4 1983009808
    %v3354 = vunpack.c.0.s8 %v3353
    %v3355 = vlaneseq
    %v3356 = vshrl.u32 %v3355, 7
    %v3357 = vsub.s32 %v3354, %v3356
    %v3358 = vrot.slane %v3350, %v3357
    %v3360 = vunpack.c.l.s4 1983009808
    %v3361 = vunpack.c.0.s8 %v3360
    %v3362 = vlaneseq
    %v3363 = vshrl.u32 %v3362, 7
    %v3364 = vsub.s32 %v3361, %v3363
    %v3365 = vrot.slane %v3351, %v3364
    %v3366 = vcombine.low %v3358, %v3365
    %v3367 = vcombine.high %v3358, %v3365
    %v3368 = vcombine.low %v882, %v887
    %v3369 = vcombine.high %v882, %v887
    %v3370 = vcombine.low %v892, %v897
    %v3371 = vcombine.high %v892, %v897
    %v3373 = vunpack.c.l.s4 1983009808
    %v3374 = vunpack.c.0.s8 %v3373
    %v3375 = vlaneseq
    %v3376 = vshrl.u32 %v3375, 7
    %v3377 = vsub.s32 %v3374, %v3376
    %v3378 = vrot.slane %v3368, %v3377
    %v3380 = vunpack.c.l.s4 1983009808
    %v3381 = vunpack.c.0.s8 %v3380
    %v3382 = vlaneseq
    %v3383 = vshrl.u32 %v3382, 7
    %v3384 = vsub.s32 %v3381, %v3383
    %v3385 = vrot.slane %v3369, %v3384
    %v3387 = vunpack.c.l.s4 1983009808
    %v3388 = vunpack.c.0.s8 %v3387
    %v3389 = vlaneseq
    %v3390 = vshrl.u32 %v3389, 7
    %v3391 = vsub.s32 %v3388, %v3390
    %v3392 = vrot.slane %v3370, %v3391
    %v3394 = vunpack.c.l.s4 1983009808
    %v3395 = vunpack.c.0.s8 %v3394
    %v3396 = vlaneseq
    %v3397 = vshrl.u32 %v3396, 7
    %v3398 = vsub.s32 %v3395, %v3397
    %v3399 = vrot.slane %v3371, %v3398
    %v3400 = vcombine.low %v3378, %v3392
    %v3401 = vcombine.high %v3378, %v3392
    %v3402 = vcombine.low %v3385, %v3399
    %v3403 = vcombine.high %v3385, %v3399
    %v3404 = vcombine.low %v883, %v888
    %v3405 = vcombine.high %v883, %v888
    %v3406 = vcombine.low %v893, %v898
    %v3407 = vcombine.high %v893, %v898
    %v3409 = vunpack.c.l.s4 1983009808
    %v3410 = vunpack.c.0.s8 %v3409
    %v3411 = vlaneseq
    %v3412 = vshrl.u32 %v3411, 7
    %v3413 = vsub.s32 %v3410, %v3412
    %v3414 = vrot.slane %v3404, %v3413
    %v3416 = vunpack.c.l.s4 1983009808
    %v3417 = vunpack.c.0.s8 %v3416
    %v3418 = vlaneseq
    %v3419 = vshrl.u32 %v3418, 7
    %v3420 = vsub.s32 %v3417, %v3419
    %v3421 = vrot.slane %v3405, %v3420
    %v3423 = vunpack.c.l.s4 1983009808
    %v3424 = vunpack.c.0.s8 %v3423
    %v3425 = vlaneseq
    %v3426 = vshrl.u32 %v3425, 7
    %v3427 = vsub.s32 %v3424, %v3426
    %v3428 = vrot.slane %v3406, %v3427
    %v3430 = vunpack.c.l.s4 1983009808
    %v3431 = vunpack.c.0.s8 %v3430
    %v3432 = vlaneseq
    %v3433 = vshrl.u32 %v3432, 7
    %v3434 = vsub.s32 %v3431, %v3433
    %v3435 = vrot.slane %v3407, %v3434
    %v3436 = vcombine.low %v3414, %v3428
    %v3437 = vcombine.high %v3414, %v3428
    %v3438 = vcombine.low %v3421, %v3435
    %v3439 = vcombine.high %v3421, %v3435
    %v3440 = vcombine.low %v884, %v889
    %v3441 = vcombine.high %v884, %v889
    %v3442 = vcombine.low %v894, %v899
    %v3443 = vcombine.high %v894, %v899
    %v3445 = vunpack.c.l.s4 1983009808
    %v3446 = vunpack.c.0.s8 %v3445
    %v3447 = vlaneseq
    %v3448 = vshrl.u32 %v3447, 7
    %v3449 = vsub.s32 %v3446, %v3448
    %v3450 = vrot.slane %v3440, %v3449
    %v3452 = vunpack.c.l.s4 1983009808
    %v3453 = vunpack.c.0.s8 %v3452
    %v3454 = vlaneseq
    %v3455 = vshrl.u32 %v3454, 7
    %v3456 = vsub.s32 %v3453, %v3455
    %v3457 = vrot.slane %v3441, %v3456
    %v3459 = vunpack.c.l.s4 1983009808
    %v3460 = vunpack.c.0.s8 %v3459
    %v3461 = vlaneseq
    %v3462 = vshrl.u32 %v3461, 7
    %v3463 = vsub.s32 %v3460, %v3462
    %v3464 = vrot.slane %v3442, %v3463
    %v3466 = vunpack.c.l.s4 1983009808
    %v3467 = vunpack.c.0.s8 %v3466
    %v3468 = vlaneseq
    %v3469 = vshrl.u32 %v3468, 7
    %v3470 = vsub.s32 %v3467, %v3469
    %v3471 = vrot.slane %v3443, %v3470
    %v3472 = vcombine.low %v3450, %v3464
    %v3473 = vcombine.high %v3450, %v3464
    %v3474 = vcombine.low %v3457, %v3471
    %v3475 = vcombine.high %v3457, %v3471
    %v3476 = vcombine.low %v885, %v890
    %v3477 = vcombine.high %v885, %v890
    %v3478 = vcombine.low %v895, %v900
    %v3479 = vcombine.high %v895, %v900
    %v3481 = vunpack.c.l.s4 1983009808
    %v3482 = vunpack.c.0.s8 %v3481
    %v3483 = vlaneseq
    %v3484 = vshrl.u32 %v3483, 7
    %v3485 = vsub.s32 %v3482, %v3484
    %v3486 = vrot.slane %v3476, %v3485
    %v3488 = vunpack.c.l.s4 1983009808
    %v3489 = vunpack.c.0.s8 %v3488
    %v3490 = vlaneseq
    %v3491 = vshrl.u32 %v3490, 7
    %v3492 = vsub.s32 %v3489, %v3491
    %v3493 = vrot.slane %v3477, %v3492
    %v3495 = vunpack.c.l.s4 1983009808
    %v3496 = vunpack.c.0.s8 %v3495
    %v3497 = vlaneseq
    %v3498 = vshrl.u32 %v3497, 7
    %v3499 = vsub.s32 %v3496, %v3498
    %v3500 = vrot.slane %v3478, %v3499
    %v3502 = vunpack.c.l.s4 1983009808
    %v3503 = vunpack.c.0.s8 %v3502
    %v3504 = vlaneseq
    %v3505 = vshrl.u32 %v3504, 7
    %v3506 = vsub.s32 %v3503, %v3505
    %v3507 = vrot.slane %v3479, %v3506
    %v3508 = vcombine.low %v3486, %v3500
    %v3509 = vcombine.high %v3486, %v3500
    %v3510 = vcombine.low %v3493, %v3507
    %v3511 = vcombine.high %v3493, %v3507
    %v3512 = vcombine.low %v886, %v891
    %v3513 = vcombine.low %v896, %v901
    %v3515 = vunpack.c.l.s4 1983009808
    %v3516 = vunpack.c.0.s8 %v3515
    %v3517 = vlaneseq
    %v3518 = vshrl.u32 %v3517, 7
    %v3519 = vsub.s32 %v3516, %v3518
    %v3520 = vrot.slane %v3512, %v3519
    %v3522 = vunpack.c.l.s4 1983009808
    %v3523 = vunpack.c.0.s8 %v3522
    %v3524 = vlaneseq
    %v3525 = vshrl.u32 %v3524, 7
    %v3526 = vsub.s32 %v3523, %v3525
    %v3527 = vrot.slane %v3513, %v3526
    %v3528 = vcombine.low %v3520, %v3527
    %v3529 = vcombine.high %v3520, %v3527
    %v3530 = vcombine.low %v902, %v907
    %v3531 = vcombine.high %v902, %v907
    %v3532 = vcombine.low %v912, %v917
    %v3533 = vcombine.high %v912, %v917
    %v3535 = vunpack.c.l.s4 1983009808
    %v3536 = vunpack.c.0.s8 %v3535
    %v3537 = vlaneseq
    %v3538 = vshrl.u32 %v3537, 7
    %v3539 = vsub.s32 %v3536, %v3538
    %v3540 = vrot.slane %v3530, %v3539
    %v3542 = vunpack.c.l.s4 1983009808
    %v3543 = vunpack.c.0.s8 %v3542
    %v3544 = vlaneseq
    %v3545 = vshrl.u32 %v3544, 7
    %v3546 = vsub.s32 %v3543, %v3545
    %v3547 = vrot.slane %v3531, %v3546
    %v3549 = vunpack.c.l.s4 1983009808
    %v3550 = vunpack.c.0.s8 %v3549
    %v3551 = vlaneseq
    %v3552 = vshrl.u32 %v3551, 7
    %v3553 = vsub.s32 %v3550, %v3552
    %v3554 = vrot.slane %v3532, %v3553
    %v3556 = vunpack.c.l.s4 1983009808
    %v3557 = vunpack.c.0.s8 %v3556
    %v3558 = vlaneseq
    %v3559 = vshrl.u32 %v3558, 7
    %v3560 = vsub.s32 %v3557, %v3559
    %v3561 = vrot.slane %v3533, %v3560
    %v3562 = vcombine.low %v3540, %v3554
    %v3563 = vcombine.high %v3540, %v3554
    %v3564 = vcombine.low %v3547, %v3561
    %v3565 = vcombine.high %v3547, %v3561
    %v3566 = vcombine.low %v903, %v908
    %v3567 = vcombine.high %v903, %v908
    %v3568 = vcombine.low %v913, %v918
    %v3569 = vcombine.high %v913, %v918
    %v3571 = vunpack.c.l.s4 1983009808
    %v3572 = vunpack.c.0.s8 %v3571
    %v3573 = vlaneseq
    %v3574 = vshrl.u32 %v3573, 7
    %v3575 = vsub.s32 %v3572, %v3574
    %v3576 = vrot.slane %v3566, %v3575
    %v3578 = vunpack.c.l.s4 1983009808
    %v3579 = vunpack.c.0.s8 %v3578
    %v3580 = vlaneseq
    %v3581 = vshrl.u32 %v3580, 7
    %v3582 = vsub.s32 %v3579, %v3581
    %v3583 = vrot.slane %v3567, %v3582
    %v3585 = vunpack.c.l.s4 1983009808
    %v3586 = vunpack.c.0.s8 %v3585
    %v3587 = vlaneseq
    %v3588 = vshrl.u32 %v3587, 7
    %v3589 = vsub.s32 %v3586, %v3588
    %v3590 = vrot.slane %v3568, %v3589
    %v3592 = vunpack.c.l.s4 1983009808
    %v3593 = vunpack.c.0.s8 %v3592
    %v3594 = vlaneseq
    %v3595 = vshrl.u32 %v3594, 7
    %v3596 = vsub.s32 %v3593, %v3595
    %v3597 = vrot.slane %v3569, %v3596
    %v3598 = vcombine.low %v3576, %v3590
    %v3599 = vcombine.high %v3576, %v3590
    %v3600 = vcombine.low %v3583, %v3597
    %v3601 = vcombine.high %v3583, %v3597
    %v3602 = vcombine.low %v904, %v909
    %v3603 = vcombine.high %v904, %v909
    %v3604 = vcombine.low %v914, %v919
    %v3605 = vcombine.high %v914, %v919
    %v3607 = vunpack.c.l.s4 1983009808
    %v3608 = vunpack.c.0.s8 %v3607
    %v3609 = vlaneseq
    %v3610 = vshrl.u32 %v3609, 7
    %v3611 = vsub.s32 %v3608, %v3610
    %v3612 = vrot.slane %v3602, %v3611
    %v3614 = vunpack.c.l.s4 1983009808
    %v3615 = vunpack.c.0.s8 %v3614
    %v3616 = vlaneseq
    %v3617 = vshrl.u32 %v3616, 7
    %v3618 = vsub.s32 %v3615, %v3617
    %v3619 = vrot.slane %v3603, %v3618
    %v3621 = vunpack.c.l.s4 1983009808
    %v3622 = vunpack.c.0.s8 %v3621
    %v3623 = vlaneseq
    %v3624 = vshrl.u32 %v3623, 7
    %v3625 = vsub.s32 %v3622, %v3624
    %v3626 = vrot.slane %v3604, %v3625
    %v3628 = vunpack.c.l.s4 1983009808
    %v3629 = vunpack.c.0.s8 %v3628
    %v3630 = vlaneseq
    %v3631 = vshrl.u32 %v3630, 7
    %v3632 = vsub.s32 %v3629, %v3631
    %v3633 = vrot.slane %v3605, %v3632
    %v3634 = vcombine.low %v3612, %v3626
    %v3635 = vcombine.high %v3612, %v3626
    %v3636 = vcombine.low %v3619, %v3633
    %v3637 = vcombine.high %v3619, %v3633
    %v3638 = vcombine.low %v905, %v910
    %v3639 = vcombine.high %v905, %v910
    %v3640 = vcombine.low %v915, %v920
    %v3641 = vcombine.high %v915, %v920
    %v3643 = vunpack.c.l.s4 1983009808
    %v3644 = vunpack.c.0.s8 %v3643
    %v3645 = vlaneseq
    %v3646 = vshrl.u32 %v3645, 7
    %v3647 = vsub.s32 %v3644, %v3646
    %v3648 = vrot.slane %v3638, %v3647
    %v3650 = vunpack.c.l.s4 1983009808
    %v3651 = vunpack.c.0.s8 %v3650
    %v3652 = vlaneseq
    %v3653 = vshrl.u32 %v3652, 7
    %v3654 = vsub.s32 %v3651, %v3653
    %v3655 = vrot.slane %v3639, %v3654
    %v3657 = vunpack.c.l.s4 1983009808
    %v3658 = vunpack.c.0.s8 %v3657
    %v3659 = vlaneseq
    %v3660 = vshrl.u32 %v3659, 7
    %v3661 = vsub.s32 %v3658, %v3660
    %v3662 = vrot.slane %v3640, %v3661
    %v3664 = vunpack.c.l.s4 1983009808
    %v3665 = vunpack.c.0.s8 %v3664
    %v3666 = vlaneseq
    %v3667 = vshrl.u32 %v3666, 7
    %v3668 = vsub.s32 %v3665, %v3667
    %v3669 = vrot.slane %v3641, %v3668
    %v3670 = vcombine.low %v3648, %v3662
    %v3671 = vcombine.high %v3648, %v3662
    %v3672 = vcombine.low %v3655, %v3669
    %v3673 = vcombine.high %v3655, %v3669
    %v3674 = vcombine.low %v906, %v911
    %v3675 = vcombine.low %v916, %v921
    %v3677 = vunpack.c.l.s4 1983009808
    %v3678 = vunpack.c.0.s8 %v3677
    %v3679 = vlaneseq
    %v3680 = vshrl.u32 %v3679, 7
    %v3681 = vsub.s32 %v3678, %v3680
    %v3682 = vrot.slane %v3674, %v3681
    %v3684 = vunpack.c.l.s4 1983009808
    %v3685 = vunpack.c.0.s8 %v3684
    %v3686 = vlaneseq
    %v3687 = vshrl.u32 %v3686, 7
    %v3688 = vsub.s32 %v3685, %v3687
    %v3689 = vrot.slane %v3675, %v3688
    %v3690 = vcombine.low %v3682, %v3689
    %v3691 = vcombine.high %v3682, %v3689
    %v3692 = vcombine.low %v922, %v927
    %v3693 = vcombine.high %v922, %v927
    %v3694 = vcombine.low %v932, %v937
    %v3695 = vcombine.high %v932, %v937
    %v3697 = vunpack.c.l.s4 1983009808
    %v3698 = vunpack.c.0.s8 %v3697
    %v3699 = vlaneseq
    %v3700 = vshrl.u32 %v3699, 7
    %v3701 = vsub.s32 %v3698, %v3700
    %v3702 = vrot.slane %v3692, %v3701
    %v3704 = vunpack.c.l.s4 1983009808
    %v3705 = vunpack.c.0.s8 %v3704
    %v3706 = vlaneseq
    %v3707 = vshrl.u32 %v3706, 7
    %v3708 = vsub.s32 %v3705, %v3707
    %v3709 = vrot.slane %v3693, %v3708
    %v3711 = vunpack.c.l.s4 1983009808
    %v3712 = vunpack.c.0.s8 %v3711
    %v3713 = vlaneseq
    %v3714 = vshrl.u32 %v3713, 7
    %v3715 = vsub.s32 %v3712, %v3714
    %v3716 = vrot.slane %v3694, %v3715
    %v3718 = vunpack.c.l.s4 1983009808
    %v3719 = vunpack.c.0.s8 %v3718
    %v3720 = vlaneseq
    %v3721 = vshrl.u32 %v3720, 7
    %v3722 = vsub.s32 %v3719, %v3721
    %v3723 = vrot.slane %v3695, %v3722
    %v3724 = vcombine.low %v3702, %v3716
    %v3725 = vcombine.high %v3702, %v3716
    %v3726 = vcombine.low %v3709, %v3723
    %v3727 = vcombine.high %v3709, %v3723
    %v3728 = vcombine.low %v923, %v928
    %v3729 = vcombine.high %v923, %v928
    %v3730 = vcombine.low %v933, %v938
    %v3731 = vcombine.high %v933, %v938
    %v3733 = vunpack.c.l.s4 1983009808
    %v3734 = vunpack.c.0.s8 %v3733
    %v3735 = vlaneseq
    %v3736 = vshrl.u32 %v3735, 7
    %v3737 = vsub.s32 %v3734, %v3736
    %v3738 = vrot.slane %v3728, %v3737
    %v3740 = vunpack.c.l.s4 1983009808
    %v3741 = vunpack.c.0.s8 %v3740
    %v3742 = vlaneseq
    %v3743 = vshrl.u32 %v3742, 7
    %v3744 = vsub.s32 %v3741, %v3743
    %v3745 = vrot.slane %v3729, %v3744
    %v3747 = vunpack.c.l.s4 1983009808
    %v3748 = vunpack.c.0.s8 %v3747
    %v3749 = vlaneseq
    %v3750 = vshrl.u32 %v3749, 7
    %v3751 = vsub.s32 %v3748, %v3750
    %v3752 = vrot.slane %v3730, %v3751
    %v3754 = vunpack.c.l.s4 1983009808
    %v3755 = vunpack.c.0.s8 %v3754
    %v3756 = vlaneseq
    %v3757 = vshrl.u32 %v3756, 7
    %v3758 = vsub.s32 %v3755, %v3757
    %v3759 = vrot.slane %v3731, %v3758
    %v3760 = vcombine.low %v3738, %v3752
    %v3761 = vcombine.high %v3738, %v3752
    %v3762 = vcombine.low %v3745, %v3759
    %v3763 = vcombine.high %v3745, %v3759
    %v3764 = vcombine.low %v924, %v929
    %v3765 = vcombine.high %v924, %v929
    %v3766 = vcombine.low %v934, %v939
    %v3767 = vcombine.high %v934, %v939
    %v3769 = vunpack.c.l.s4 1983009808
    %v3770 = vunpack.c.0.s8 %v3769
    %v3771 = vlaneseq
    %v3772 = vshrl.u32 %v3771, 7
    %v3773 = vsub.s32 %v3770, %v3772
    %v3774 = vrot.slane %v3764, %v3773
    %v3776 = vunpack.c.l.s4 1983009808
    %v3777 = vunpack.c.0.s8 %v3776
    %v3778 = vlaneseq
    %v3779 = vshrl.u32 %v3778, 7
    %v3780 = vsub.s32 %v3777, %v3779
    %v3781 = vrot.slane %v3765, %v3780
    %v3783 = vunpack.c.l.s4 1983009808
    %v3784 = vunpack.c.0.s8 %v3783
    %v3785 = vlaneseq
    %v3786 = vshrl.u32 %v3785, 7
    %v3787 = vsub.s32 %v3784, %v3786
    %v3788 = vrot.slane %v3766, %v3787
    %v3790 = vunpack.c.l.s4 1983009808
    %v3791 = vunpack.c.0.s8 %v3790
    %v3792 = vlaneseq
    %v3793 = vshrl.u32 %v3792, 7
    %v3794 = vsub.s32 %v3791, %v3793
    %v3795 = vrot.slane %v3767, %v3794
    %v3796 = vcombine.low %v3774, %v3788
    %v3797 = vcombine.high %v3774, %v3788
    %v3798 = vcombine.low %v3781, %v3795
    %v3799 = vcombine.high %v3781, %v3795
    %v3800 = vcombine.low %v925, %v930
    %v3801 = vcombine.high %v925, %v930
    %v3802 = vcombine.low %v935, %v940
    %v3803 = vcombine.high %v935, %v940
    %v3805 = vunpack.c.l.s4 1983009808
    %v3806 = vunpack.c.0.s8 %v3805
    %v3807 = vlaneseq
    %v3808 = vshrl.u32 %v3807, 7
    %v3809 = vsub.s32 %v3806, %v3808
    %v3810 = vrot.slane %v3800, %v3809
    %v3812 = vunpack.c.l.s4 1983009808
    %v3813 = vunpack.c.0.s8 %v3812
    %v3814 = vlaneseq
    %v3815 = vshrl.u32 %v3814, 7
    %v3816 = vsub.s32 %v3813, %v3815
    %v3817 = vrot.slane %v3801, %v3816
    %v3819 = vunpack.c.l.s4 1983009808
    %v3820 = vunpack.c.0.s8 %v3819
    %v3821 = vlaneseq
    %v3822 = vshrl.u32 %v3821, 7
    %v3823 = vsub.s32 %v3820, %v3822
    %v3824 = vrot.slane %v3802, %v3823
    %v3826 = vunpack.c.l.s4 1983009808
    %v3827 = vunpack.c.0.s8 %v3826
    %v3828 = vlaneseq
    %v3829 = vshrl.u32 %v3828, 7
    %v3830 = vsub.s32 %v3827, %v3829
    %v3831 = vrot.slane %v3803, %v3830
    %v3832 = vcombine.low %v3810, %v3824
    %v3833 = vcombine.high %v3810, %v3824
    %v3834 = vcombine.low %v3817, %v3831
    %v3835 = vcombine.high %v3817, %v3831
    %v3836 = vcombine.low %v926, %v931
    %v3837 = vcombine.low %v936, %v941
    %v3839 = vunpack.c.l.s4 1983009808
    %v3840 = vunpack.c.0.s8 %v3839
    %v3841 = vlaneseq
    %v3842 = vshrl.u32 %v3841, 7
    %v3843 = vsub.s32 %v3840, %v3842
    %v3844 = vrot.slane %v3836, %v3843
    %v3846 = vunpack.c.l.s4 1983009808
    %v3847 = vunpack.c.0.s8 %v3846
    %v3848 = vlaneseq
    %v3849 = vshrl.u32 %v3848, 7
    %v3850 = vsub.s32 %v3847, %v3849
    %v3851 = vrot.slane %v3837, %v3850
    %v3852 = vcombine.low %v3844, %v3851
    %v3853 = vcombine.high %v3844, %v3851
    %v4142 = vadd.f32 %v1294, %v1295
    %v4143 = vadd.f32 %v4142, %v1296
    %v4144 = vadd.f32 %v4143, %v1297
    %v4145 = vadd.f32 %v4144, %v1330
    %v4146 = vadd.f32 %v4145, %v1331
    %v4147 = vadd.f32 %v4146, %v1332
    %v4148 = vadd.f32 %v4147, %v1333
    %v4149 = vadd.f32 %v4148, %v1366
    %v4150 = vadd.f32 %v4149, %v1367
    %v4151 = vadd.f32 %v4150, %v1368
    %v4152 = vadd.f32 %v4151, %v1369
    %v4153 = vadd.f32 %v4152, %v1402
    %v4154 = vadd.f32 %v4153, %v1403
    %v4155 = vadd.f32 %v4154, %v1404
    %v4156 = vadd.f32 %v4155, %v1405
    %v4157 = vadd.f32 %v4156, %v1422
    %v4158 = vadd.f32 %v4157, %v1423
    %4159 = vadd.xlane.f32.xlu0 %v4158
    %v4160 = vpop.xlane.xlu0 %4159
    %v4161 = vadd.f32 %v1456, %v1457
    %v4162 = vadd.f32 %v4161, %v1458
    %v4163 = vadd.f32 %v4162, %v1459
    %v4164 = vadd.f32 %v4163, %v1492
    %v4165 = vadd.f32 %v4164, %v1493
    %v4166 = vadd.f32 %v4165, %v1494
    %v4167 = vadd.f32 %v4166, %v1495
    %v4168 = vadd.f32 %v4167, %v1528
    %v4169 = vadd.f32 %v4168, %v1529
    %v4170 = vadd.f32 %v4169, %v1530
    %v4171 = vadd.f32 %v4170, %v1531
    %v4172 = vadd.f32 %v4171, %v1564
    %v4173 = vadd.f32 %v4172, %v1565
    %v4174 = vadd.f32 %v4173, %v1566
    %v4175 = vadd.f32 %v4174, %v1567
    %v4176 = vadd.f32 %v4175, %v1584
    %v4177 = vadd.f32 %v4176, %v1585
    %4178 = vadd.xlane.f32.xlu0 %v4177
    %v4179 = vpop.xlane.xlu0 %4178
    %v4180 = vadd.f32 %v1618, %v1619
    %v4181 = vadd.f32 %v4180, %v1620
    %v4182 = vadd.f32 %v4181, %v1621
    %v4183 = vadd.f32 %v4182, %v1654
    %v4184 = vadd.f32 %v4183, %v1655
    %v4185 = vadd.f32 %v4184, %v1656
    %v4186 = vadd.f32 %v4185, %v1657
    %v4187 = vadd.f32 %v4186, %v1690
    %v4188 = vadd.f32 %v4187, %v1691
    %v4189 = vadd.f32 %v4188, %v1692
    %v4190 = vadd.f32 %v4189, %v1693
    %v4191 = vadd.f32 %v4190, %v1726
    %v4192 = vadd.f32 %v4191, %v1727
    %v4193 = vadd.f32 %v4192, %v1728
    %v4194 = vadd.f32 %v4193, %v1729
    %v4195 = vadd.f32 %v4194, %v1746
    %v4196 = vadd.f32 %v4195, %v1747
    %4197 = vadd.xlane.f32.xlu0 %v4196
    %v4198 = vpop.xlane.xlu0 %4197
    %v4199 = vadd.f32 %v1780, %v1781
    %v4200 = vadd.f32 %v4199, %v1782
    %v4201 = vadd.f32 %v4200, %v1783
    %v4202 = vadd.f32 %v4201, %v1816
    %v4203 = vadd.f32 %v4202, %v1817
    %v4204 = vadd.f32 %v4203, %v1818
    %v4205 = vadd.f32 %v4204, %v1819
    %v4206 = vadd.f32 %v4205, %v1852
    %v4207 = vadd.f32 %v4206, %v1853
    %v4208 = vadd.f32 %v4207, %v1854
    %v4209 = vadd.f32 %v4208, %v1855
    %v4210 = vadd.f32 %v4209, %v1888
    %v4211 = vadd.f32 %v4210, %v1889
    %v4212 = vadd.f32 %v4211, %v1890
    %v4213 = vadd.f32 %v4212, %v1891
    %v4214 = vadd.f32 %v4213, %v1908
    %v4215 = vadd.f32 %v4214, %v1909
    %4216 = vadd.xlane.f32.xlu0 %v4215
    %v4217 = vpop.xlane.xlu0 %4216
    %v4218 = vadd.f32 %v1942, %v1943
    %v4219 = vadd.f32 %v4218, %v1944
    %v4220 = vadd.f32 %v4219, %v1945
    %v4221 = vadd.f32 %v4220, %v1978
    %v4222 = vadd.f32 %v4221, %v1979
    %v4223 = vadd.f32 %v4222, %v1980
    %v4224 = vadd.f32 %v4223, %v1981
    %v4225 = vadd.f32 %v4224, %v2014
    %v4226 = vadd.f32 %v4225, %v2015
    %v4227 = vadd.f32 %v4226, %v2016
    %v4228 = vadd.f32 %v4227, %v2017
    %v4229 = vadd.f32 %v4228, %v2050
    %v4230 = vadd.f32 %v4229, %v2051
    %v4231 = vadd.f32 %v4230, %v2052
    %v4232 = vadd.f32 %v4231, %v2053
    %v4233 = vadd.f32 %v4232, %v2070
    %v4234 = vadd.f32 %v4233, %v2071
    %4235 = vadd.xlane.f32.xlu0 %v4234
    %v4236 = vpop.xlane.xlu0 %4235
    %v4237 = vadd.f32 %v2104, %v2105
    %v4238 = vadd.f32 %v4237, %v2106
    %v4239 = vadd.f32 %v4238, %v2107
    %v4240 = vadd.f32 %v4239, %v2140
    %v4241 = vadd.f32 %v4240, %v2141
    %v4242 = vadd.f32 %v4241, %v2142
    %v4243 = vadd.f32 %v4242, %v2143
    %v4244 = vadd.f32 %v4243, %v2176
    %v4245 = vadd.f32 %v4244, %v2177
    %v4246 = vadd.f32 %v4245, %v2178
    %v4247 = vadd.f32 %v4246, %v2179
    %v4248 = vadd.f32 %v4247, %v2212
    %v4249 = vadd.f32 %v4248, %v2213
    %v4250 = vadd.f32 %v4249, %v2214
    %v4251 = vadd.f32 %v4250, %v2215
    %v4252 = vadd.f32 %v4251, %v2232
    %v4253 = vadd.f32 %v4252, %v2233
    %4254 = vadd.xlane.f32.xlu0 %v4253
    %v4255 = vpop.xlane.xlu0 %4254
    %v4256 = vadd.f32 %v2266, %v2267
    %v4257 = vadd.f32 %v4256, %v2268
    %v4258 = vadd.f32 %v4257, %v2269
    %v4259 = vadd.f32 %v4258, %v2302
    %v4260 = vadd.f32 %v4259, %v2303
    %v4261 = vadd.f32 %v4260, %v2304
    %v4262 = vadd.f32 %v4261, %v2305
    %v4263 = vadd.f32 %v4262, %v2338
    %v4264 = vadd.f32 %v4263, %v2339
    %v4265 = vadd.f32 %v4264, %v2340
    %v4266 = vadd.f32 %v4265, %v2341
    %v4267 = vadd.f32 %v4266, %v2374
    %v4268 = vadd.f32 %v4267, %v2375
    %v4269 = vadd.f32 %v4268, %v2376
    %v4270 = vadd.f32 %v4269, %v2377
    %v4271 = vadd.f32 %v4270, %v2394
    %v4272 = vadd.f32 %v4271, %v2395
    %4273 = vadd.xlane.f32.xlu0 %v4272
    %v4274 = vpop.xlane.xlu0 %4273
    %v4275 = vadd.f32 %v2428, %v2429
    %v4276 = vadd.f32 %v4275, %v2430
    %v4277 = vadd.f32 %v4276, %v2431
    %v4278 = vadd.f32 %v4277, %v2464
    %v4279 = vadd.f32 %v4278, %v2465
    %v4280 = vadd.f32 %v4279, %v2466
    %v4281 = vadd.f32 %v4280, %v2467
    %v4282 = vadd.f32 %v4281, %v2500
    %v4283 = vadd.f32 %v4282, %v2501
    %v4284 = vadd.f32 %v4283, %v2502
    %v4285 = vadd.f32 %v4284, %v2503
    %v4286 = vadd.f32 %v4285, %v2536
    %v4287 = vadd.f32 %v4286, %v2537
    %v4288 = vadd.f32 %v4287, %v2538
    %v4289 = vadd.f32 %v4288, %v2539
    %v4290 = vadd.f32 %v4289, %v2556
    %v4291 = vadd.f32 %v4290, %v2557
    %4292 = vadd.xlane.f32.xlu0 %v4291
    %v4293 = vpop.xlane.xlu0 %4292
    %v4294 = vadd.f32 %v2590, %v2591
    %v4295 = vadd.f32 %v4294, %v2592
    %v4296 = vadd.f32 %v4295, %v2593
    %v4297 = vadd.f32 %v4296, %v2626
    %v4298 = vadd.f32 %v4297, %v2627
    %v4299 = vadd.f32 %v4298, %v2628
    %v4300 = vadd.f32 %v4299, %v2629
    %v4301 = vadd.f32 %v4300, %v2662
    %v4302 = vadd.f32 %v4301, %v2663
    %v4303 = vadd.f32 %v4302, %v2664
    %v4304 = vadd.f32 %v4303, %v2665
    %v4305 = vadd.f32 %v4304, %v2698
    %v4306 = vadd.f32 %v4305, %v2699
    %v4307 = vadd.f32 %v4306, %v2700
    %v4308 = vadd.f32 %v4307, %v2701
    %v4309 = vadd.f32 %v4308, %v2718
    %v4310 = vadd.f32 %v4309, %v2719
    %4311 = vadd.xlane.f32.xlu0 %v4310
    %v4312 = vpop.xlane.xlu0 %4311
    %v4313 = vadd.f32 %v2752, %v2753
    %v4314 = vadd.f32 %v4313, %v2754
    %v4315 = vadd.f32 %v4314, %v2755
    %v4316 = vadd.f32 %v4315, %v2788
    %v4317 = vadd.f32 %v4316, %v2789
    %v4318 = vadd.f32 %v4317, %v2790
    %v4319 = vadd.f32 %v4318, %v2791
    %v4320 = vadd.f32 %v4319, %v2824
    %v4321 = vadd.f32 %v4320, %v2825
    %v4322 = vadd.f32 %v4321, %v2826
    %v4323 = vadd.f32 %v4322, %v2827
    %v4324 = vadd.f32 %v4323, %v2860
    %v4325 = vadd.f32 %v4324, %v2861
    %v4326 = vadd.f32 %v4325, %v2862
    %v4327 = vadd.f32 %v4326, %v2863
    %v4328 = vadd.f32 %v4327, %v2880
    %v4329 = vadd.f32 %v4328, %v2881
    %4330 = vadd.xlane.f32.xlu0 %v4329
    %v4331 = vpop.xlane.xlu0 %4330
    %v4332 = vadd.f32 %v2914, %v2915
    %v4333 = vadd.f32 %v4332, %v2916
    %v4334 = vadd.f32 %v4333, %v2917
    %v4335 = vadd.f32 %v4334, %v2950
    %v4336 = vadd.f32 %v4335, %v2951
    %v4337 = vadd.f32 %v4336, %v2952
    %v4338 = vadd.f32 %v4337, %v2953
    %v4339 = vadd.f32 %v4338, %v2986
    %v4340 = vadd.f32 %v4339, %v2987
    %v4341 = vadd.f32 %v4340, %v2988
    %v4342 = vadd.f32 %v4341, %v2989
    %v4343 = vadd.f32 %v4342, %v3022
    %v4344 = vadd.f32 %v4343, %v3023
    %v4345 = vadd.f32 %v4344, %v3024
    %v4346 = vadd.f32 %v4345, %v3025
    %v4347 = vadd.f32 %v4346, %v3042
    %v4348 = vadd.f32 %v4347, %v3043
    %4349 = vadd.xlane.f32.xlu0 %v4348
    %v4350 = vpop.xlane.xlu0 %4349
    %v4351 = vadd.f32 %v3076, %v3077
    %v4352 = vadd.f32 %v4351, %v3078
    %v4353 = vadd.f32 %v4352, %v3079
    %v4354 = vadd.f32 %v4353, %v3112
    %v4355 = vadd.f32 %v4354, %v3113
    %v4356 = vadd.f32 %v4355, %v3114
    %v4357 = vadd.f32 %v4356, %v3115
    %v4358 = vadd.f32 %v4357, %v3148
    %v4359 = vadd.f32 %v4358, %v3149
    %v4360 = vadd.f32 %v4359, %v3150
    %v4361 = vadd.f32 %v4360, %v3151
    %v4362 = vadd.f32 %v4361, %v3184
    %v4363 = vadd.f32 %v4362, %v3185
    %v4364 = vadd.f32 %v4363, %v3186
    %v4365 = vadd.f32 %v4364, %v3187
    %v4366 = vadd.f32 %v4365, %v3204
    %v4367 = vadd.f32 %v4366, %v3205
    %4368 = vadd.xlane.f32.xlu0 %v4367
    %v4369 = vpop.xlane.xlu0 %4368
    %v4370 = vadd.f32 %v3238, %v3239
    %v4371 = vadd.f32 %v4370, %v3240
    %v4372 = vadd.f32 %v4371, %v3241
    %v4373 = vadd.f32 %v4372, %v3274
    %v4374 = vadd.f32 %v4373, %v3275
    %v4375 = vadd.f32 %v4374, %v3276
    %v4376 = vadd.f32 %v4375, %v3277
    %v4377 = vadd.f32 %v4376, %v3310
    %v4378 = vadd.f32 %v4377, %v3311
    %v4379 = vadd.f32 %v4378, %v3312
    %v4380 = vadd.f32 %v4379, %v3313
    %v4381 = vadd.f32 %v4380, %v3346
    %v4382 = vadd.f32 %v4381, %v3347
    %v4383 = vadd.f32 %v4382, %v3348
    %v4384 = vadd.f32 %v4383, %v3349
    %v4385 = vadd.f32 %v4384, %v3366
    %v4386 = vadd.f32 %v4385, %v3367
    %4387 = vadd.xlane.f32.xlu0 %v4386
    %v4388 = vpop.xlane.xlu0 %4387
    %v4389 = vadd.f32 %v3400, %v3401
    %v4390 = vadd.f32 %v4389, %v3402
    %v4391 = vadd.f32 %v4390, %v3403
    %v4392 = vadd.f32 %v4391, %v3436
    %v4393 = vadd.f32 %v4392, %v3437
    %v4394 = vadd.f32 %v4393, %v3438
    %v4395 = vadd.f32 %v4394, %v3439
    %v4396 = vadd.f32 %v4395, %v3472
    %v4397 = vadd.f32 %v4396, %v3473
    %v4398 = vadd.f32 %v4397, %v3474
    %v4399 = vadd.f32 %v4398, %v3475
    %v4400 = vadd.f32 %v4399, %v3508
    %v4401 = vadd.f32 %v4400, %v3509
    %v4402 = vadd.f32 %v4401, %v3510
    %v4403 = vadd.f32 %v4402, %v3511
    %v4404 = vadd.f32 %v4403, %v3528
    %v4405 = vadd.f32 %v4404, %v3529
    %4406 = vadd.xlane.f32.xlu0 %v4405
    %v4407 = vpop.xlane.xlu0 %4406
    %v4408 = vadd.f32 %v3562, %v3563
    %v4409 = vadd.f32 %v4408, %v3564
    %v4410 = vadd.f32 %v4409, %v3565
    %v4411 = vadd.f32 %v4410, %v3598
    %v4412 = vadd.f32 %v4411, %v3599
    %v4413 = vadd.f32 %v4412, %v3600
    %v4414 = vadd.f32 %v4413, %v3601
    %v4415 = vadd.f32 %v4414, %v3634
    %v4416 = vadd.f32 %v4415, %v3635
    %v4417 = vadd.f32 %v4416, %v3636
    %v4418 = vadd.f32 %v4417, %v3637
    %v4419 = vadd.f32 %v4418, %v3670
    %v4420 = vadd.f32 %v4419, %v3671
    %v4421 = vadd.f32 %v4420, %v3672
    %v4422 = vadd.f32 %v4421, %v3673
    %v4423 = vadd.f32 %v4422, %v3690
    %v4424 = vadd.f32 %v4423, %v3691
    %4425 = vadd.xlane.f32.xlu0 %v4424
    %v4426 = vpop.xlane.xlu0 %4425
    %v4427 = vadd.f32 %v3724, %v3725
    %v4428 = vadd.f32 %v4427, %v3726
    %v4429 = vadd.f32 %v4428, %v3727
    %v4430 = vadd.f32 %v4429, %v3760
    %v4431 = vadd.f32 %v4430, %v3761
    %v4432 = vadd.f32 %v4431, %v3762
    %v4433 = vadd.f32 %v4432, %v3763
    %v4434 = vadd.f32 %v4433, %v3796
    %v4435 = vadd.f32 %v4434, %v3797
    %v4436 = vadd.f32 %v4435, %v3798
    %v4437 = vadd.f32 %v4436, %v3799
    %v4438 = vadd.f32 %v4437, %v3832
    %v4439 = vadd.f32 %v4438, %v3833
    %v4440 = vadd.f32 %v4439, %v3834
    %v4441 = vadd.f32 %v4440, %v3835
    %v4442 = vadd.f32 %v4441, %v3852
    %v4443 = vadd.f32 %v4442, %v3853
    %4444 = vadd.xlane.f32.xlu0 %v4443
    %v4445 = vpop.xlane.xlu0 %4444
    %s4446 = sld [smem:[#allocation2]]
    %v4447 = vstv %s4446
    %v4448 = vadd.f32 %v4160, %v4447
    %v4449 = vadd.f32 %v4179, %v4447
    %v4450 = vadd.f32 %v4198, %v4447
    %v4451 = vadd.f32 %v4217, %v4447
    %v4452 = vadd.f32 %v4236, %v4447
    %v4453 = vadd.f32 %v4255, %v4447
    %v4454 = vadd.f32 %v4274, %v4447
    %v4455 = vadd.f32 %v4293, %v4447
    %v4456 = vadd.f32 %v4312, %v4447
    %v4457 = vadd.f32 %v4331, %v4447
    %v4458 = vadd.f32 %v4350, %v4447
    %v4459 = vadd.f32 %v4369, %v4447
    %v4460 = vadd.f32 %v4388, %v4447
    %v4461 = vadd.f32 %v4407, %v4447
    %v4462 = vadd.f32 %v4426, %v4447
    %v4463 = vadd.f32 %v4445, %v4447
    %v4464 = vxor.u32 %v4448, 2147483648
    %v4465 = vxor.u32 %v4449, 2147483648
    %v4466 = vxor.u32 %v4450, 2147483648
    %v4467 = vxor.u32 %v4451, 2147483648
    %v4468 = vxor.u32 %v4452, 2147483648
    %v4469 = vxor.u32 %v4453, 2147483648
    %v4470 = vxor.u32 %v4454, 2147483648
    %v4471 = vxor.u32 %v4455, 2147483648
    %v4472 = vxor.u32 %v4456, 2147483648
    %v4473 = vxor.u32 %v4457, 2147483648
    %v4474 = vxor.u32 %v4458, 2147483648
    %v4475 = vxor.u32 %v4459, 2147483648
    %v4476 = vxor.u32 %v4460, 2147483648
    %v4477 = vxor.u32 %v4461, 2147483648
    %v4478 = vxor.u32 %v4462, 2147483648
    %v4479 = vxor.u32 %v4463, 2147483648
    %v4480 = vmul.f32 %v4464, 1.442695
    %v4481 = vpow.pop %v4480
    %v4482 = vmul.f32 %v4465, 1.442695
    %v4483 = vpow.pop %v4482
    %v4484 = vmul.f32 %v4466, 1.442695
    %v4485 = vpow.pop %v4484
    %v4486 = vmul.f32 %v4467, 1.442695
    %v4487 = vpow.pop %v4486
    %v4488 = vmul.f32 %v4468, 1.442695
    %v4489 = vpow.pop %v4488
    %v4490 = vmul.f32 %v4469, 1.442695
    %v4491 = vpow.pop %v4490
    %v4492 = vmul.f32 %v4470, 1.442695
    %v4493 = vpow.pop %v4492
    %v4494 = vmul.f32 %v4471, 1.442695
    %v4495 = vpow.pop %v4494
    %v4496 = vmul.f32 %v4472, 1.442695
    %v4497 = vpow.pop %v4496
    %v4498 = vmul.f32 %v4473, 1.442695
    %v4499 = vpow.pop %v4498
    %v4500 = vmul.f32 %v4474, 1.442695
    %v4501 = vpow.pop %v4500
    %v4502 = vmul.f32 %v4475, 1.442695
    %v4503 = vpow.pop %v4502
    %v4504 = vmul.f32 %v4476, 1.442695
    %v4505 = vpow.pop %v4504
    %v4506 = vmul.f32 %v4477, 1.442695
    %v4507 = vpow.pop %v4506
    %v4508 = vmul.f32 %v4478, 1.442695
    %v4509 = vpow.pop %v4508
    %v4510 = vmul.f32 %v4479, 1.442695
    %v4511 = vpow.pop %v4510
    %v4512 = vadd.f32 %v4481, 1.0
    %v4513 = vadd.f32 %v4483, 1.0
    %v4514 = vadd.f32 %v4485, 1.0
    %v4515 = vadd.f32 %v4487, 1.0
    %v4516 = vadd.f32 %v4489, 1.0
    %v4517 = vadd.f32 %v4491, 1.0
    %v4518 = vadd.f32 %v4493, 1.0
    %v4519 = vadd.f32 %v4495, 1.0
    %v4520 = vadd.f32 %v4497, 1.0
    %v4521 = vadd.f32 %v4499, 1.0
    %v4522 = vadd.f32 %v4501, 1.0
    %v4523 = vadd.f32 %v4503, 1.0
    %v4524 = vadd.f32 %v4505, 1.0
    %v4525 = vadd.f32 %v4507, 1.0
    %v4526 = vadd.f32 %v4509, 1.0
    %v4527 = vadd.f32 %v4511, 1.0
    %v4528 = vrcp.pop %v4512
    %v4529 = vmul.f32 1.0, %v4528
    %v4530 = vrcp.pop %v4513
    %v4531 = vmul.f32 1.0, %v4530
    %v4532 = vrcp.pop %v4514
    %v4533 = vmul.f32 1.0, %v4532
    %v4534 = vrcp.pop %v4515
    %v4535 = vmul.f32 1.0, %v4534
    %v4536 = vrcp.pop %v4516
    %v4537 = vmul.f32 1.0, %v4536
    %v4538 = vrcp.pop %v4517
    %v4539 = vmul.f32 1.0, %v4538
    %v4540 = vrcp.pop %v4518
    %v4541 = vmul.f32 1.0, %v4540
    %v4542 = vrcp.pop %v4519
    %v4543 = vmul.f32 1.0, %v4542
    %v4544 = vrcp.pop %v4520
    %v4545 = vmul.f32 1.0, %v4544
    %v4546 = vrcp.pop %v4521
    %v4547 = vmul.f32 1.0, %v4546
    %v4548 = vrcp.pop %v4522
    %v4549 = vmul.f32 1.0, %v4548
    %v4550 = vrcp.pop %v4523
    %v4551 = vmul.f32 1.0, %v4550
    %v4552 = vrcp.pop %v4524
    %v4553 = vmul.f32 1.0, %v4552
    %v4554 = vrcp.pop %v4525
    %v4555 = vmul.f32 1.0, %v4554
    %v4556 = vrcp.pop %v4526
    %v4557 = vmul.f32 1.0, %v4556
    %v4558 = vrcp.pop %v4527
    %v4559 = vmul.f32 1.0, %v4558
    %v4576 = vlaneseq
    %v4577 = vand.u32 %v4576, 127
    %v4578 = vlaneseq
    %v4579 = vshrl.u32 %v4578, 7
    %v4580 = vsub.s32 %v4577, %v4579
    %v4581 = vrot.slane %v4529, %v4580
    %v4582 = vadd.s32 %v4577, 4294967288
    %v4583 = vlaneseq
    %v4584 = vshrl.u32 %v4583, 7
    %v4585 = vsub.s32 %v4582, %v4584
    %v4586 = vrot.slane %v4531, %v4585
    %vm4587 = vcmask 130112
    %v4588 = vsel %vm4587, %v4586, %v4581
    %v4589 = vadd.s32 %v4577, 4294967280
    %v4590 = vlaneseq
    %v4591 = vshrl.u32 %v4590, 7
    %v4592 = vsub.s32 %v4589, %v4591
    %v4593 = vrot.slane %v4533, %v4592
    %vm4594 = vcmask 195712
    %v4595 = vsel %vm4594, %v4593, %v4588
    %v4596 = vadd.s32 %v4577, 4294967272
    %v4597 = vlaneseq
    %v4598 = vshrl.u32 %v4597, 7
    %v4599 = vsub.s32 %v4596, %v4598
    %v4600 = vrot.slane %v4535, %v4599
    %vm4601 = vcmask 261312
    %v4602 = vsel %vm4601, %v4600, %v4595
    %v4603 = vadd.s32 %v4577, 4294967264
    %v4604 = vlaneseq
    %v4605 = vshrl.u32 %v4604, 7
    %v4606 = vsub.s32 %v4603, %v4605
    %v4607 = vrot.slane %v4537, %v4606
    %vm4608 = vcmask 326912
    %v4609 = vsel %vm4608, %v4607, %v4602
    %v4610 = vadd.s32 %v4577, 4294967256
    %v4611 = vlaneseq
    %v4612 = vshrl.u32 %v4611, 7
    %v4613 = vsub.s32 %v4610, %v4612
    %v4614 = vrot.slane %v4539, %v4613
    %vm4615 = vcmask 392512
    %v4616 = vsel %vm4615, %v4614, %v4609
    %v4617 = vadd.s32 %v4577, 4294967248
    %v4618 = vlaneseq
    %v4619 = vshrl.u32 %v4618, 7
    %v4620 = vsub.s32 %v4617, %v4619
    %v4621 = vrot.slane %v4541, %v4620
    %vm4622 = vcmask 458112
    %v4623 = vsel %vm4622, %v4621, %v4616
    %v4624 = vadd.s32 %v4577, 4294967240
    %v4625 = vlaneseq
    %v4626 = vshrl.u32 %v4625, 7
    %v4627 = vsub.s32 %v4624, %v4626
    %v4628 = vrot.slane %v4543, %v4627
    %vm4629 = vcmask 523712
    %v4630 = vsel %vm4629, %v4628, %v4623
    %v4631 = vadd.s32 %v4577, 4294967232
    %v4632 = vlaneseq
    %v4633 = vshrl.u32 %v4632, 7
    %v4634 = vsub.s32 %v4631, %v4633
    %v4635 = vrot.slane %v4545, %v4634
    %vm4636 = vcmask 589312
    %v4637 = vsel %vm4636, %v4635, %v4630
    %v4638 = vadd.s32 %v4577, 4294967224
    %v4639 = vlaneseq
    %v4640 = vshrl.u32 %v4639, 7
    %v4641 = vsub.s32 %v4638, %v4640
    %v4642 = vrot.slane %v4547, %v4641
    %vm4643 = vcmask 654912
    %v4644 = vsel %vm4643, %v4642, %v4637
    %v4645 = vadd.s32 %v4577, 4294967216
    %v4646 = vlaneseq
    %v4647 = vshrl.u32 %v4646, 7
    %v4648 = vsub.s32 %v4645, %v4647
    %v4649 = vrot.slane %v4549, %v4648
    %vm4650 = vcmask 720512
    %v4651 = vsel %vm4650, %v4649, %v4644
    %v4652 = vadd.s32 %v4577, 4294967208
    %v4653 = vlaneseq
    %v4654 = vshrl.u32 %v4653, 7
    %v4655 = vsub.s32 %v4652, %v4654
    %v4656 = vrot.slane %v4551, %v4655
    %vm4657 = vcmask 786112
    %v4658 = vsel %vm4657, %v4656, %v4651
    %v4659 = vadd.s32 %v4577, 4294967200
    %v4660 = vlaneseq
    %v4661 = vshrl.u32 %v4660, 7
    %v4662 = vsub.s32 %v4659, %v4661
    %v4663 = vrot.slane %v4553, %v4662
    %vm4664 = vcmask 851712
    %v4665 = vsel %vm4664, %v4663, %v4658
    %v4666 = vadd.s32 %v4577, 4294967192
    %v4667 = vlaneseq
    %v4668 = vshrl.u32 %v4667, 7
    %v4669 = vsub.s32 %v4666, %v4668
    %v4670 = vrot.slane %v4555, %v4669
    %vm4671 = vcmask 917312
    %v4672 = vsel %vm4671, %v4670, %v4665
    %v4673 = vadd.s32 %v4577, 4294967184
    %v4674 = vlaneseq
    %v4675 = vshrl.u32 %v4674, 7
    %v4676 = vsub.s32 %v4673, %v4675
    %v4677 = vrot.slane %v4557, %v4676
    %vm4678 = vcmask 982912
    %v4679 = vsel %vm4678, %v4677, %v4672
    %v4680 = vadd.s32 %v4577, 4294967176
    %v4681 = vlaneseq
    %v4682 = vshrl.u32 %v4681, 7
    %v4683 = vsub.s32 %v4680, %v4682
    %v4684 = vrot.slane %v4559, %v4683
    %vm4685 = vcmask 1048512
    %v4686 = vsel %vm4685, %v4684, %v4679
    %4688 = vst [vmem:[#allocation8] sm:$0x1] %v4686
    // Predicated region
    $region22: #{tpu_custom_call.1} parent=1 // pred_check
      _
    $region23: #{tpu_custom_call.1} parent=1 // pred_check_branch
      %4690 = sbr.rel (0) target = $region25
    $region24: #{tpu_custom_call.1} parent=1 // pred_region
      %s4692 = ssub.s32 16, 16
      %4693 = vsyncadd [#allocation5], %s4692
      %s4695 = sshll.u32 [#allocation8], 4
      %s4696 = int_to_ptr.vmem [resolvable:$true] %s4695
      %4698 = dma.vmem_to_hbm [thread:$0]  %s4696, 16, %s3, [#allocation5]
    $region25: #{tpu_custom_call.1} parent=1 // pred_fallthru
      _
    // Predicated region
    $region26: #{tpu_custom_call.1} parent=1 // pred_check
      _
    $region27: #{tpu_custom_call.1} parent=1 // pred_check_branch
      %4700 = sbr.rel (0) target = $region29
    $region28: #{tpu_custom_call.1} parent=1 // pred_region
      %4701 = dma.done [#allocation5], 16
    $region29: #{tpu_custom_call.1} parent=1 // pred_fallthru
      _
    %4702 = vsyncpa [#allocation4], 1
    %4703 = vsyncpa [#allocation7], 1
    %4704 = vsyncpa [#allocation5], 1

</llo_original>
